<compile_context>
chip_gen: v5e
topology: v5e:2x2
jax: 0.10.0
libtpu: 0.0.40
codegen_flags: <defaults>
</compile_context>

<pallas_src>
import functools

import jax
import jax.numpy as jnp
from jax import lax
from jax.experimental import pallas as pl
from jax.experimental.pallas import tpu as pltpu

VMEM = pltpu.MemorySpace.VMEM


def _vmem(n):
    return [pl.BlockSpec(memory_space=VMEM) for _ in range(n)]


# ----------------------------------------------------------------------------
# Shared in-kernel math helpers
# ----------------------------------------------------------------------------
def _layernorm(h, g, b):
    mu = jnp.mean(h, axis=-1, keepdims=True)
    var = jnp.mean((h - mu) ** 2, axis=-1, keepdims=True)
    return (h - mu) * lax.rsqrt(var + 1e-5) * g + b


def _logsigmoid(v):
    return jnp.minimum(v, 0.0) - jnp.log(1.0 + jnp.exp(-jnp.abs(v)))


def _edge_mlp_math(a, p, w0, b0, g0, be0, w1, b1, g1, be1):
    """edge_MLP(make_input(a, p)) with a single 128-lane (4*E) matmul.

    w0 / w1 are expected in bf16; accumulation is f32; LayerNorm/ReLU in f32.
    """
    x = jnp.concatenate([a, p, a * p, a - p], axis=1).astype(jnp.bfloat16)
    h = jnp.dot(x, w0, preferred_element_type=jnp.float32) + b0
    h = _layernorm(h, g0, be0)
    h = jnp.maximum(h, 0.0)
    h = jnp.dot(h.astype(jnp.bfloat16), w1, preferred_element_type=jnp.float32) + b1
    return _layernorm(h, g1, be1)


def _gru_cell(h, gi, whh_bf16, bhn_b, H):
    """PyTorch GRU cell with gate-fused recurrent matmul (r|z|n on lanes)."""
    gh = jnp.dot(h.astype(jnp.bfloat16), whh_bf16, preferred_element_type=jnp.float32)
    r = jax.nn.sigmoid(gi[:, 0:H] + gh[:, 0:H])
    z = jax.nn.sigmoid(gi[:, H:2 * H] + gh[:, H:2 * H])
    n = jnp.tanh(gi[:, 2 * H:3 * H] + r * (gh[:, 2 * H:3 * H] + bhn_b))
    return (1.0 - z) * n + z * h


# ----------------------------------------------------------------------------
# 1) Word-GRU + mean pool (gridded, in-kernel embedding gather, fused gates)
# ----------------------------------------------------------------------------
def _gru_mean_kernel(ids_ref, lens_ref, we_ref, wih_ref, whh_ref, bi_ref, bhn_ref,
                     out_ref, gi_ref, *, T):
    rows = ids_ref.shape[0]            # T * blk (t-major within the block)
    B = rows // T
    H = whh_ref.shape[0]
    V = we_ref.shape[0]

    # ---- embedding gather via one-hot matmul (exact, f32) ----
    ids = ids_ref[...]                                             # (T*B, 1) int32
    onehot = (ids == lax.broadcasted_iota(jnp.int32, (rows, V), 1)).astype(jnp.float32)
    x = jnp.dot(onehot, we_ref[...], preferred_element_type=jnp.float32)  # (T*B, D)

    # ---- batched input projection for all timesteps, staged in VMEM ----
    gi_ref[...] = jnp.dot(x.astype(jnp.bfloat16), wih_ref[...],
                          preferred_element_type=jnp.float32) + bi_ref[...]

    lens = lens_ref[...]                                           # (B, 1)
    bhn = bhn_ref[...] + jnp.zeros((B, H), jnp.float32)            # hoisted broadcast
    whh = whh_ref[...]                                             # (H, 3H) bf16

    h = jnp.zeros((B, H), jnp.float32)
    acc = jnp.zeros((B, H), jnp.float32)
    for t in range(T):                                             # static unroll
        gi = gi_ref[pl.ds(t * B, B), :]
        h = _gru_cell(h, gi, whh, bhn, H)
        mask = (lens > float(t)).astype(jnp.float32)               # t < seq_len
        acc = acc + mask * h
    out_ref[...] = acc / lens                                      # exact division


def gru_mean_pool(ids_col, lens_col, word_embed, wih, whh, bi, bhn, *, T, blk, n_blocks):
    H = whh.shape[0]
    rows_blk = T * blk
    return pl.pallas_call(
        functools.partial(_gru_mean_kernel, T=T),
        out_shape=jax.ShapeDtypeStruct((n_blocks * blk, H), jnp.float32),
        grid=(n_blocks,),
        in_specs=[
            pl.BlockSpec((rows_blk, 1), lambda i: (i, 0)),
            pl.BlockSpec((blk, 1), lambda i: (i, 0)),
            pl.BlockSpec(word_embed.shape, lambda i: (0, 0)),
            pl.BlockSpec(wih.shape, lambda i: (0, 0)),
            pl.BlockSpec(whh.shape, lambda i: (0, 0)),
            pl.BlockSpec(bi.shape, lambda i: (0, 0)),
            pl.BlockSpec(bhn.shape, lambda i: (0, 0)),
        ],
        out_specs=pl.BlockSpec((blk, H), lambda i: (i, 0)),
        scratch_shapes=[pltpu.VMEM((rows_blk, 3 * H), jnp.float32)],
        compiler_params=pltpu.CompilerParams(dimension_semantics=("parallel",)),
    )(ids_col, lens_col, word_embed, wih, whh, bi, bhn)


# ----------------------------------------------------------------------------
# 2) Fused direct + semi-supervised losses
# ----------------------------------------------------------------------------
def _dir_semi_kernel(p_ref, ab_ref, pap_ref,
                     w0_ref, b0_ref, g0_ref, be0_ref,
                     w1_ref, b1_ref, g1_ref, be1_ref,
                     fw1_ref, fb1_ref, fw2_ref, fb2_ref,
                     dir_ref, semi_ref, *, n_pos):
    ab = ab_ref[...]                                               # (2N, E): [pos; neg]
    p2 = jnp.concatenate([p_ref[...], p_ref[...]], axis=0)         # (2N, E)
    d = p2 - ab
    dir_ref[...] = jnp.sum(d * d, axis=1, keepdims=True)           # (2N, 1)

    pap2 = jnp.concatenate([pap_ref[...], pap_ref[...]], axis=0)   # (2N, E)
    R = _edge_mlp_math(ab, pap2,
                       w0_ref[...], b0_ref[...], g0_ref[...], be0_ref[...],
                       w1_ref[...], b1_ref[...], g1_ref[...], be1_ref[...])
    h = jnp.maximum(jnp.dot(R.astype(jnp.bfloat16), fw1_ref[...],
                            preferred_element_type=jnp.float32) + fb1_ref[...], 0.0)
    out = jnp.dot(h.astype(jnp.bfloat16), fw2_ref[...],
                  preferred_element_type=jnp.float32) + fb2_ref[...]     # (2N, 1)

    rows = lax.broadcasted_iota(jnp.int32, out.shape, 0)
    sign = jnp.where(rows < n_pos, 1.0, -1.0)
    ls = _logsigmoid(sign * out)
    semi_ref[...] = jnp.concatenate(
        [jnp.sum(jnp.where(rows < n_pos, ls, 0.0), keepdims=True),
         jnp.sum(jnp.where(rows >= n_pos, ls, 0.0), keepdims=True)], axis=1)


def dir_semi_loss(p_c_dir_e, a_both, papers_e, edge_p, final_p):
    n_pos = p_c_dir_e.shape[0]
    return pl.pallas_call(
        functools.partial(_dir_semi_kernel, n_pos=n_pos),
        out_shape=(jax.ShapeDtypeStruct((2 * n_pos, 1), jnp.float32),
                   jax.ShapeDtypeStruct((1, 2), jnp.float32)),
        in_specs=_vmem(15),
        out_specs=(pl.BlockSpec(memory_space=VMEM),) * 2,
    )(p_c_dir_e, a_both, papers_e,
      edge_p["w0"].astype(jnp.bfloat16), edge_p["b0"], edge_p["g0"], edge_p["be0"],
      edge_p["w1"].astype(jnp.bfloat16), edge_p["b1"], edge_p["g1"], edge_p["be1"],
      final_p["w1"].astype(jnp.bfloat16), final_p["b1"],
      final_p["w2"].astype(jnp.bfloat16), final_p["b2"])


# ----------------------------------------------------------------------------
# 3) Fused context loss: edge_MLP(R_x_y) + bi-GRU + project_output + pooling
#    + prob + logsigmoid
# ----------------------------------------------------------------------------
def _ctx_loss_kernel(xf_ref, pa_ref, pp_ref,
                     wfi_ref, wfh_ref, bfi_ref, bfn_ref,
                     wbi_ref, wbh_ref, bbi_ref, bbn_ref,
                     w0_ref, b0_ref, g0_ref, be0_ref,
                     w1_ref, b1_ref, g1_ref, be1_ref,
                     wp_ref, bp_ref,
                     out_ref, gif_ref, gib_ref, *, L, n_pos, n_valid):
    Nc = pa_ref.shape[0]                                   # padded #contexts
    H = wfh_ref.shape[0]

    # R_x_y = edge_MLP(make_input(author, paper))
    R = _edge_mlp_math(pa_ref[...], pp_ref[...],
                       w0_ref[...], b0_ref[...], g0_ref[...], be0_ref[...],
                       w1_ref[...], b1_ref[...], g1_ref[...], be1_ref[...])

    # Batched input projections for both directions -> VMEM scratch
    xf = xf_ref[...].astype(jnp.bfloat16)                  # (L*Nc, E)
    gif_ref[...] = jnp.dot(xf, wfi_ref[...],
                           preferred_element_type=jnp.float32) + bfi_ref[...]
    gib_ref[...] = jnp.dot(xf, wbi_ref[...],
                           preferred_element_type=jnp.float32) + bbi_ref[...]

    bfn = bfn_ref[...] + jnp.zeros((Nc, H), jnp.float32)   # hoisted broadcasts
    bbn = bbn_ref[...] + jnp.zeros((Nc, H), jnp.float32)
    wfh = wfh_ref[...]
    wbh = wbh_ref[...]

    hf = jnp.zeros((Nc, H), jnp.float32)
    hb = jnp.zeros((Nc, H), jnp.float32)
    sf = jnp.zeros((Nc, H), jnp.float32)
    sb = jnp.zeros((Nc, H), jnp.float32)
    for t in range(L):                                     # static unroll (L small)
        tb = L - 1 - t
        hf = _gru_cell(hf, gif_ref[pl.ds(t * Nc, Nc), :], wfh, bfn, H)
        hb = _gru_cell(hb, gib_ref[pl.ds(tb * Nc, Nc), :], wbh, bbn, H)
        sf = sf + hf
        sb = sb + hb

    # project_output applied to the time-mean of the bi-GRU outputs.
    # TODO(synk): the real `model_attention` module is external (passed to
    # __init__, not defined in the spec); uniform mean pooling over the context
    # axis stands in for it here.
    inv_l = 1.0 / float(L)
    pooled = jnp.concatenate([sf * inv_l, sb * inv_l], axis=1)       # (Nc, 2H)
    attn = jnp.dot(pooled.astype(jnp.bfloat16), wp_ref[...],
                   preferred_element_type=jnp.float32) + bp_ref[...]
    prob = jnp.sum(R * attn, axis=1, keepdims=True)                  # (Nc, 1)

    rows = lax.broadcasted_iota(jnp.int32, prob.shape, 0)
    sign = jnp.where(rows < n_pos, 1.0, -1.0)
    ls = _logsigmoid(sign * prob)
    out_ref[...] = jnp.concatenate(
        [jnp.sum(jnp.where(rows < n_pos, ls, 0.0), keepdims=True),
         jnp.sum(jnp.where((rows >= n_pos) & (rows < n_valid), ls, 0.0),
                 keepdims=True)], axis=1)


def ctx_loss(ctx_flat, pair_auth_e, pair_pap_e, pf, pb, wp, bp, edge_p,
             ctx_len, n_ctx, num_neg_ctx):
    Nc_pad = pair_auth_e.shape[0]
    H = pf["whh"].shape[0]
    wfi, wfh, bfi, bfn = _fold_gru(pf)
    wbi, wbh, bbi, bbn = _fold_gru(pb)
    return pl.pallas_call(
        functools.partial(_ctx_loss_kernel, L=ctx_len,
                          n_pos=n_ctx - num_neg_ctx, n_valid=n_ctx),
        out_shape=jax.ShapeDtypeStruct((1, 2), jnp.float32),
        in_specs=_vmem(21),
        out_specs=pl.BlockSpec(memory_space=VMEM),
        scratch_shapes=[pltpu.VMEM((ctx_len * Nc_pad, 3 * H), jnp.float32),
                        pltpu.VMEM((ctx_len * Nc_pad, 3 * H), jnp.float32)],
    )(ctx_flat, pair_auth_e, pair_pap_e,
      wfi, wfh, bfi, bfn, wbi, wbh, bbi, bbn,
      edge_p["w0"].astype(jnp.bfloat16), edge_p["b0"], edge_p["g0"], edge_p["be0"],
      edge_p["w1"].astype(jnp.bfloat16), edge_p["b1"], edge_p["g1"], edge_p["be1"],
      wp.astype(jnp.bfloat16), bp)


# ----------------------------------------------------------------------------
# Parameters (gate-fused GRU layout: weights (D,3H)/(H,3H), gates r|z|n on lanes)
# ----------------------------------------------------------------------------
AUTHOR_NUM = 10
EMBED_D = 32
WORD_N = 50
WORD_DIM = 16
DNN_DIMS = [64, 32]
C_LEN = 8
INIT_STD = 0.1


def _gru_params(key, d_in, h, std=0.1):
    k1, k2, k3, k4 = jax.random.split(key, 4)
    return {
        "wih": jax.random.normal(k1, (d_in, 3 * h), jnp.float32) * std,
        "whh": jax.random.normal(k2, (h, 3 * h), jnp.float32) * std,
        "bih": jax.random.normal(k3, (1, 3 * h), jnp.float32) * std,
        "bhh": jax.random.normal(k4, (1, 3 * h), jnp.float32) * std,
    }


def _fold_gru(p):
    """Fold b_hh(r,z) into b_ih(r,z); keep b_hh(n) separate (multiplied by r)."""
    h = p["whh"].shape[0]
    bih, bhh = p["bih"], p["bhh"]
    bi = jnp.concatenate([bih[:, :2 * h] + bhh[:, :2 * h], bih[:, 2 * h:]], axis=1)
    return (p["wih"].astype(jnp.bfloat16), p["whh"].astype(jnp.bfloat16),
            bi, bhh[:, 2 * h:])


def init_params(key):
    ks = jax.random.split(key, 10)
    d0, d1 = DNN_DIMS
    return {
        "author_embed": jax.random.normal(ks[0], (AUTHOR_NUM, EMBED_D), jnp.float32) * INIT_STD,
        "word_embed": jax.random.normal(ks[1], (WORD_N + 2, WORD_DIM), jnp.float32) * 0.5,
        "rnn_words": _gru_params(ks[2], WORD_DIM, EMBED_D),
        "rnn_ctx_f": _gru_params(ks[3], EMBED_D, d1),
        "rnn_ctx_b": _gru_params(ks[4], EMBED_D, d1),
        "proj_w": jax.random.normal(ks[5], (2 * d1, d1), jnp.float32) * 0.01,
        "proj_b": jnp.zeros((1, d1), jnp.float32),
        "edge_mlp": {
            "w0": jax.random.normal(ks[6], (4 * EMBED_D, d0), jnp.float32) * INIT_STD,
            "b0": jnp.zeros((1, d0), jnp.float32),
            "g0": jnp.ones((1, d0), jnp.float32),
            "be0": jnp.zeros((1, d0), jnp.float32),
            "w1": jax.random.normal(ks[7], (d0, d1), jnp.float32) * INIT_STD,
            "b1": jnp.zeros((1, d1), jnp.float32),
            "g1": jnp.ones((1, d1), jnp.float32),
            "be1": jnp.zeros((1, d1), jnp.float32),
        },
        "final": {
            "w1": jax.random.normal(ks[8], (d1, d1), jnp.float32) * INIT_STD,
            "b1": jnp.zeros((1, d1), jnp.float32),
            "w2": jax.random.normal(ks[9], (d1, 1), jnp.float32) * INIT_STD,
            "b2": jnp.zeros((1, 1), jnp.float32),
        },
    }


# ----------------------------------------------------------------------------
# Forward pass (jitted array part; python-list index extraction stays on host)
# ----------------------------------------------------------------------------
@functools.partial(jax.jit, static_argnames=("ctx_len", "num_neg_ctx"))
def _forward_core(params, p_a_a_dir, p_c_dir_input, seq_lengths_dir,
                  pair_author_idxs, pair_paper_idxs,
                  ctx_author_idxs, ctx_paper_idxs,
                  paper_contents, paper_lens, *, ctx_len, num_neg_ctx):
    B, T = p_c_dir_input.shape
    Nc = pair_author_idxs.shape[0]
    n_ctx_pap = ctx_paper_idxs.shape[0]
    E = EMBED_D

    # ---- one batched word-GRU call for every content/paper representation ----
    paper_list = p_a_a_dir[:, 0].astype(jnp.int32)
    pap_ids = jnp.concatenate([paper_list, pair_paper_idxs, ctx_paper_idxs])
    all_content = jnp.concatenate([p_c_dir_input, paper_contents[pap_ids]], axis=0)
    all_lens = jnp.concatenate([seq_lengths_dir.astype(jnp.float32),
                                paper_lens[pap_ids].astype(jnp.float32)], axis=0)
    n_rows = all_content.shape[0]
    # Adaptive block: <= 128 rows, aim for >= 2 grid steps (v7x megacore).
    half = -(-n_rows // 2)
    blk = min(128, max(8, ((half + 7) // 8) * 8))
    n_pad = ((n_rows + blk - 1) // blk) * blk
    n_blocks = n_pad // blk
    all_content = jnp.pad(all_content, ((0, n_pad - n_rows), (0, 0)))
    all_lens = jnp.pad(all_lens, (0, n_pad - n_rows), constant_values=1.0)

    # t-major token-id column per batch block: row = i*(T*blk) + t*blk + b
    ids_col = all_content.reshape(n_blocks, blk, T).transpose(0, 2, 1).reshape(-1, 1)
    lens_col = all_lens.reshape(-1, 1)

    wih, whh, bi, bhn = _fold_gru(params["rnn_words"])
    reps = gru_mean_pool(ids_col, lens_col, params["word_embed"], wih, whh, bi, bhn,
                         T=T, blk=blk, n_blocks=n_blocks)
    p_c_dir_e = reps[:B]
    papers_e = reps[B:2 * B]
    pair_pap_e = reps[2 * B:2 * B + Nc]
    pap_e = reps[2 * B + Nc:2 * B + Nc + n_ctx_pap]

    # ---- fused direct (squared distance) + semi-supervised losses ----
    a_idx_both = jnp.concatenate([p_a_a_dir[:, 1], p_a_a_dir[:, 2]]).astype(jnp.int32)
    a_both = params["author_embed"][a_idx_both]              # (2B, E): [pos; neg]
    dir_out, semi_out = dir_semi_loss(p_c_dir_e, a_both, papers_e,
                                      params["edge_mlp"], params["final"])
    pos_dir_loss = dir_out[:B, 0]
    neg_dir_loss = dir_out[B:, 0]
    pos_semi_loss = semi_out[0, 0]
    neg_semi_loss = semi_out[0, 1]

    # ---- context part ----
    pair_auth_e = params["author_embed"][pair_author_idxs]
    auth_e = params["author_embed"][ctx_author_idxs]
    contexts = jnp.stack((auth_e, pap_e), axis=1).reshape(-1, ctx_len, E)   # (Nc, L, E)
    Nc_pad = ((Nc + 7) // 8) * 8
    pad = Nc_pad - Nc
    pair_pap_e2 = pair_pap_e
    if pad:
        contexts = jnp.pad(contexts, ((0, pad), (0, 0), (0, 0)))
        pair_auth_e = jnp.pad(pair_auth_e, ((0, pad), (0, 0)))
        pair_pap_e2 = jnp.pad(pair_pap_e, ((0, pad), (0, 0)))
    ctx_flat = jnp.transpose(contexts, (1, 0, 2)).reshape(ctx_len * Nc_pad, E)
    ctx_out = ctx_loss(ctx_flat, pair_auth_e, pair_pap_e2,
                       params["rnn_ctx_f"], params["rnn_ctx_b"],
                       params["proj_w"], params["proj_b"], params["edge_mlp"],
                       ctx_len, Nc, num_neg_ctx)
    pos_ctx_loss = ctx_out[0, 0]
    neg_ctx_loss = ctx_out[0, 1]

    return (pos_dir_loss, neg_dir_loss, pos_semi_loss, neg_semi_loss,
            pos_ctx_loss, neg_ctx_loss)


def forward(params, p_a_a_dir, p_c_dir_input, seq_lengths_dir,
            pair_context_pair, pair_context_context, num_neg_ctx,
            paper_contents, paper_lens):
    pair_author_idxs = jnp.asarray([elem[0][1] for elem in pair_context_pair],
                                   jnp.int32)
    pair_paper_idxs = jnp.asarray([elem[1][0] for elem in pair_context_pair],
                                  jnp.int32)
    ctx_author_idxs = jnp.asarray([elem[1] for context in pair_context_context
                                   for elem in context if len(elem) == 2], jnp.int32)
    ctx_paper_idxs = jnp.asarray([elem[0] for context in pair_context_context
                                  for elem in context if len(elem) == 1], jnp.int32)
    ctx_len = len(pair_context_context[0])
    return _forward_core(params, p_a_a_dir, p_c_dir_input, seq_lengths_dir,
                         pair_author_idxs, pair_paper_idxs,
                         ctx_author_idxs, ctx_paper_idxs,
                         paper_contents, paper_lens,
                         ctx_len=ctx_len, num_neg_ctx=int(num_neg_ctx))


if __name__ == "__main__":
    key = jax.random.PRNGKey(0)
    k_param, k_pc, k_paa, k_cont, k_clen = jax.random.split(key, 5)

    params = init_params(k_param)

    B, T = 8, C_LEN
    NUM_PAPERS = 16

    # synthetic per-paper word-id content (stands in for input_data.gen_content)
    paper_contents = jax.random.randint(k_cont, (NUM_PAPERS, C_LEN), 0, WORD_N + 2,
                                        dtype=jnp.int32)
    paper_lens = jax.random.randint(k_clen, (NUM_PAPERS,), 1, C_LEN + 1,
                                    dtype=jnp.int32)

    p_c_dir_input = jax.random.randint(k_pc, (B, T), 0, WORD_N + 2, dtype=jnp.int32)
    seq_lengths_dir = jnp.array([8, 8, 7, 6, 5, 4, 3, 2], jnp.int32)  # descending

    paper_col = jax.random.randint(k_paa, (B,), 0, NUM_PAPERS, dtype=jnp.int32)
    auth_pos = ((paper_col * 3 + 1) % AUTHOR_NUM).astype(jnp.int32)
    auth_neg = ((auth_pos + 3) % AUTHOR_NUM).astype(jnp.int32)
    p_a_a_dir = jnp.stack([paper_col, auth_pos, auth_neg], axis=1)

    # context structures (same nesting the PyTorch forward expects)
    NC, CTX_LEN, NUM_NEG_CTX = 8, 4, 2
    pair_context_pair = [((i % NUM_PAPERS, i % AUTHOR_NUM), ((i + 1) % NUM_PAPERS,))
                         for i in range(NC)]
    pair_context_context = []
    pid = 0
    for c in range(NC):
        ctx = []
        for _ in range(CTX_LEN // 2):
            ctx.append([0, (pid + c) % AUTHOR_NUM])   # len-2 elem -> author at [1]
            ctx.append([pid % NUM_PAPERS])            # len-1 elem -> paper at [0]
            pid += 1
        pair_context_context.append(ctx)

    outs = forward(params, p_a_a_dir, p_c_dir_input, seq_lengths_dir,
                   pair_context_pair, pair_context_context, NUM_NEG_CTX,
                   paper_contents, paper_lens)
    jax.block_until_ready(outs)
    print("KERNEL_OK")
</pallas_src>

<mosaic_0001>
module attributes {stable_mosaic.version = 11 : i64} {
  func.func @_gru_mean_kernel(%arg0: i32, %arg1: memref<192x1xi32, #tpu.memory_space<vmem>>, %arg2: memref<24x1xf32, #tpu.memory_space<vmem>>, %arg3: memref<52x16xf32, #tpu.memory_space<vmem>>, %arg4: memref<16x96xbf16, #tpu.memory_space<vmem>>, %arg5: memref<32x96xbf16, #tpu.memory_space<vmem>>, %arg6: memref<1x96xf32, #tpu.memory_space<vmem>>, %arg7: memref<1x32xf32, #tpu.memory_space<vmem>>, %arg8: memref<24x32xf32, #tpu.memory_space<vmem>>, %arg9: memref<192x96xf32, #tpu.memory_space<vmem>>) attributes {dimension_semantics = [#tpu.dimension_semantics<parallel>], iteration_bounds = array<i64: 2>, scalar_prefetch = 0 : i64, scratch_operands = 1 : i64, tpu.core_type = #tpu.core_type<tc>, window_params = [{transform_indices = @transform_0, window_bounds = array<i64: 192, 1>}, {transform_indices = @transform_1, window_bounds = array<i64: 24, 1>}, {pipeline_mode = #tpu.pipeline_mode<synchronous>, transform_indices = @transform_2, window_bounds = array<i64: 52, 16>}, {pipeline_mode = #tpu.pipeline_mode<synchronous>, transform_indices = @transform_3, window_bounds = array<i64: 16, 96>}, {pipeline_mode = #tpu.pipeline_mode<synchronous>, transform_indices = @transform_4, window_bounds = array<i64: 32, 96>}, {pipeline_mode = #tpu.pipeline_mode<synchronous>, transform_indices = @transform_5, window_bounds = array<i64: 1, 96>}, {pipeline_mode = #tpu.pipeline_mode<synchronous>, transform_indices = @transform_6, window_bounds = array<i64: 1, 32>}, {transform_indices = @transform_7, window_bounds = array<i64: 24, 32>}]} {
    %c0 = arith.constant 0 : index
    %c0_0 = arith.constant 0 : index
    %0 = vector.load %arg1[%c0, %c0_0] : memref<192x1xi32, #tpu.memory_space<vmem>>, vector<192x1xi32>
    %1 = tpu.iota {dimensions = array<i32: 1>} : vector<192x52xi32>
    %2 = vector.broadcast %0 : vector<192x1xi32> to vector<192x52xi32>
    %3 = arith.cmpi eq, %2, %1 : vector<192x52xi32>
    %4 = arith.extui %3 : vector<192x52xi1> to vector<192x52xi32>
    %5 = arith.sitofp %4 : vector<192x52xi32> to vector<192x52xf32>
    %c0_1 = arith.constant 0 : index
    %c0_2 = arith.constant 0 : index
    %6 = vector.load %arg3[%c0_1, %c0_2] : memref<52x16xf32, #tpu.memory_space<vmem>>, vector<52x16xf32>
    %cst = arith.constant dense<0.000000e+00> : vector<192x16xf32>
    %7 = tpu.matmul %5, %6, %cst {dimension_numbers = #tpu.dot_dimension_numbers<[1], [0], [0], [1], [0, 0, 1, 1], [], []>} : vector<192x52xf32>, vector<52x16xf32>, vector<192x16xf32> -> vector<192x16xf32>
    %8 = arith.truncf %7 : vector<192x16xf32> to vector<192x16xbf16>
    %c0_3 = arith.constant 0 : index
    %c0_4 = arith.constant 0 : index
    %9 = vector.load %arg4[%c0_3, %c0_4] : memref<16x96xbf16, #tpu.memory_space<vmem>>, vector<16x96xbf16>
    %cst_5 = arith.constant dense<0.000000e+00> : vector<192x96xf32>
    %10 = tpu.matmul %8, %9, %cst_5 {dimension_numbers = #tpu.dot_dimension_numbers<[1], [0], [0], [1], [0, 0, 1, 1], [], []>} : vector<192x16xbf16>, vector<16x96xbf16>, vector<192x96xf32> -> vector<192x96xf32>
    %c0_6 = arith.constant 0 : index
    %c0_7 = arith.constant 0 : index
    %11 = vector.load %arg6[%c0_6, %c0_7] : memref<1x96xf32, #tpu.memory_space<vmem>>, vector<1x96xf32>
    %12 = vector.broadcast %11 : vector<1x96xf32> to vector<192x96xf32>
    %13 = arith.addf %10, %12 : vector<192x96xf32>
    %c0_8 = arith.constant 0 : index
    %c0_9 = arith.constant 0 : index
    %14 = vector.load %arg9[%c0_8, %c0_9] : memref<192x96xf32, #tpu.memory_space<vmem>>, vector<192x96xf32>
    tpu.vector_store %arg9[%c0_8, %c0_9], %13 {strides = array<i32>} : memref<192x96xf32, #tpu.memory_space<vmem>>, vector<192x96xf32>,
    %c0_10 = arith.constant 0 : index
    %c0_11 = arith.constant 0 : index
    %15 = vector.load %arg2[%c0_10, %c0_11] : memref<24x1xf32, #tpu.memory_space<vmem>>, vector<24x1xf32>
    %c0_12 = arith.constant 0 : index
    %c0_13 = arith.constant 0 : index
    %16 = vector.load %arg7[%c0_12, %c0_13] : memref<1x32xf32, #tpu.memory_space<vmem>>, vector<1x32xf32>
    %cst_14 = arith.constant 0.000000e+00 : f32
    %17 = vector.broadcast %cst_14 : f32 to vector<24x32xf32>
    %18 = vector.broadcast %16 : vector<1x32xf32> to vector<24x32xf32>
    %19 = arith.addf %18, %17 : vector<24x32xf32>
    %c0_15 = arith.constant 0 : index
    %c0_16 = arith.constant 0 : index
    %20 = vector.load %arg5[%c0_15, %c0_16] : memref<32x96xbf16, #tpu.memory_space<vmem>>, vector<32x96xbf16>
    %cst_17 = arith.constant 0.000000e+00 : f32
    %21 = vector.broadcast %cst_17 : f32 to vector<24x32xf32>
    %cst_18 = arith.constant 0.000000e+00 : f32
    %22 = vector.broadcast %cst_18 : f32 to vector<24x32xf32>
    %c0_19 = arith.constant 0 : index
    %c0_20 = arith.constant 0 : index
    %23 = vector.load %arg9[%c0_19, %c0_20] : memref<192x96xf32, #tpu.memory_space<vmem>>, vector<24x96xf32>
    %24 = arith.truncf %21 : vector<24x32xf32> to vector<24x32xbf16>
    %cst_21 = arith.constant dense<0.000000e+00> : vector<24x96xf32>
    %25 = tpu.matmul %24, %20, %cst_21 {dimension_numbers = #tpu.dot_dimension_numbers<[1], [0], [0], [1], [0, 0, 1, 1], [], []>} : vector<24x32xbf16>, vector<32x96xbf16>, vector<24x96xf32> -> vector<24x96xf32>
    %26 = vector.extract_strided_slice %23 {offsets = [0, 0], sizes = [24, 32], strides = [1, 1]} : vector<24x96xf32> to vector<24x32xf32>
    %27 = vector.extract_strided_slice %25 {offsets = [0, 0], sizes = [24, 32], strides = [1, 1]} : vector<24x96xf32> to vector<24x32xf32>
    %28 = arith.addf %26, %27 : vector<24x32xf32>
    %29 = arith.negf %28 : vector<24x32xf32>
    %30 = math.exp %29 : vector<24x32xf32>
    %cst_22 = arith.constant 1.000000e+00 : f32
    %31 = vector.broadcast %cst_22 : f32 to vector<24x32xf32>
    %32 = arith.addf %31, %30 : vector<24x32xf32>
    %33 = arith.divf %31, %32 : vector<24x32xf32>
    %34 = vector.extract_strided_slice %23 {offsets = [0, 32], sizes = [24, 32], strides = [1, 1]} : vector<24x96xf32> to vector<24x32xf32>
    %35 = vector.extract_strided_slice %25 {offsets = [0, 32], sizes = [24, 32], strides = [1, 1]} : vector<24x96xf32> to vector<24x32xf32>
    %36 = arith.addf %34, %35 : vector<24x32xf32>
    %37 = arith.negf %36 : vector<24x32xf32>
    %38 = math.exp %37 : vector<24x32xf32>
    %cst_23 = arith.constant 1.000000e+00 : f32
    %39 = vector.broadcast %cst_23 : f32 to vector<24x32xf32>
    %40 = arith.addf %39, %38 : vector<24x32xf32>
    %41 = arith.divf %39, %40 : vector<24x32xf32>
    %42 = vector.extract_strided_slice %23 {offsets = [0, 64], sizes = [24, 32], strides = [1, 1]} : vector<24x96xf32> to vector<24x32xf32>
    %43 = vector.extract_strided_slice %25 {offsets = [0, 64], sizes = [24, 32], strides = [1, 1]} : vector<24x96xf32> to vector<24x32xf32>
    %44 = arith.addf %43, %19 : vector<24x32xf32>
    %45 = arith.mulf %33, %44 : vector<24x32xf32>
    %46 = arith.addf %42, %45 : vector<24x32xf32>
    %47 = math.tanh %46 : vector<24x32xf32>
    %cst_24 = arith.constant 1.000000e+00 : f32
    %48 = vector.broadcast %cst_24 : f32 to vector<24x32xf32>
    %49 = arith.subf %48, %41 : vector<24x32xf32>
    %50 = arith.mulf %49, %47 : vector<24x32xf32>
    %51 = arith.mulf %41, %21 : vector<24x32xf32>
    %52 = arith.addf %50, %51 : vector<24x32xf32>
    %cst_25 = arith.constant 0.000000e+00 : f32
    %53 = vector.broadcast %cst_25 : f32 to vector<24x1xf32>
    %54 = arith.cmpf ogt, %15, %53 : vector<24x1xf32>
    %55 = arith.extui %54 : vector<24x1xi1> to vector<24x1xi32>
    %56 = arith.sitofp %55 : vector<24x1xi32> to vector<24x1xf32>
    %57 = vector.broadcast %56 : vector<24x1xf32> to vector<24x32xf32>
    %58 = arith.mulf %57, %52 : vector<24x32xf32>
    %59 = arith.addf %22, %58 : vector<24x32xf32>
    %c24 = arith.constant 24 : index
    %c0_26 = arith.constant 0 : index
    %60 = vector.load %arg9[%c24, %c0_26] : memref<192x96xf32, #tpu.memory_space<vmem>>, vector<24x96xf32>
    %61 = arith.truncf %52 : vector<24x32xf32> to vector<24x32xbf16>
    %cst_27 = arith.constant dense<0.000000e+00> : vector<24x96xf32>
    %62 = tpu.matmul %61, %20, %cst_27 {dimension_numbers = #tpu.dot_dimension_numbers<[1], [0], [0], [1], [0, 0, 1, 1], [], []>} : vector<24x32xbf16>, vector<32x96xbf16>, vector<24x96xf32> -> vector<24x96xf32>
    %63 = vector.extract_strided_slice %60 {offsets = [0, 0], sizes = [24, 32], strides = [1, 1]} : vector<24x96xf32> to vector<24x32xf32>
    %64 = vector.extract_strided_slice %62 {offsets = [0, 0], sizes = [24, 32], strides = [1, 1]} : vector<24x96xf32> to vector<24x32xf32>
    %65 = arith.addf %63, %64 : vector<24x32xf32>
    %66 = arith.negf %65 : vector<24x32xf32>
    %67 = math.exp %66 : vector<24x32xf32>
    %cst_28 = arith.constant 1.000000e+00 : f32
    %68 = vector.broadcast %cst_28 : f32 to vector<24x32xf32>
    %69 = arith.addf %68, %67 : vector<24x32xf32>
    %70 = arith.divf %68, %69 : vector<24x32xf32>
    %71 = vector.extract_strided_slice %60 {offsets = [0, 32], sizes = [24, 32], strides = [1, 1]} : vector<24x96xf32> to vector<24x32xf32>
    %72 = vector.extract_strided_slice %62 {offsets = [0, 32], sizes = [24, 32], strides = [1, 1]} : vector<24x96xf32> to vector<24x32xf32>
    %73 = arith.addf %71, %72 : vector<24x32xf32>
    %74 = arith.negf %73 : vector<24x32xf32>
    %75 = math.exp %74 : vector<24x32xf32>
    %cst_29 = arith.constant 1.000000e+00 : f32
    %76 = vector.broadcast %cst_29 : f32 to vector<24x32xf32>
    %77 = arith.addf %76, %75 : vector<24x32xf32>
    %78 = arith.divf %76, %77 : vector<24x32xf32>
    %79 = vector.extract_strided_slice %60 {offsets = [0, 64], sizes = [24, 32], strides = [1, 1]} : vector<24x96xf32> to vector<24x32xf32>
    %80 = vector.extract_strided_slice %62 {offsets = [0, 64], sizes = [24, 32], strides = [1, 1]} : vector<24x96xf32> to vector<24x32xf32>
    %81 = arith.addf %80, %19 : vector<24x32xf32>
    %82 = arith.mulf %70, %81 : vector<24x32xf32>
    %83 = arith.addf %79, %82 : vector<24x32xf32>
    %84 = math.tanh %83 : vector<24x32xf32>
    %cst_30 = arith.constant 1.000000e+00 : f32
    %85 = vector.broadcast %cst_30 : f32 to vector<24x32xf32>
    %86 = arith.subf %85, %78 : vector<24x32xf32>
    %87 = arith.mulf %86, %84 : vector<24x32xf32>
    %88 = arith.mulf %78, %52 : vector<24x32xf32>
    %89 = arith.addf %87, %88 : vector<24x32xf32>
    %cst_31 = arith.constant 1.000000e+00 : f32
    %90 = vector.broadcast %cst_31 : f32 to vector<24x1xf32>
    %91 = arith.cmpf ogt, %15, %90 : vector<24x1xf32>
    %92 = arith.extui %91 : vector<24x1xi1> to vector<24x1xi32>
    %93 = arith.sitofp %92 : vector<24x1xi32> to vector<24x1xf32>
    %94 = vector.broadcast %93 : vector<24x1xf32> to vector<24x32xf32>
    %95 = arith.mulf %94, %89 : vector<24x32xf32>
    %96 = arith.addf %59, %95 : vector<24x32xf32>
    %c48 = arith.constant 48 : index
    %c0_32 = arith.constant 0 : index
    %97 = vector.load %arg9[%c48, %c0_32] : memref<192x96xf32, #tpu.memory_space<vmem>>, vector<24x96xf32>
    %98 = arith.truncf %89 : vector<24x32xf32> to vector<24x32xbf16>
    %cst_33 = arith.constant dense<0.000000e+00> : vector<24x96xf32>
    %99 = tpu.matmul %98, %20, %cst_33 {dimension_numbers = #tpu.dot_dimension_numbers<[1], [0], [0], [1], [0, 0, 1, 1], [], []>} : vector<24x32xbf16>, vector<32x96xbf16>, vector<24x96xf32> -> vector<24x96xf32>
    %100 = vector.extract_strided_slice %97 {offsets = [0, 0], sizes = [24, 32], strides = [1, 1]} : vector<24x96xf32> to vector<24x32xf32>
    %101 = vector.extract_strided_slice %99 {offsets = [0, 0], sizes = [24, 32], strides = [1, 1]} : vector<24x96xf32> to vector<24x32xf32>
    %102 = arith.addf %100, %101 : vector<24x32xf32>
    %103 = arith.negf %102 : vector<24x32xf32>
    %104 = math.exp %103 : vector<24x32xf32>
    %cst_34 = arith.constant 1.000000e+00 : f32
    %105 = vector.broadcast %cst_34 : f32 to vector<24x32xf32>
    %106 = arith.addf %105, %104 : vector<24x32xf32>
    %107 = arith.divf %105, %106 : vector<24x32xf32>
    %108 = vector.extract_strided_slice %97 {offsets = [0, 32], sizes = [24, 32], strides = [1, 1]} : vector<24x96xf32> to vector<24x32xf32>
    %109 = vector.extract_strided_slice %99 {offsets = [0, 32], sizes = [24, 32], strides = [1, 1]} : vector<24x96xf32> to vector<24x32xf32>
    %110 = arith.addf %108, %109 : vector<24x32xf32>
    %111 = arith.negf %110 : vector<24x32xf32>
    %112 = math.exp %111 : vector<24x32xf32>
    %cst_35 = arith.constant 1.000000e+00 : f32
    %113 = vector.broadcast %cst_35 : f32 to vector<24x32xf32>
    %114 = arith.addf %113, %112 : vector<24x32xf32>
    %115 = arith.divf %113, %114 : vector<24x32xf32>
    %116 = vector.extract_strided_slice %97 {offsets = [0, 64], sizes = [24, 32], strides = [1, 1]} : vector<24x96xf32> to vector<24x32xf32>
    %117 = vector.extract_strided_slice %99 {offsets = [0, 64], sizes = [24, 32], strides = [1, 1]} : vector<24x96xf32> to vector<24x32xf32>
    %118 = arith.addf %117, %19 : vector<24x32xf32>
    %119 = arith.mulf %107, %118 : vector<24x32xf32>
    %120 = arith.addf %116, %119 : vector<24x32xf32>
    %121 = math.tanh %120 : vector<24x32xf32>
    %cst_36 = arith.constant 1.000000e+00 : f32
    %122 = vector.broadcast %cst_36 : f32 to vector<24x32xf32>
    %123 = arith.subf %122, %115 : vector<24x32xf32>
    %124 = arith.mulf %123, %121 : vector<24x32xf32>
    %125 = arith.mulf %115, %89 : vector<24x32xf32>
    %126 = arith.addf %124, %125 : vector<24x32xf32>
    %cst_37 = arith.constant 2.000000e+00 : f32
    %127 = vector.broadcast %cst_37 : f32 to vector<24x1xf32>
    %128 = arith.cmpf ogt, %15, %127 : vector<24x1xf32>
    %129 = arith.extui %128 : vector<24x1xi1> to vector<24x1xi32>
    %130 = arith.sitofp %129 : vector<24x1xi32> to vector<24x1xf32>
    %131 = vector.broadcast %130 : vector<24x1xf32> to vector<24x32xf32>
    %132 = arith.mulf %131, %126 : vector<24x32xf32>
    %133 = arith.addf %96, %132 : vector<24x32xf32>
    %c72 = arith.constant 72 : index
    %c0_38 = arith.constant 0 : index
    %134 = vector.load %arg9[%c72, %c0_38] : memref<192x96xf32, #tpu.memory_space<vmem>>, vector<24x96xf32>
    %135 = arith.truncf %126 : vector<24x32xf32> to vector<24x32xbf16>
    %cst_39 = arith.constant dense<0.000000e+00> : vector<24x96xf32>
    %136 = tpu.matmul %135, %20, %cst_39 {dimension_numbers = #tpu.dot_dimension_numbers<[1], [0], [0], [1], [0, 0, 1, 1], [], []>} : vector<24x32xbf16>, vector<32x96xbf16>, vector<24x96xf32> -> vector<24x96xf32>
    %137 = vector.extract_strided_slice %134 {offsets = [0, 0], sizes = [24, 32], strides = [1, 1]} : vector<24x96xf32> to vector<24x32xf32>
    %138 = vector.extract_strided_slice %136 {offsets = [0, 0], sizes = [24, 32], strides = [1, 1]} : vector<24x96xf32> to vector<24x32xf32>
    %139 = arith.addf %137, %138 : vector<24x32xf32>
    %140 = arith.negf %139 : vector<24x32xf32>
    %141 = math.exp %140 : vector<24x32xf32>
    %cst_40 = arith.constant 1.000000e+00 : f32
    %142 = vector.broadcast %cst_40 : f32 to vector<24x32xf32>
    %143 = arith.addf %142, %141 : vector<24x32xf32>
    %144 = arith.divf %142, %143 : vector<24x32xf32>
    %145 = vector.extract_strided_slice %134 {offsets = [0, 32], sizes = [24, 32], strides = [1, 1]} : vector<24x96xf32> to vector<24x32xf32>
    %146 = vector.extract_strided_slice %136 {offsets = [0, 32], sizes = [24, 32], strides = [1, 1]} : vector<24x96xf32> to vector<24x32xf32>
    %147 = arith.addf %145, %146 : vector<24x32xf32>
    %148 = arith.negf %147 : vector<24x32xf32>
    %149 = math.exp %148 : vector<24x32xf32>
    %cst_41 = arith.constant 1.000000e+00 : f32
    %150 = vector.broadcast %cst_41 : f32 to vector<24x32xf32>
    %151 = arith.addf %150, %149 : vector<24x32xf32>
    %152 = arith.divf %150, %151 : vector<24x32xf32>
    %153 = vector.extract_strided_slice %134 {offsets = [0, 64], sizes = [24, 32], strides = [1, 1]} : vector<24x96xf32> to vector<24x32xf32>
    %154 = vector.extract_strided_slice %136 {offsets = [0, 64], sizes = [24, 32], strides = [1, 1]} : vector<24x96xf32> to vector<24x32xf32>
    %155 = arith.addf %154, %19 : vector<24x32xf32>
    %156 = arith.mulf %144, %155 : vector<24x32xf32>
    %157 = arith.addf %153, %156 : vector<24x32xf32>
    %158 = math.tanh %157 : vector<24x32xf32>
    %cst_42 = arith.constant 1.000000e+00 : f32
    %159 = vector.broadcast %cst_42 : f32 to vector<24x32xf32>
    %160 = arith.subf %159, %152 : vector<24x32xf32>
    %161 = arith.mulf %160, %158 : vector<24x32xf32>
    %162 = arith.mulf %152, %126 : vector<24x32xf32>
    %163 = arith.addf %161, %162 : vector<24x32xf32>
    %cst_43 = arith.constant 3.000000e+00 : f32
    %164 = vector.broadcast %cst_43 : f32 to vector<24x1xf32>
    %165 = arith.cmpf ogt, %15, %164 : vector<24x1xf32>
    %166 = arith.extui %165 : vector<24x1xi1> to vector<24x1xi32>
    %167 = arith.sitofp %166 : vector<24x1xi32> to vector<24x1xf32>
    %168 = vector.broadcast %167 : vector<24x1xf32> to vector<24x32xf32>
    %169 = arith.mulf %168, %163 : vector<24x32xf32>
    %170 = arith.addf %133, %169 : vector<24x32xf32>
    %c96 = arith.constant 96 : index
    %c0_44 = arith.constant 0 : index
    %171 = vector.load %arg9[%c96, %c0_44] : memref<192x96xf32, #tpu.memory_space<vmem>>, vector<24x96xf32>
    %172 = arith.truncf %163 : vector<24x32xf32> to vector<24x32xbf16>
    %cst_45 = arith.constant dense<0.000000e+00> : vector<24x96xf32>
    %173 = tpu.matmul %172, %20, %cst_45 {dimension_numbers = #tpu.dot_dimension_numbers<[1], [0], [0], [1], [0, 0, 1, 1], [], []>} : vector<24x32xbf16>, vector<32x96xbf16>, vector<24x96xf32> -> vector<24x96xf32>
    %174 = vector.extract_strided_slice %171 {offsets = [0, 0], sizes = [24, 32], strides = [1, 1]} : vector<24x96xf32> to vector<24x32xf32>
    %175 = vector.extract_strided_slice %173 {offsets = [0, 0], sizes = [24, 32], strides = [1, 1]} : vector<24x96xf32> to vector<24x32xf32>
    %176 = arith.addf %174, %175 : vector<24x32xf32>
    %177 = arith.negf %176 : vector<24x32xf32>
    %178 = math.exp %177 : vector<24x32xf32>
    %cst_46 = arith.constant 1.000000e+00 : f32
    %179 = vector.broadcast %cst_46 : f32 to vector<24x32xf32>
    %180 = arith.addf %179, %178 : vector<24x32xf32>
    %181 = arith.divf %179, %180 : vector<24x32xf32>
    %182 = vector.extract_strided_slice %171 {offsets = [0, 32], sizes = [24, 32], strides = [1, 1]} : vector<24x96xf32> to vector<24x32xf32>
    %183 = vector.extract_strided_slice %173 {offsets = [0, 32], sizes = [24, 32], strides = [1, 1]} : vector<24x96xf32> to vector<24x32xf32>
    %184 = arith.addf %182, %183 : vector<24x32xf32>
    %185 = arith.negf %184 : vector<24x32xf32>
    %186 = math.exp %185 : vector<24x32xf32>
    %cst_47 = arith.constant 1.000000e+00 : f32
    %187 = vector.broadcast %cst_47 : f32 to vector<24x32xf32>
    %188 = arith.addf %187, %186 : vector<24x32xf32>
    %189 = arith.divf %187, %188 : vector<24x32xf32>
    %190 = vector.extract_strided_slice %171 {offsets = [0, 64], sizes = [24, 32], strides = [1, 1]} : vector<24x96xf32> to vector<24x32xf32>
    %191 = vector.extract_strided_slice %173 {offsets = [0, 64], sizes = [24, 32], strides = [1, 1]} : vector<24x96xf32> to vector<24x32xf32>
    %192 = arith.addf %191, %19 : vector<24x32xf32>
    %193 = arith.mulf %181, %192 : vector<24x32xf32>
    %194 = arith.addf %190, %193 : vector<24x32xf32>
    %195 = math.tanh %194 : vector<24x32xf32>
    %cst_48 = arith.constant 1.000000e+00 : f32
    %196 = vector.broadcast %cst_48 : f32 to vector<24x32xf32>
    %197 = arith.subf %196, %189 : vector<24x32xf32>
    %198 = arith.mulf %197, %195 : vector<24x32xf32>
    %199 = arith.mulf %189, %163 : vector<24x32xf32>
    %200 = arith.addf %198, %199 : vector<24x32xf32>
    %cst_49 = arith.constant 4.000000e+00 : f32
    %201 = vector.broadcast %cst_49 : f32 to vector<24x1xf32>
    %202 = arith.cmpf ogt, %15, %201 : vector<24x1xf32>
    %203 = arith.extui %202 : vector<24x1xi1> to vector<24x1xi32>
    %204 = arith.sitofp %203 : vector<24x1xi32> to vector<24x1xf32>
    %205 = vector.broadcast %204 : vector<24x1xf32> to vector<24x32xf32>
    %206 = arith.mulf %205, %200 : vector<24x32xf32>
    %207 = arith.addf %170, %206 : vector<24x32xf32>
    %c120 = arith.constant 120 : index
    %c0_50 = arith.constant 0 : index
    %208 = vector.load %arg9[%c120, %c0_50] : memref<192x96xf32, #tpu.memory_space<vmem>>, vector<24x96xf32>
    %209 = arith.truncf %200 : vector<24x32xf32> to vector<24x32xbf16>
    %cst_51 = arith.constant dense<0.000000e+00> : vector<24x96xf32>
    %210 = tpu.matmul %209, %20, %cst_51 {dimension_numbers = #tpu.dot_dimension_numbers<[1], [0], [0], [1], [0, 0, 1, 1], [], []>} : vector<24x32xbf16>, vector<32x96xbf16>, vector<24x96xf32> -> vector<24x96xf32>
    %211 = vector.extract_strided_slice %208 {offsets = [0, 0], sizes = [24, 32], strides = [1, 1]} : vector<24x96xf32> to vector<24x32xf32>
    %212 = vector.extract_strided_slice %210 {offsets = [0, 0], sizes = [24, 32], strides = [1, 1]} : vector<24x96xf32> to vector<24x32xf32>
    %213 = arith.addf %211, %212 : vector<24x32xf32>
    %214 = arith.negf %213 : vector<24x32xf32>
    %215 = math.exp %214 : vector<24x32xf32>
    %cst_52 = arith.constant 1.000000e+00 : f32
    %216 = vector.broadcast %cst_52 : f32 to vector<24x32xf32>
    %217 = arith.addf %216, %215 : vector<24x32xf32>
    %218 = arith.divf %216, %217 : vector<24x32xf32>
    %219 = vector.extract_strided_slice %208 {offsets = [0, 32], sizes = [24, 32], strides = [1, 1]} : vector<24x96xf32> to vector<24x32xf32>
    %220 = vector.extract_strided_slice %210 {offsets = [0, 32], sizes = [24, 32], strides = [1, 1]} : vector<24x96xf32> to vector<24x32xf32>
    %221 = arith.addf %219, %220 : vector<24x32xf32>
    %222 = arith.negf %221 : vector<24x32xf32>
    %223 = math.exp %222 : vector<24x32xf32>
    %cst_53 = arith.constant 1.000000e+00 : f32
    %224 = vector.broadcast %cst_53 : f32 to vector<24x32xf32>
    %225 = arith.addf %224, %223 : vector<24x32xf32>
    %226 = arith.divf %224, %225 : vector<24x32xf32>
    %227 = vector.extract_strided_slice %208 {offsets = [0, 64], sizes = [24, 32], strides = [1, 1]} : vector<24x96xf32> to vector<24x32xf32>
    %228 = vector.extract_strided_slice %210 {offsets = [0, 64], sizes = [24, 32], strides = [1, 1]} : vector<24x96xf32> to vector<24x32xf32>
    %229 = arith.addf %228, %19 : vector<24x32xf32>
    %230 = arith.mulf %218, %229 : vector<24x32xf32>
    %231 = arith.addf %227, %230 : vector<24x32xf32>
    %232 = math.tanh %231 : vector<24x32xf32>
    %cst_54 = arith.constant 1.000000e+00 : f32
    %233 = vector.broadcast %cst_54 : f32 to vector<24x32xf32>
    %234 = arith.subf %233, %226 : vector<24x32xf32>
    %235 = arith.mulf %234, %232 : vector<24x32xf32>
    %236 = arith.mulf %226, %200 : vector<24x32xf32>
    %237 = arith.addf %235, %236 : vector<24x32xf32>
    %cst_55 = arith.constant 5.000000e+00 : f32
    %238 = vector.broadcast %cst_55 : f32 to vector<24x1xf32>
    %239 = arith.cmpf ogt, %15, %238 : vector<24x1xf32>
    %240 = arith.extui %239 : vector<24x1xi1> to vector<24x1xi32>
    %241 = arith.sitofp %240 : vector<24x1xi32> to vector<24x1xf32>
    %242 = vector.broadcast %241 : vector<24x1xf32> to vector<24x32xf32>
    %243 = arith.mulf %242, %237 : vector<24x32xf32>
    %244 = arith.addf %207, %243 : vector<24x32xf32>
    %c144 = arith.constant 144 : index
    %c0_56 = arith.constant 0 : index
    %245 = vector.load %arg9[%c144, %c0_56] : memref<192x96xf32, #tpu.memory_space<vmem>>, vector<24x96xf32>
    %246 = arith.truncf %237 : vector<24x32xf32> to vector<24x32xbf16>
    %cst_57 = arith.constant dense<0.000000e+00> : vector<24x96xf32>
    %247 = tpu.matmul %246, %20, %cst_57 {dimension_numbers = #tpu.dot_dimension_numbers<[1], [0], [0], [1], [0, 0, 1, 1], [], []>} : vector<24x32xbf16>, vector<32x96xbf16>, vector<24x96xf32> -> vector<24x96xf32>
    %248 = vector.extract_strided_slice %245 {offsets = [0, 0], sizes = [24, 32], strides = [1, 1]} : vector<24x96xf32> to vector<24x32xf32>
    %249 = vector.extract_strided_slice %247 {offsets = [0, 0], sizes = [24, 32], strides = [1, 1]} : vector<24x96xf32> to vector<24x32xf32>
    %250 = arith.addf %248, %249 : vector<24x32xf32>
    %251 = arith.negf %250 : vector<24x32xf32>
    %252 = math.exp %251 : vector<24x32xf32>
    %cst_58 = arith.constant 1.000000e+00 : f32
    %253 = vector.broadcast %cst_58 : f32 to vector<24x32xf32>
    %254 = arith.addf %253, %252 : vector<24x32xf32>
    %255 = arith.divf %253, %254 : vector<24x32xf32>
    %256 = vector.extract_strided_slice %245 {offsets = [0, 32], sizes = [24, 32], strides = [1, 1]} : vector<24x96xf32> to vector<24x32xf32>
    %257 = vector.extract_strided_slice %247 {offsets = [0, 32], sizes = [24, 32], strides = [1, 1]} : vector<24x96xf32> to vector<24x32xf32>
    %258 = arith.addf %256, %257 : vector<24x32xf32>
    %259 = arith.negf %258 : vector<24x32xf32>
    %260 = math.exp %259 : vector<24x32xf32>
    %cst_59 = arith.constant 1.000000e+00 : f32
    %261 = vector.broadcast %cst_59 : f32 to vector<24x32xf32>
    %262 = arith.addf %261, %260 : vector<24x32xf32>
    %263 = arith.divf %261, %262 : vector<24x32xf32>
    %264 = vector.extract_strided_slice %245 {offsets = [0, 64], sizes = [24, 32], strides = [1, 1]} : vector<24x96xf32> to vector<24x32xf32>
    %265 = vector.extract_strided_slice %247 {offsets = [0, 64], sizes = [24, 32], strides = [1, 1]} : vector<24x96xf32> to vector<24x32xf32>
    %266 = arith.addf %265, %19 : vector<24x32xf32>
    %267 = arith.mulf %255, %266 : vector<24x32xf32>
    %268 = arith.addf %264, %267 : vector<24x32xf32>
    %269 = math.tanh %268 : vector<24x32xf32>
    %cst_60 = arith.constant 1.000000e+00 : f32
    %270 = vector.broadcast %cst_60 : f32 to vector<24x32xf32>
    %271 = arith.subf %270, %263 : vector<24x32xf32>
    %272 = arith.mulf %271, %269 : vector<24x32xf32>
    %273 = arith.mulf %263, %237 : vector<24x32xf32>
    %274 = arith.addf %272, %273 : vector<24x32xf32>
    %cst_61 = arith.constant 6.000000e+00 : f32
    %275 = vector.broadcast %cst_61 : f32 to vector<24x1xf32>
    %276 = arith.cmpf ogt, %15, %275 : vector<24x1xf32>
    %277 = arith.extui %276 : vector<24x1xi1> to vector<24x1xi32>
    %278 = arith.sitofp %277 : vector<24x1xi32> to vector<24x1xf32>
    %279 = vector.broadcast %278 : vector<24x1xf32> to vector<24x32xf32>
    %280 = arith.mulf %279, %274 : vector<24x32xf32>
    %281 = arith.addf %244, %280 : vector<24x32xf32>
    %c168 = arith.constant 168 : index
    %c0_62 = arith.constant 0 : index
    %282 = vector.load %arg9[%c168, %c0_62] : memref<192x96xf32, #tpu.memory_space<vmem>>, vector<24x96xf32>
    %283 = arith.truncf %274 : vector<24x32xf32> to vector<24x32xbf16>
    %cst_63 = arith.constant dense<0.000000e+00> : vector<24x96xf32>
    %284 = tpu.matmul %283, %20, %cst_63 {dimension_numbers = #tpu.dot_dimension_numbers<[1], [0], [0], [1], [0, 0, 1, 1], [], []>} : vector<24x32xbf16>, vector<32x96xbf16>, vector<24x96xf32> -> vector<24x96xf32>
    %285 = vector.extract_strided_slice %282 {offsets = [0, 0], sizes = [24, 32], strides = [1, 1]} : vector<24x96xf32> to vector<24x32xf32>
    %286 = vector.extract_strided_slice %284 {offsets = [0, 0], sizes = [24, 32], strides = [1, 1]} : vector<24x96xf32> to vector<24x32xf32>
    %287 = arith.addf %285, %286 : vector<24x32xf32>
    %288 = arith.negf %287 : vector<24x32xf32>
    %289 = math.exp %288 : vector<24x32xf32>
    %cst_64 = arith.constant 1.000000e+00 : f32
    %290 = vector.broadcast %cst_64 : f32 to vector<24x32xf32>
    %291 = arith.addf %290, %289 : vector<24x32xf32>
    %292 = arith.divf %290, %291 : vector<24x32xf32>
    %293 = vector.extract_strided_slice %282 {offsets = [0, 32], sizes = [24, 32], strides = [1, 1]} : vector<24x96xf32> to vector<24x32xf32>
    %294 = vector.extract_strided_slice %284 {offsets = [0, 32], sizes = [24, 32], strides = [1, 1]} : vector<24x96xf32> to vector<24x32xf32>
    %295 = arith.addf %293, %294 : vector<24x32xf32>
    %296 = arith.negf %295 : vector<24x32xf32>
    %297 = math.exp %296 : vector<24x32xf32>
    %cst_65 = arith.constant 1.000000e+00 : f32
    %298 = vector.broadcast %cst_65 : f32 to vector<24x32xf32>
    %299 = arith.addf %298, %297 : vector<24x32xf32>
    %300 = arith.divf %298, %299 : vector<24x32xf32>
    %301 = vector.extract_strided_slice %282 {offsets = [0, 64], sizes = [24, 32], strides = [1, 1]} : vector<24x96xf32> to vector<24x32xf32>
    %302 = vector.extract_strided_slice %284 {offsets = [0, 64], sizes = [24, 32], strides = [1, 1]} : vector<24x96xf32> to vector<24x32xf32>
    %303 = arith.addf %302, %19 : vector<24x32xf32>
    %304 = arith.mulf %292, %303 : vector<24x32xf32>
    %305 = arith.addf %301, %304 : vector<24x32xf32>
    %306 = math.tanh %305 : vector<24x32xf32>
    %cst_66 = arith.constant 1.000000e+00 : f32
    %307 = vector.broadcast %cst_66 : f32 to vector<24x32xf32>
    %308 = arith.subf %307, %300 : vector<24x32xf32>
    %309 = arith.mulf %308, %306 : vector<24x32xf32>
    %310 = arith.mulf %300, %274 : vector<24x32xf32>
    %311 = arith.addf %309, %310 : vector<24x32xf32>
    %cst_67 = arith.constant 7.000000e+00 : f32
    %312 = vector.broadcast %cst_67 : f32 to vector<24x1xf32>
    %313 = arith.cmpf ogt, %15, %312 : vector<24x1xf32>
    %314 = arith.extui %313 : vector<24x1xi1> to vector<24x1xi32>
    %315 = arith.sitofp %314 : vector<24x1xi32> to vector<24x1xf32>
    %316 = vector.broadcast %315 : vector<24x1xf32> to vector<24x32xf32>
    %317 = arith.mulf %316, %311 : vector<24x32xf32>
    %318 = arith.addf %281, %317 : vector<24x32xf32>
    %319 = vector.broadcast %15 : vector<24x1xf32> to vector<24x32xf32>
    %320 = arith.divf %318, %319 : vector<24x32xf32>
    %c0_68 = arith.constant 0 : index
    %c0_69 = arith.constant 0 : index
    %321 = vector.load %arg8[%c0_68, %c0_69] : memref<24x32xf32, #tpu.memory_space<vmem>>, vector<24x32xf32>
    tpu.vector_store %arg8[%c0_68, %c0_69], %320 {strides = array<i32>} : memref<24x32xf32, #tpu.memory_space<vmem>>, vector<24x32xf32>,
    return
  }
  func.func @transform_0(%arg0: i32) -> (i32, i32) {
    %c0_i32 = arith.constant 0 : i32
    %c0_i32_0 = arith.constant 0 : i32
    return %arg0, %c0_i32 : i32, i32
  }
  func.func @transform_1(%arg0: i32) -> (i32, i32) {
    %c0_i32 = arith.constant 0 : i32
    %c0_i32_0 = arith.constant 0 : i32
    return %arg0, %c0_i32 : i32, i32
  }
  func.func @transform_2(%arg0: i32) -> (i32, i32) {
    %c0_i32 = arith.constant 0 : i32
    %c0_i32_0 = arith.constant 0 : i32
    %c0_i32_1 = arith.constant 0 : i32
    return %c0_i32, %c0_i32_0 : i32, i32
  }
  func.func @transform_3(%arg0: i32) -> (i32, i32) {
    %c0_i32 = arith.constant 0 : i32
    %c0_i32_0 = arith.constant 0 : i32
    %c0_i32_1 = arith.constant 0 : i32
    return %c0_i32, %c0_i32_0 : i32, i32
  }
  func.func @transform_4(%arg0: i32) -> (i32, i32) {
    %c0_i32 = arith.constant 0 : i32
    %c0_i32_0 = arith.constant 0 : i32
    %c0_i32_1 = arith.constant 0 : i32
    return %c0_i32, %c0_i32_0 : i32, i32
  }
  func.func @transform_5(%arg0: i32) -> (i32, i32) {
    %c0_i32 = arith.constant 0 : i32
    %c0_i32_0 = arith.constant 0 : i32
    %c0_i32_1 = arith.constant 0 : i32
    return %c0_i32, %c0_i32_0 : i32, i32
  }
  func.func @transform_6(%arg0: i32) -> (i32, i32) {
    %c0_i32 = arith.constant 0 : i32
    %c0_i32_0 = arith.constant 0 : i32
    %c0_i32_1 = arith.constant 0 : i32
    return %c0_i32, %c0_i32_0 : i32, i32
  }
  func.func @transform_7(%arg0: i32) -> (i32, i32) {
    %c0_i32 = arith.constant 0 : i32
    %c0_i32_0 = arith.constant 0 : i32
    return %arg0, %c0_i32 : i32, i32
  }
}

module attributes {stable_mosaic.version = 11 : i64} {
  func.func @_dir_semi_kernel(%arg0: memref<8x32xf32, #tpu.memory_space<vmem>>, %arg1: memref<16x32xf32, #tpu.memory_space<vmem>>, %arg2: memref<8x32xf32, #tpu.memory_space<vmem>>, %arg3: memref<128x64xbf16, #tpu.memory_space<vmem>>, %arg4: memref<1x64xf32, #tpu.memory_space<vmem>>, %arg5: memref<1x64xf32, #tpu.memory_space<vmem>>, %arg6: memref<1x64xf32, #tpu.memory_space<vmem>>, %arg7: memref<64x32xbf16, #tpu.memory_space<vmem>>, %arg8: memref<1x32xf32, #tpu.memory_space<vmem>>, %arg9: memref<1x32xf32, #tpu.memory_space<vmem>>, %arg10: memref<1x32xf32, #tpu.memory_space<vmem>>, %arg11: memref<32x32xbf16, #tpu.memory_space<vmem>>, %arg12: memref<1x32xf32, #tpu.memory_space<vmem>>, %arg13: memref<32x1xbf16, #tpu.memory_space<vmem>>, %arg14: memref<1x1xf32, #tpu.memory_space<vmem>>, %arg15: memref<16x1xf32, #tpu.memory_space<vmem>>, %arg16: memref<1x2xf32, #tpu.memory_space<vmem>>) attributes {dimension_semantics = [], scalar_prefetch = 0 : i64, scratch_operands = 0 : i64, tpu.core_type = #tpu.core_type<tc>} {
    %c0 = arith.constant 0 : index
    %c0_0 = arith.constant 0 : index
    %0 = vector.load %arg1[%c0, %c0_0] : memref<16x32xf32, #tpu.memory_space<vmem>>, vector<16x32xf32>
    %c0_1 = arith.constant 0 : index
    %c0_2 = arith.constant 0 : index
    %1 = vector.load %arg0[%c0_1, %c0_2] : memref<8x32xf32, #tpu.memory_space<vmem>>, vector<8x32xf32>
    %c0_3 = arith.constant 0 : index
    %c0_4 = arith.constant 0 : index
    %2 = vector.load %arg0[%c0_3, %c0_4] : memref<8x32xf32, #tpu.memory_space<vmem>>, vector<8x32xf32>
    %3 = tpu.concatenate %1, %2 in 0 : vector<8x32xf32>, vector<8x32xf32> -> vector<16x32xf32>
    %4 = arith.subf %3, %0 : vector<16x32xf32>
    %5 = arith.mulf %4, %4 : vector<16x32xf32>
    %cst = arith.constant dense<0.000000e+00> : vector<16xf32>
    %6 = vector.multi_reduction <add>, %5, %cst [1] : vector<16x32xf32> to vector<16xf32>
    %7 = vector.shape_cast %6 : vector<16xf32> to vector<16x1xf32>
    %c0_5 = arith.constant 0 : index
    %c0_6 = arith.constant 0 : index
    %8 = vector.load %arg15[%c0_5, %c0_6] : memref<16x1xf32, #tpu.memory_space<vmem>>, vector<16x1xf32>
    tpu.vector_store %arg15[%c0_5, %c0_6], %7 {strides = array<i32>} : memref<16x1xf32, #tpu.memory_space<vmem>>, vector<16x1xf32>,
    %c0_7 = arith.constant 0 : index
    %c0_8 = arith.constant 0 : index
    %9 = vector.load %arg2[%c0_7, %c0_8] : memref<8x32xf32, #tpu.memory_space<vmem>>, vector<8x32xf32>
    %c0_9 = arith.constant 0 : index
    %c0_10 = arith.constant 0 : index
    %10 = vector.load %arg2[%c0_9, %c0_10] : memref<8x32xf32, #tpu.memory_space<vmem>>, vector<8x32xf32>
    %11 = tpu.concatenate %9, %10 in 0 : vector<8x32xf32>, vector<8x32xf32> -> vector<16x32xf32>
    %c0_11 = arith.constant 0 : index
    %c0_12 = arith.constant 0 : index
    %12 = vector.load %arg3[%c0_11, %c0_12] : memref<128x64xbf16, #tpu.memory_space<vmem>>, vector<128x64xbf16>
    %c0_13 = arith.constant 0 : index
    %c0_14 = arith.constant 0 : index
    %13 = vector.load %arg4[%c0_13, %c0_14] : memref<1x64xf32, #tpu.memory_space<vmem>>, vector<1x64xf32>
    %c0_15 = arith.constant 0 : index
    %c0_16 = arith.constant 0 : index
    %14 = vector.load %arg5[%c0_15, %c0_16] : memref<1x64xf32, #tpu.memory_space<vmem>>, vector<1x64xf32>
    %c0_17 = arith.constant 0 : index
    %c0_18 = arith.constant 0 : index
    %15 = vector.load %arg6[%c0_17, %c0_18] : memref<1x64xf32, #tpu.memory_space<vmem>>, vector<1x64xf32>
    %c0_19 = arith.constant 0 : index
    %c0_20 = arith.constant 0 : index
    %16 = vector.load %arg7[%c0_19, %c0_20] : memref<64x32xbf16, #tpu.memory_space<vmem>>, vector<64x32xbf16>
    %c0_21 = arith.constant 0 : index
    %c0_22 = arith.constant 0 : index
    %17 = vector.load %arg8[%c0_21, %c0_22] : memref<1x32xf32, #tpu.memory_space<vmem>>, vector<1x32xf32>
    %c0_23 = arith.constant 0 : index
    %c0_24 = arith.constant 0 : index
    %18 = vector.load %arg9[%c0_23, %c0_24] : memref<1x32xf32, #tpu.memory_space<vmem>>, vector<1x32xf32>
    %c0_25 = arith.constant 0 : index
    %c0_26 = arith.constant 0 : index
    %19 = vector.load %arg10[%c0_25, %c0_26] : memref<1x32xf32, #tpu.memory_space<vmem>>, vector<1x32xf32>
    %20 = arith.mulf %0, %11 : vector<16x32xf32>
    %21 = arith.subf %0, %11 : vector<16x32xf32>
    %22 = tpu.concatenate %0, %11, %20, %21 in 1 : vector<16x32xf32>, vector<16x32xf32>, vector<16x32xf32>, vector<16x32xf32> -> vector<16x128xf32>
    %23 = arith.truncf %22 : vector<16x128xf32> to vector<16x128xbf16>
    %cst_27 = arith.constant dense<0.000000e+00> : vector<16x64xf32>
    %24 = tpu.matmul %23, %12, %cst_27 {dimension_numbers = #tpu.dot_dimension_numbers<[1], [0], [0], [1], [0, 0, 1, 1], [], []>} : vector<16x128xbf16>, vector<128x64xbf16>, vector<16x64xf32> -> vector<16x64xf32>
    %25 = vector.broadcast %13 : vector<1x64xf32> to vector<16x64xf32>
    %26 = arith.addf %24, %25 : vector<16x64xf32>
    %cst_28 = arith.constant dense<0.000000e+00> : vector<16xf32>
    %27 = vector.multi_reduction <add>, %26, %cst_28 [1] : vector<16x64xf32> to vector<16xf32>
    %28 = vector.shape_cast %27 : vector<16xf32> to vector<16x1xf32>
    %cst_29 = arith.constant 6.400000e+01 : f32
    %29 = vector.broadcast %cst_29 : f32 to vector<16x1xf32>
    %30 = arith.divf %28, %29 : vector<16x1xf32>
    %31 = vector.broadcast %30 : vector<16x1xf32> to vector<16x64xf32>
    %32 = arith.subf %26, %31 : vector<16x64xf32>
    %33 = arith.mulf %32, %32 : vector<16x64xf32>
    %cst_30 = arith.constant dense<0.000000e+00> : vector<16xf32>
    %34 = vector.multi_reduction <add>, %33, %cst_30 [1] : vector<16x64xf32> to vector<16xf32>
    %35 = vector.shape_cast %34 : vector<16xf32> to vector<16x1xf32>
    %cst_31 = arith.constant 6.400000e+01 : f32
    %36 = vector.broadcast %cst_31 : f32 to vector<16x1xf32>
    %37 = arith.divf %35, %36 : vector<16x1xf32>
    %38 = vector.broadcast %30 : vector<16x1xf32> to vector<16x64xf32>
    %39 = arith.subf %26, %38 : vector<16x64xf32>
    %cst_32 = arith.constant 9.99999974E-6 : f32
    %40 = vector.broadcast %cst_32 : f32 to vector<16x1xf32>
    %41 = arith.addf %37, %40 : vector<16x1xf32>
    %42 = math.rsqrt %41 : vector<16x1xf32>
    %43 = vector.broadcast %42 : vector<16x1xf32> to vector<16x64xf32>
    %44 = arith.mulf %39, %43 : vector<16x64xf32>
    %45 = vector.broadcast %14 : vector<1x64xf32> to vector<16x64xf32>
    %46 = arith.mulf %44, %45 : vector<16x64xf32>
    %47 = vector.broadcast %15 : vector<1x64xf32> to vector<16x64xf32>
    %48 = arith.addf %46, %47 : vector<16x64xf32>
    %cst_33 = arith.constant 0.000000e+00 : f32
    %49 = vector.broadcast %cst_33 : f32 to vector<16x64xf32>
    %50 = arith.maximumf %48, %49 : vector<16x64xf32>
    %51 = arith.truncf %50 : vector<16x64xf32> to vector<16x64xbf16>
    %cst_34 = arith.constant dense<0.000000e+00> : vector<16x32xf32>
    %52 = tpu.matmul %51, %16, %cst_34 {dimension_numbers = #tpu.dot_dimension_numbers<[1], [0], [0], [1], [0, 0, 1, 1], [], []>} : vector<16x64xbf16>, vector<64x32xbf16>, vector<16x32xf32> -> vector<16x32xf32>
    %53 = vector.broadcast %17 : vector<1x32xf32> to vector<16x32xf32>
    %54 = arith.addf %52, %53 : vector<16x32xf32>
    %cst_35 = arith.constant dense<0.000000e+00> : vector<16xf32>
    %55 = vector.multi_reduction <add>, %54, %cst_35 [1] : vector<16x32xf32> to vector<16xf32>
    %56 = vector.shape_cast %55 : vector<16xf32> to vector<16x1xf32>
    %cst_36 = arith.constant 3.200000e+01 : f32
    %57 = vector.broadcast %cst_36 : f32 to vector<16x1xf32>
    %58 = arith.divf %56, %57 : vector<16x1xf32>
    %59 = vector.broadcast %58 : vector<16x1xf32> to vector<16x32xf32>
    %60 = arith.subf %54, %59 : vector<16x32xf32>
    %61 = arith.mulf %60, %60 : vector<16x32xf32>
    %cst_37 = arith.constant dense<0.000000e+00> : vector<16xf32>
    %62 = vector.multi_reduction <add>, %61, %cst_37 [1] : vector<16x32xf32> to vector<16xf32>
    %63 = vector.shape_cast %62 : vector<16xf32> to vector<16x1xf32>
    %cst_38 = arith.constant 3.200000e+01 : f32
    %64 = vector.broadcast %cst_38 : f32 to vector<16x1xf32>
    %65 = arith.divf %63, %64 : vector<16x1xf32>
    %66 = vector.broadcast %58 : vector<16x1xf32> to vector<16x32xf32>
    %67 = arith.subf %54, %66 : vector<16x32xf32>
    %cst_39 = arith.constant 9.99999974E-6 : f32
    %68 = vector.broadcast %cst_39 : f32 to vector<16x1xf32>
    %69 = arith.addf %65, %68 : vector<16x1xf32>
    %70 = math.rsqrt %69 : vector<16x1xf32>
    %71 = vector.broadcast %70 : vector<16x1xf32> to vector<16x32xf32>
    %72 = arith.mulf %67, %71 : vector<16x32xf32>
    %73 = vector.broadcast %18 : vector<1x32xf32> to vector<16x32xf32>
    %74 = arith.mulf %72, %73 : vector<16x32xf32>
    %75 = vector.broadcast %19 : vector<1x32xf32> to vector<16x32xf32>
    %76 = arith.addf %74, %75 : vector<16x32xf32>
    %77 = arith.truncf %76 : vector<16x32xf32> to vector<16x32xbf16>
    %c0_40 = arith.constant 0 : index
    %c0_41 = arith.constant 0 : index
    %78 = vector.load %arg11[%c0_40, %c0_41] : memref<32x32xbf16, #tpu.memory_space<vmem>>, vector<32x32xbf16>
    %cst_42 = arith.constant dense<0.000000e+00> : vector<16x32xf32>
    %79 = tpu.matmul %77, %78, %cst_42 {dimension_numbers = #tpu.dot_dimension_numbers<[1], [0], [0], [1], [0, 0, 1, 1], [], []>} : vector<16x32xbf16>, vector<32x32xbf16>, vector<16x32xf32> -> vector<16x32xf32>
    %c0_43 = arith.constant 0 : index
    %c0_44 = arith.constant 0 : index
    %80 = vector.load %arg12[%c0_43, %c0_44] : memref<1x32xf32, #tpu.memory_space<vmem>>, vector<1x32xf32>
    %81 = vector.broadcast %80 : vector<1x32xf32> to vector<16x32xf32>
    %82 = arith.addf %79, %81 : vector<16x32xf32>
    %cst_45 = arith.constant 0.000000e+00 : f32
    %83 = vector.broadcast %cst_45 : f32 to vector<16x32xf32>
    %84 = arith.maximumf %82, %83 : vector<16x32xf32>
    %85 = arith.truncf %84 : vector<16x32xf32> to vector<16x32xbf16>
    %c0_46 = arith.constant 0 : index
    %c0_47 = arith.constant 0 : index
    %86 = vector.load %arg13[%c0_46, %c0_47] : memref<32x1xbf16, #tpu.memory_space<vmem>>, vector<32x1xbf16>
    %cst_48 = arith.constant dense<0.000000e+00> : vector<16x1xf32>
    %87 = tpu.matmul %85, %86, %cst_48 {dimension_numbers = #tpu.dot_dimension_numbers<[1], [0], [0], [1], [0, 0, 1, 1], [], []>} : vector<16x32xbf16>, vector<32x1xbf16>, vector<16x1xf32> -> vector<16x1xf32>
    %c0_49 = arith.constant 0 : index
    %c0_50 = arith.constant 0 : index
    %88 = vector.load %arg14[%c0_49, %c0_50] : memref<1x1xf32, #tpu.memory_space<vmem>>, vector<1x1xf32>
    %89 = vector.broadcast %88 : vector<1x1xf32> to vector<16x1xf32>
    %90 = arith.addf %87, %89 : vector<16x1xf32>
    %91 = tpu.iota {dimensions = array<i32: 0>} : vector<16x1xi32>
    %c8_i32 = arith.constant 8 : i32
    %92 = vector.broadcast %c8_i32 : i32 to vector<16x1xi32>
    %93 = arith.cmpi slt, %91, %92 : vector<16x1xi32>
    %cst_51 = arith.constant 1.000000e+00 : f32
    %cst_52 = arith.constant -1.000000e+00 : f32
    %94 = vector.broadcast %cst_51 : f32 to vector<16x1xf32>
    %95 = vector.broadcast %cst_52 : f32 to vector<16x1xf32>
    %96 = arith.select %93, %94, %95 : vector<16x1xi1>, vector<16x1xf32>
    %97 = arith.mulf %96, %90 : vector<16x1xf32>
    %cst_53 = arith.constant 0.000000e+00 : f32
    %98 = vector.broadcast %cst_53 : f32 to vector<16x1xf32>
    %99 = arith.minimumf %97, %98 : vector<16x1xf32>
    %100 = math.absf %97 : vector<16x1xf32>
    %cst_54 = arith.constant 0.000000e+00 : f32
    %101 = vector.broadcast %cst_54 : f32 to vector<16x1xf32>
    %102 = arith.subf %101, %100 : vector<16x1xf32>
    %103 = math.exp %102 : vector<16x1xf32>
    %cst_55 = arith.constant 1.000000e+00 : f32
    %104 = vector.broadcast %cst_55 : f32 to vector<16x1xf32>
    %105 = arith.addf %104, %103 : vector<16x1xf32>
    %106 = math.log %105 : vector<16x1xf32>
    %107 = arith.subf %99, %106 : vector<16x1xf32>
    %c8_i32_56 = arith.constant 8 : i32
    %108 = vector.broadcast %c8_i32_56 : i32 to vector<16x1xi32>
    %109 = arith.cmpi slt, %91, %108 : vector<16x1xi32>
    %cst_57 = arith.constant 0.000000e+00 : f32
    %110 = vector.broadcast %cst_57 : f32 to vector<16x1xf32>
    %111 = arith.select %109, %107, %110 : vector<16x1xi1>, vector<16x1xf32>
    %112 = vector.shape_cast %111 : vector<16x1xf32> to vector<1x16x1xf32>
    %cst_58 = arith.constant dense<0.000000e+00> : vector<1xf32>
    %113 = vector.multi_reduction <add>, %112, %cst_58 [1, 2] : vector<1x16x1xf32> to vector<1xf32>
    %114 = vector.shape_cast %113 : vector<1xf32> to vector<1x1x1xf32>
    %115 = vector.extract %114[0, 0, 0] : f32 from vector<1x1x1xf32>
    %116 = vector.broadcast %115 : f32 to vector<1x1xf32>
    %c8_i32_59 = arith.constant 8 : i32
    %117 = vector.broadcast %c8_i32_59 : i32 to vector<16x1xi32>
    %118 = arith.cmpi sge, %91, %117 : vector<16x1xi32>
    %cst_60 = arith.constant 0.000000e+00 : f32
    %119 = vector.broadcast %cst_60 : f32 to vector<16x1xf32>
    %120 = arith.select %118, %107, %119 : vector<16x1xi1>, vector<16x1xf32>
    %121 = vector.shape_cast %120 : vector<16x1xf32> to vector<1x16x1xf32>
    %cst_61 = arith.constant dense<0.000000e+00> : vector<1xf32>
    %122 = vector.multi_reduction <add>, %121, %cst_61 [1, 2] : vector<1x16x1xf32> to vector<1xf32>
    %123 = vector.shape_cast %122 : vector<1xf32> to vector<1x1x1xf32>
    %124 = vector.extract %123[0, 0, 0] : f32 from vector<1x1x1xf32>
    %125 = vector.broadcast %124 : f32 to vector<1x1xf32>
    %126 = tpu.concatenate %116, %125 in 1 : vector<1x1xf32>, vector<1x1xf32> -> vector<1x2xf32>
    %c0_62 = arith.constant 0 : index
    %c0_63 = arith.constant 0 : index
    %127 = vector.load %arg16[%c0_62, %c0_63] : memref<1x2xf32, #tpu.memory_space<vmem>>, vector<1x2xf32>
    tpu.vector_store %arg16[%c0_62, %c0_63], %126 {strides = array<i32>} : memref<1x2xf32, #tpu.memory_space<vmem>>, vector<1x2xf32>,
    return
  }
}

module attributes {stable_mosaic.version = 11 : i64} {
  func.func @_ctx_loss_kernel(%arg0: memref<32x32xf32, #tpu.memory_space<vmem>>, %arg1: memref<8x32xf32, #tpu.memory_space<vmem>>, %arg2: memref<8x32xf32, #tpu.memory_space<vmem>>, %arg3: memref<32x96xbf16, #tpu.memory_space<vmem>>, %arg4: memref<32x96xbf16, #tpu.memory_space<vmem>>, %arg5: memref<1x96xf32, #tpu.memory_space<vmem>>, %arg6: memref<1x32xf32, #tpu.memory_space<vmem>>, %arg7: memref<32x96xbf16, #tpu.memory_space<vmem>>, %arg8: memref<32x96xbf16, #tpu.memory_space<vmem>>, %arg9: memref<1x96xf32, #tpu.memory_space<vmem>>, %arg10: memref<1x32xf32, #tpu.memory_space<vmem>>, %arg11: memref<128x64xbf16, #tpu.memory_space<vmem>>, %arg12: memref<1x64xf32, #tpu.memory_space<vmem>>, %arg13: memref<1x64xf32, #tpu.memory_space<vmem>>, %arg14: memref<1x64xf32, #tpu.memory_space<vmem>>, %arg15: memref<64x32xbf16, #tpu.memory_space<vmem>>, %arg16: memref<1x32xf32, #tpu.memory_space<vmem>>, %arg17: memref<1x32xf32, #tpu.memory_space<vmem>>, %arg18: memref<1x32xf32, #tpu.memory_space<vmem>>, %arg19: memref<64x32xbf16, #tpu.memory_space<vmem>>, %arg20: memref<1x32xf32, #tpu.memory_space<vmem>>, %arg21: memref<1x2xf32, #tpu.memory_space<vmem>>, %arg22: memref<32x96xf32, #tpu.memory_space<vmem>>, %arg23: memref<32x96xf32, #tpu.memory_space<vmem>>) attributes {dimension_semantics = [], scalar_prefetch = 0 : i64, scratch_operands = 2 : i64, tpu.core_type = #tpu.core_type<tc>} {
    %c0 = arith.constant 0 : index
    %c0_0 = arith.constant 0 : index
    %0 = vector.load %arg1[%c0, %c0_0] : memref<8x32xf32, #tpu.memory_space<vmem>>, vector<8x32xf32>
    %c0_1 = arith.constant 0 : index
    %c0_2 = arith.constant 0 : index
    %1 = vector.load %arg2[%c0_1, %c0_2] : memref<8x32xf32, #tpu.memory_space<vmem>>, vector<8x32xf32>
    %c0_3 = arith.constant 0 : index
    %c0_4 = arith.constant 0 : index
    %2 = vector.load %arg11[%c0_3, %c0_4] : memref<128x64xbf16, #tpu.memory_space<vmem>>, vector<128x64xbf16>
    %c0_5 = arith.constant 0 : index
    %c0_6 = arith.constant 0 : index
    %3 = vector.load %arg12[%c0_5, %c0_6] : memref<1x64xf32, #tpu.memory_space<vmem>>, vector<1x64xf32>
    %c0_7 = arith.constant 0 : index
    %c0_8 = arith.constant 0 : index
    %4 = vector.load %arg13[%c0_7, %c0_8] : memref<1x64xf32, #tpu.memory_space<vmem>>, vector<1x64xf32>
    %c0_9 = arith.constant 0 : index
    %c0_10 = arith.constant 0 : index
    %5 = vector.load %arg14[%c0_9, %c0_10] : memref<1x64xf32, #tpu.memory_space<vmem>>, vector<1x64xf32>
    %c0_11 = arith.constant 0 : index
    %c0_12 = arith.constant 0 : index
    %6 = vector.load %arg15[%c0_11, %c0_12] : memref<64x32xbf16, #tpu.memory_space<vmem>>, vector<64x32xbf16>
    %c0_13 = arith.constant 0 : index
    %c0_14 = arith.constant 0 : index
    %7 = vector.load %arg16[%c0_13, %c0_14] : memref<1x32xf32, #tpu.memory_space<vmem>>, vector<1x32xf32>
    %c0_15 = arith.constant 0 : index
    %c0_16 = arith.constant 0 : index
    %8 = vector.load %arg17[%c0_15, %c0_16] : memref<1x32xf32, #tpu.memory_space<vmem>>, vector<1x32xf32>
    %c0_17 = arith.constant 0 : index
    %c0_18 = arith.constant 0 : index
    %9 = vector.load %arg18[%c0_17, %c0_18] : memref<1x32xf32, #tpu.memory_space<vmem>>, vector<1x32xf32>
    %10 = arith.mulf %0, %1 : vector<8x32xf32>
    %11 = arith.subf %0, %1 : vector<8x32xf32>
    %12 = tpu.concatenate %0, %1, %10, %11 in 1 : vector<8x32xf32>, vector<8x32xf32>, vector<8x32xf32>, vector<8x32xf32> -> vector<8x128xf32>
    %13 = arith.truncf %12 : vector<8x128xf32> to vector<8x128xbf16>
    %cst = arith.constant dense<0.000000e+00> : vector<8x64xf32>
    %14 = tpu.matmul %13, %2, %cst {dimension_numbers = #tpu.dot_dimension_numbers<[1], [0], [0], [1], [0, 0, 1, 1], [], []>} : vector<8x128xbf16>, vector<128x64xbf16>, vector<8x64xf32> -> vector<8x64xf32>
    %15 = vector.broadcast %3 : vector<1x64xf32> to vector<8x64xf32>
    %16 = arith.addf %14, %15 : vector<8x64xf32>
    %cst_19 = arith.constant dense<0.000000e+00> : vector<8xf32>
    %17 = vector.multi_reduction <add>, %16, %cst_19 [1] : vector<8x64xf32> to vector<8xf32>
    %18 = vector.shape_cast %17 : vector<8xf32> to vector<8x1xf32>
    %cst_20 = arith.constant 6.400000e+01 : f32
    %19 = vector.broadcast %cst_20 : f32 to vector<8x1xf32>
    %20 = arith.divf %18, %19 : vector<8x1xf32>
    %21 = vector.broadcast %20 : vector<8x1xf32> to vector<8x64xf32>
    %22 = arith.subf %16, %21 : vector<8x64xf32>
    %23 = arith.mulf %22, %22 : vector<8x64xf32>
    %cst_21 = arith.constant dense<0.000000e+00> : vector<8xf32>
    %24 = vector.multi_reduction <add>, %23, %cst_21 [1] : vector<8x64xf32> to vector<8xf32>
    %25 = vector.shape_cast %24 : vector<8xf32> to vector<8x1xf32>
    %cst_22 = arith.constant 6.400000e+01 : f32
    %26 = vector.broadcast %cst_22 : f32 to vector<8x1xf32>
    %27 = arith.divf %25, %26 : vector<8x1xf32>
    %28 = vector.broadcast %20 : vector<8x1xf32> to vector<8x64xf32>
    %29 = arith.subf %16, %28 : vector<8x64xf32>
    %cst_23 = arith.constant 9.99999974E-6 : f32
    %30 = vector.broadcast %cst_23 : f32 to vector<8x1xf32>
    %31 = arith.addf %27, %30 : vector<8x1xf32>
    %32 = math.rsqrt %31 : vector<8x1xf32>
    %33 = vector.broadcast %32 : vector<8x1xf32> to vector<8x64xf32>
    %34 = arith.mulf %29, %33 : vector<8x64xf32>
    %35 = vector.broadcast %4 : vector<1x64xf32> to vector<8x64xf32>
    %36 = arith.mulf %34, %35 : vector<8x64xf32>
    %37 = vector.broadcast %5 : vector<1x64xf32> to vector<8x64xf32>
    %38 = arith.addf %36, %37 : vector<8x64xf32>
    %cst_24 = arith.constant 0.000000e+00 : f32
    %39 = vector.broadcast %cst_24 : f32 to vector<8x64xf32>
    %40 = arith.maximumf %38, %39 : vector<8x64xf32>
    %41 = arith.truncf %40 : vector<8x64xf32> to vector<8x64xbf16>
    %cst_25 = arith.constant dense<0.000000e+00> : vector<8x32xf32>
    %42 = tpu.matmul %41, %6, %cst_25 {dimension_numbers = #tpu.dot_dimension_numbers<[1], [0], [0], [1], [0, 0, 1, 1], [], []>} : vector<8x64xbf16>, vector<64x32xbf16>, vector<8x32xf32> -> vector<8x32xf32>
    %43 = vector.broadcast %7 : vector<1x32xf32> to vector<8x32xf32>
    %44 = arith.addf %42, %43 : vector<8x32xf32>
    %cst_26 = arith.constant dense<0.000000e+00> : vector<8xf32>
    %45 = vector.multi_reduction <add>, %44, %cst_26 [1] : vector<8x32xf32> to vector<8xf32>
    %46 = vector.shape_cast %45 : vector<8xf32> to vector<8x1xf32>
    %cst_27 = arith.constant 3.200000e+01 : f32
    %47 = vector.broadcast %cst_27 : f32 to vector<8x1xf32>
    %48 = arith.divf %46, %47 : vector<8x1xf32>
    %49 = vector.broadcast %48 : vector<8x1xf32> to vector<8x32xf32>
    %50 = arith.subf %44, %49 : vector<8x32xf32>
    %51 = arith.mulf %50, %50 : vector<8x32xf32>
    %cst_28 = arith.constant dense<0.000000e+00> : vector<8xf32>
    %52 = vector.multi_reduction <add>, %51, %cst_28 [1] : vector<8x32xf32> to vector<8xf32>
    %53 = vector.shape_cast %52 : vector<8xf32> to vector<8x1xf32>
    %cst_29 = arith.constant 3.200000e+01 : f32
    %54 = vector.broadcast %cst_29 : f32 to vector<8x1xf32>
    %55 = arith.divf %53, %54 : vector<8x1xf32>
    %56 = vector.broadcast %48 : vector<8x1xf32> to vector<8x32xf32>
    %57 = arith.subf %44, %56 : vector<8x32xf32>
    %cst_30 = arith.constant 9.99999974E-6 : f32
    %58 = vector.broadcast %cst_30 : f32 to vector<8x1xf32>
    %59 = arith.addf %55, %58 : vector<8x1xf32>
    %60 = math.rsqrt %59 : vector<8x1xf32>
    %61 = vector.broadcast %60 : vector<8x1xf32> to vector<8x32xf32>
    %62 = arith.mulf %57, %61 : vector<8x32xf32>
    %63 = vector.broadcast %8 : vector<1x32xf32> to vector<8x32xf32>
    %64 = arith.mulf %62, %63 : vector<8x32xf32>
    %65 = vector.broadcast %9 : vector<1x32xf32> to vector<8x32xf32>
    %66 = arith.addf %64, %65 : vector<8x32xf32>
    %c0_31 = arith.constant 0 : index
    %c0_32 = arith.constant 0 : index
    %67 = vector.load %arg0[%c0_31, %c0_32] : memref<32x32xf32, #tpu.memory_space<vmem>>, vector<32x32xf32>
    %68 = arith.truncf %67 : vector<32x32xf32> to vector<32x32xbf16>
    %c0_33 = arith.constant 0 : index
    %c0_34 = arith.constant 0 : index
    %69 = vector.load %arg3[%c0_33, %c0_34] : memref<32x96xbf16, #tpu.memory_space<vmem>>, vector<32x96xbf16>
    %cst_35 = arith.constant dense<0.000000e+00> : vector<32x96xf32>
    %70 = tpu.matmul %68, %69, %cst_35 {dimension_numbers = #tpu.dot_dimension_numbers<[1], [0], [0], [1], [0, 0, 1, 1], [], []>} : vector<32x32xbf16>, vector<32x96xbf16>, vector<32x96xf32> -> vector<32x96xf32>
    %c0_36 = arith.constant 0 : index
    %c0_37 = arith.constant 0 : index
    %71 = vector.load %arg5[%c0_36, %c0_37] : memref<1x96xf32, #tpu.memory_space<vmem>>, vector<1x96xf32>
    %72 = vector.broadcast %71 : vector<1x96xf32> to vector<32x96xf32>
    %73 = arith.addf %70, %72 : vector<32x96xf32>
    %c0_38 = arith.constant 0 : index
    %c0_39 = arith.constant 0 : index
    %74 = vector.load %arg22[%c0_38, %c0_39] : memref<32x96xf32, #tpu.memory_space<vmem>>, vector<32x96xf32>
    tpu.vector_store %arg22[%c0_38, %c0_39], %73 {strides = array<i32>} : memref<32x96xf32, #tpu.memory_space<vmem>>, vector<32x96xf32>,
    %c0_40 = arith.constant 0 : index
    %c0_41 = arith.constant 0 : index
    %75 = vector.load %arg7[%c0_40, %c0_41] : memref<32x96xbf16, #tpu.memory_space<vmem>>, vector<32x96xbf16>
    %cst_42 = arith.constant dense<0.000000e+00> : vector<32x96xf32>
    %76 = tpu.matmul %68, %75, %cst_42 {dimension_numbers = #tpu.dot_dimension_numbers<[1], [0], [0], [1], [0, 0, 1, 1], [], []>} : vector<32x32xbf16>, vector<32x96xbf16>, vector<32x96xf32> -> vector<32x96xf32>
    %c0_43 = arith.constant 0 : index
    %c0_44 = arith.constant 0 : index
    %77 = vector.load %arg9[%c0_43, %c0_44] : memref<1x96xf32, #tpu.memory_space<vmem>>, vector<1x96xf32>
    %78 = vector.broadcast %77 : vector<1x96xf32> to vector<32x96xf32>
    %79 = arith.addf %76, %78 : vector<32x96xf32>
    %c0_45 = arith.constant 0 : index
    %c0_46 = arith.constant 0 : index
    %80 = vector.load %arg23[%c0_45, %c0_46] : memref<32x96xf32, #tpu.memory_space<vmem>>, vector<32x96xf32>
    tpu.vector_store %arg23[%c0_45, %c0_46], %79 {strides = array<i32>} : memref<32x96xf32, #tpu.memory_space<vmem>>, vector<32x96xf32>,
    %c0_47 = arith.constant 0 : index
    %c0_48 = arith.constant 0 : index
    %81 = vector.load %arg6[%c0_47, %c0_48] : memref<1x32xf32, #tpu.memory_space<vmem>>, vector<1x32xf32>
    %cst_49 = arith.constant 0.000000e+00 : f32
    %82 = vector.broadcast %cst_49 : f32 to vector<8x32xf32>
    %83 = vector.broadcast %81 : vector<1x32xf32> to vector<8x32xf32>
    %84 = arith.addf %83, %82 : vector<8x32xf32>
    %c0_50 = arith.constant 0 : index
    %c0_51 = arith.constant 0 : index
    %85 = vector.load %arg10[%c0_50, %c0_51] : memref<1x32xf32, #tpu.memory_space<vmem>>, vector<1x32xf32>
    %cst_52 = arith.constant 0.000000e+00 : f32
    %86 = vector.broadcast %cst_52 : f32 to vector<8x32xf32>
    %87 = vector.broadcast %85 : vector<1x32xf32> to vector<8x32xf32>
    %88 = arith.addf %87, %86 : vector<8x32xf32>
    %c0_53 = arith.constant 0 : index
    %c0_54 = arith.constant 0 : index
    %89 = vector.load %arg4[%c0_53, %c0_54] : memref<32x96xbf16, #tpu.memory_space<vmem>>, vector<32x96xbf16>
    %c0_55 = arith.constant 0 : index
    %c0_56 = arith.constant 0 : index
    %90 = vector.load %arg8[%c0_55, %c0_56] : memref<32x96xbf16, #tpu.memory_space<vmem>>, vector<32x96xbf16>
    %cst_57 = arith.constant 0.000000e+00 : f32
    %91 = vector.broadcast %cst_57 : f32 to vector<8x32xf32>
    %cst_58 = arith.constant 0.000000e+00 : f32
    %92 = vector.broadcast %cst_58 : f32 to vector<8x32xf32>
    %cst_59 = arith.constant 0.000000e+00 : f32
    %93 = vector.broadcast %cst_59 : f32 to vector<8x32xf32>
    %cst_60 = arith.constant 0.000000e+00 : f32
    %94 = vector.broadcast %cst_60 : f32 to vector<8x32xf32>
    %c0_61 = arith.constant 0 : index
    %c0_62 = arith.constant 0 : index
    %95 = vector.load %arg22[%c0_61, %c0_62] : memref<32x96xf32, #tpu.memory_space<vmem>>, vector<8x96xf32>
    %96 = arith.truncf %91 : vector<8x32xf32> to vector<8x32xbf16>
    %cst_63 = arith.constant dense<0.000000e+00> : vector<8x96xf32>
    %97 = tpu.matmul %96, %89, %cst_63 {dimension_numbers = #tpu.dot_dimension_numbers<[1], [0], [0], [1], [0, 0, 1, 1], [], []>} : vector<8x32xbf16>, vector<32x96xbf16>, vector<8x96xf32> -> vector<8x96xf32>
    %98 = vector.extract_strided_slice %95 {offsets = [0, 0], sizes = [8, 32], strides = [1, 1]} : vector<8x96xf32> to vector<8x32xf32>
    %99 = vector.extract_strided_slice %97 {offsets = [0, 0], sizes = [8, 32], strides = [1, 1]} : vector<8x96xf32> to vector<8x32xf32>
    %100 = arith.addf %98, %99 : vector<8x32xf32>
    %101 = arith.negf %100 : vector<8x32xf32>
    %102 = math.exp %101 : vector<8x32xf32>
    %cst_64 = arith.constant 1.000000e+00 : f32
    %103 = vector.broadcast %cst_64 : f32 to vector<8x32xf32>
    %104 = arith.addf %103, %102 : vector<8x32xf32>
    %105 = arith.divf %103, %104 : vector<8x32xf32>
    %106 = vector.extract_strided_slice %95 {offsets = [0, 32], sizes = [8, 32], strides = [1, 1]} : vector<8x96xf32> to vector<8x32xf32>
    %107 = vector.extract_strided_slice %97 {offsets = [0, 32], sizes = [8, 32], strides = [1, 1]} : vector<8x96xf32> to vector<8x32xf32>
    %108 = arith.addf %106, %107 : vector<8x32xf32>
    %109 = arith.negf %108 : vector<8x32xf32>
    %110 = math.exp %109 : vector<8x32xf32>
    %cst_65 = arith.constant 1.000000e+00 : f32
    %111 = vector.broadcast %cst_65 : f32 to vector<8x32xf32>
    %112 = arith.addf %111, %110 : vector<8x32xf32>
    %113 = arith.divf %111, %112 : vector<8x32xf32>
    %114 = vector.extract_strided_slice %95 {offsets = [0, 64], sizes = [8, 32], strides = [1, 1]} : vector<8x96xf32> to vector<8x32xf32>
    %115 = vector.extract_strided_slice %97 {offsets = [0, 64], sizes = [8, 32], strides = [1, 1]} : vector<8x96xf32> to vector<8x32xf32>
    %116 = arith.addf %115, %84 : vector<8x32xf32>
    %117 = arith.mulf %105, %116 : vector<8x32xf32>
    %118 = arith.addf %114, %117 : vector<8x32xf32>
    %119 = math.tanh %118 : vector<8x32xf32>
    %cst_66 = arith.constant 1.000000e+00 : f32
    %120 = vector.broadcast %cst_66 : f32 to vector<8x32xf32>
    %121 = arith.subf %120, %113 : vector<8x32xf32>
    %122 = arith.mulf %121, %119 : vector<8x32xf32>
    %123 = arith.mulf %113, %91 : vector<8x32xf32>
    %124 = arith.addf %122, %123 : vector<8x32xf32>
    %c24 = arith.constant 24 : index
    %c0_67 = arith.constant 0 : index
    %125 = vector.load %arg23[%c24, %c0_67] : memref<32x96xf32, #tpu.memory_space<vmem>>, vector<8x96xf32>
    %126 = arith.truncf %92 : vector<8x32xf32> to vector<8x32xbf16>
    %cst_68 = arith.constant dense<0.000000e+00> : vector<8x96xf32>
    %127 = tpu.matmul %126, %90, %cst_68 {dimension_numbers = #tpu.dot_dimension_numbers<[1], [0], [0], [1], [0, 0, 1, 1], [], []>} : vector<8x32xbf16>, vector<32x96xbf16>, vector<8x96xf32> -> vector<8x96xf32>
    %128 = vector.extract_strided_slice %125 {offsets = [0, 0], sizes = [8, 32], strides = [1, 1]} : vector<8x96xf32> to vector<8x32xf32>
    %129 = vector.extract_strided_slice %127 {offsets = [0, 0], sizes = [8, 32], strides = [1, 1]} : vector<8x96xf32> to vector<8x32xf32>
    %130 = arith.addf %128, %129 : vector<8x32xf32>
    %131 = arith.negf %130 : vector<8x32xf32>
    %132 = math.exp %131 : vector<8x32xf32>
    %cst_69 = arith.constant 1.000000e+00 : f32
    %133 = vector.broadcast %cst_69 : f32 to vector<8x32xf32>
    %134 = arith.addf %133, %132 : vector<8x32xf32>
    %135 = arith.divf %133, %134 : vector<8x32xf32>
    %136 = vector.extract_strided_slice %125 {offsets = [0, 32], sizes = [8, 32], strides = [1, 1]} : vector<8x96xf32> to vector<8x32xf32>
    %137 = vector.extract_strided_slice %127 {offsets = [0, 32], sizes = [8, 32], strides = [1, 1]} : vector<8x96xf32> to vector<8x32xf32>
    %138 = arith.addf %136, %137 : vector<8x32xf32>
    %139 = arith.negf %138 : vector<8x32xf32>
    %140 = math.exp %139 : vector<8x32xf32>
    %cst_70 = arith.constant 1.000000e+00 : f32
    %141 = vector.broadcast %cst_70 : f32 to vector<8x32xf32>
    %142 = arith.addf %141, %140 : vector<8x32xf32>
    %143 = arith.divf %141, %142 : vector<8x32xf32>
    %144 = vector.extract_strided_slice %125 {offsets = [0, 64], sizes = [8, 32], strides = [1, 1]} : vector<8x96xf32> to vector<8x32xf32>
    %145 = vector.extract_strided_slice %127 {offsets = [0, 64], sizes = [8, 32], strides = [1, 1]} : vector<8x96xf32> to vector<8x32xf32>
    %146 = arith.addf %145, %88 : vector<8x32xf32>
    %147 = arith.mulf %135, %146 : vector<8x32xf32>
    %148 = arith.addf %144, %147 : vector<8x32xf32>
    %149 = math.tanh %148 : vector<8x32xf32>
    %cst_71 = arith.constant 1.000000e+00 : f32
    %150 = vector.broadcast %cst_71 : f32 to vector<8x32xf32>
    %151 = arith.subf %150, %143 : vector<8x32xf32>
    %152 = arith.mulf %151, %149 : vector<8x32xf32>
    %153 = arith.mulf %143, %92 : vector<8x32xf32>
    %154 = arith.addf %152, %153 : vector<8x32xf32>
    %155 = arith.addf %93, %124 : vector<8x32xf32>
    %156 = arith.addf %94, %154 : vector<8x32xf32>
    %c8 = arith.constant 8 : index
    %c0_72 = arith.constant 0 : index
    %157 = vector.load %arg22[%c8, %c0_72] : memref<32x96xf32, #tpu.memory_space<vmem>>, vector<8x96xf32>
    %158 = arith.truncf %124 : vector<8x32xf32> to vector<8x32xbf16>
    %cst_73 = arith.constant dense<0.000000e+00> : vector<8x96xf32>
    %159 = tpu.matmul %158, %89, %cst_73 {dimension_numbers = #tpu.dot_dimension_numbers<[1], [0], [0], [1], [0, 0, 1, 1], [], []>} : vector<8x32xbf16>, vector<32x96xbf16>, vector<8x96xf32> -> vector<8x96xf32>
    %160 = vector.extract_strided_slice %157 {offsets = [0, 0], sizes = [8, 32], strides = [1, 1]} : vector<8x96xf32> to vector<8x32xf32>
    %161 = vector.extract_strided_slice %159 {offsets = [0, 0], sizes = [8, 32], strides = [1, 1]} : vector<8x96xf32> to vector<8x32xf32>
    %162 = arith.addf %160, %161 : vector<8x32xf32>
    %163 = arith.negf %162 : vector<8x32xf32>
    %164 = math.exp %163 : vector<8x32xf32>
    %cst_74 = arith.constant 1.000000e+00 : f32
    %165 = vector.broadcast %cst_74 : f32 to vector<8x32xf32>
    %166 = arith.addf %165, %164 : vector<8x32xf32>
    %167 = arith.divf %165, %166 : vector<8x32xf32>
    %168 = vector.extract_strided_slice %157 {offsets = [0, 32], sizes = [8, 32], strides = [1, 1]} : vector<8x96xf32> to vector<8x32xf32>
    %169 = vector.extract_strided_slice %159 {offsets = [0, 32], sizes = [8, 32], strides = [1, 1]} : vector<8x96xf32> to vector<8x32xf32>
    %170 = arith.addf %168, %169 : vector<8x32xf32>
    %171 = arith.negf %170 : vector<8x32xf32>
    %172 = math.exp %171 : vector<8x32xf32>
    %cst_75 = arith.constant 1.000000e+00 : f32
    %173 = vector.broadcast %cst_75 : f32 to vector<8x32xf32>
    %174 = arith.addf %173, %172 : vector<8x32xf32>
    %175 = arith.divf %173, %174 : vector<8x32xf32>
    %176 = vector.extract_strided_slice %157 {offsets = [0, 64], sizes = [8, 32], strides = [1, 1]} : vector<8x96xf32> to vector<8x32xf32>
    %177 = vector.extract_strided_slice %159 {offsets = [0, 64], sizes = [8, 32], strides = [1, 1]} : vector<8x96xf32> to vector<8x32xf32>
    %178 = arith.addf %177, %84 : vector<8x32xf32>
    %179 = arith.mulf %167, %178 : vector<8x32xf32>
    %180 = arith.addf %176, %179 : vector<8x32xf32>
    %181 = math.tanh %180 : vector<8x32xf32>
    %cst_76 = arith.constant 1.000000e+00 : f32
    %182 = vector.broadcast %cst_76 : f32 to vector<8x32xf32>
    %183 = arith.subf %182, %175 : vector<8x32xf32>
    %184 = arith.mulf %183, %181 : vector<8x32xf32>
    %185 = arith.mulf %175, %124 : vector<8x32xf32>
    %186 = arith.addf %184, %185 : vector<8x32xf32>
    %c16 = arith.constant 16 : index
    %c0_77 = arith.constant 0 : index
    %187 = vector.load %arg23[%c16, %c0_77] : memref<32x96xf32, #tpu.memory_space<vmem>>, vector<8x96xf32>
    %188 = arith.truncf %154 : vector<8x32xf32> to vector<8x32xbf16>
    %cst_78 = arith.constant dense<0.000000e+00> : vector<8x96xf32>
    %189 = tpu.matmul %188, %90, %cst_78 {dimension_numbers = #tpu.dot_dimension_numbers<[1], [0], [0], [1], [0, 0, 1, 1], [], []>} : vector<8x32xbf16>, vector<32x96xbf16>, vector<8x96xf32> -> vector<8x96xf32>
    %190 = vector.extract_strided_slice %187 {offsets = [0, 0], sizes = [8, 32], strides = [1, 1]} : vector<8x96xf32> to vector<8x32xf32>
    %191 = vector.extract_strided_slice %189 {offsets = [0, 0], sizes = [8, 32], strides = [1, 1]} : vector<8x96xf32> to vector<8x32xf32>
    %192 = arith.addf %190, %191 : vector<8x32xf32>
    %193 = arith.negf %192 : vector<8x32xf32>
    %194 = math.exp %193 : vector<8x32xf32>
    %cst_79 = arith.constant 1.000000e+00 : f32
    %195 = vector.broadcast %cst_79 : f32 to vector<8x32xf32>
    %196 = arith.addf %195, %194 : vector<8x32xf32>
    %197 = arith.divf %195, %196 : vector<8x32xf32>
    %198 = vector.extract_strided_slice %187 {offsets = [0, 32], sizes = [8, 32], strides = [1, 1]} : vector<8x96xf32> to vector<8x32xf32>
    %199 = vector.extract_strided_slice %189 {offsets = [0, 32], sizes = [8, 32], strides = [1, 1]} : vector<8x96xf32> to vector<8x32xf32>
    %200 = arith.addf %198, %199 : vector<8x32xf32>
    %201 = arith.negf %200 : vector<8x32xf32>
    %202 = math.exp %201 : vector<8x32xf32>
    %cst_80 = arith.constant 1.000000e+00 : f32
    %203 = vector.broadcast %cst_80 : f32 to vector<8x32xf32>
    %204 = arith.addf %203, %202 : vector<8x32xf32>
    %205 = arith.divf %203, %204 : vector<8x32xf32>
    %206 = vector.extract_strided_slice %187 {offsets = [0, 64], sizes = [8, 32], strides = [1, 1]} : vector<8x96xf32> to vector<8x32xf32>
    %207 = vector.extract_strided_slice %189 {offsets = [0, 64], sizes = [8, 32], strides = [1, 1]} : vector<8x96xf32> to vector<8x32xf32>
    %208 = arith.addf %207, %88 : vector<8x32xf32>
    %209 = arith.mulf %197, %208 : vector<8x32xf32>
    %210 = arith.addf %206, %209 : vector<8x32xf32>
    %211 = math.tanh %210 : vector<8x32xf32>
    %cst_81 = arith.constant 1.000000e+00 : f32
    %212 = vector.broadcast %cst_81 : f32 to vector<8x32xf32>
    %213 = arith.subf %212, %205 : vector<8x32xf32>
    %214 = arith.mulf %213, %211 : vector<8x32xf32>
    %215 = arith.mulf %205, %154 : vector<8x32xf32>
    %216 = arith.addf %214, %215 : vector<8x32xf32>
    %217 = arith.addf %155, %186 : vector<8x32xf32>
    %218 = arith.addf %156, %216 : vector<8x32xf32>
    %c16_82 = arith.constant 16 : index
    %c0_83 = arith.constant 0 : index
    %219 = vector.load %arg22[%c16_82, %c0_83] : memref<32x96xf32, #tpu.memory_space<vmem>>, vector<8x96xf32>
    %220 = arith.truncf %186 : vector<8x32xf32> to vector<8x32xbf16>
    %cst_84 = arith.constant dense<0.000000e+00> : vector<8x96xf32>
    %221 = tpu.matmul %220, %89, %cst_84 {dimension_numbers = #tpu.dot_dimension_numbers<[1], [0], [0], [1], [0, 0, 1, 1], [], []>} : vector<8x32xbf16>, vector<32x96xbf16>, vector<8x96xf32> -> vector<8x96xf32>
    %222 = vector.extract_strided_slice %219 {offsets = [0, 0], sizes = [8, 32], strides = [1, 1]} : vector<8x96xf32> to vector<8x32xf32>
    %223 = vector.extract_strided_slice %221 {offsets = [0, 0], sizes = [8, 32], strides = [1, 1]} : vector<8x96xf32> to vector<8x32xf32>
    %224 = arith.addf %222, %223 : vector<8x32xf32>
    %225 = arith.negf %224 : vector<8x32xf32>
    %226 = math.exp %225 : vector<8x32xf32>
    %cst_85 = arith.constant 1.000000e+00 : f32
    %227 = vector.broadcast %cst_85 : f32 to vector<8x32xf32>
    %228 = arith.addf %227, %226 : vector<8x32xf32>
    %229 = arith.divf %227, %228 : vector<8x32xf32>
    %230 = vector.extract_strided_slice %219 {offsets = [0, 32], sizes = [8, 32], strides = [1, 1]} : vector<8x96xf32> to vector<8x32xf32>
    %231 = vector.extract_strided_slice %221 {offsets = [0, 32], sizes = [8, 32], strides = [1, 1]} : vector<8x96xf32> to vector<8x32xf32>
    %232 = arith.addf %230, %231 : vector<8x32xf32>
    %233 = arith.negf %232 : vector<8x32xf32>
    %234 = math.exp %233 : vector<8x32xf32>
    %cst_86 = arith.constant 1.000000e+00 : f32
    %235 = vector.broadcast %cst_86 : f32 to vector<8x32xf32>
    %236 = arith.addf %235, %234 : vector<8x32xf32>
    %237 = arith.divf %235, %236 : vector<8x32xf32>
    %238 = vector.extract_strided_slice %219 {offsets = [0, 64], sizes = [8, 32], strides = [1, 1]} : vector<8x96xf32> to vector<8x32xf32>
    %239 = vector.extract_strided_slice %221 {offsets = [0, 64], sizes = [8, 32], strides = [1, 1]} : vector<8x96xf32> to vector<8x32xf32>
    %240 = arith.addf %239, %84 : vector<8x32xf32>
    %241 = arith.mulf %229, %240 : vector<8x32xf32>
    %242 = arith.addf %238, %241 : vector<8x32xf32>
    %243 = math.tanh %242 : vector<8x32xf32>
    %cst_87 = arith.constant 1.000000e+00 : f32
    %244 = vector.broadcast %cst_87 : f32 to vector<8x32xf32>
    %245 = arith.subf %244, %237 : vector<8x32xf32>
    %246 = arith.mulf %245, %243 : vector<8x32xf32>
    %247 = arith.mulf %237, %186 : vector<8x32xf32>
    %248 = arith.addf %246, %247 : vector<8x32xf32>
    %c8_88 = arith.constant 8 : index
    %c0_89 = arith.constant 0 : index
    %249 = vector.load %arg23[%c8_88, %c0_89] : memref<32x96xf32, #tpu.memory_space<vmem>>, vector<8x96xf32>
    %250 = arith.truncf %216 : vector<8x32xf32> to vector<8x32xbf16>
    %cst_90 = arith.constant dense<0.000000e+00> : vector<8x96xf32>
    %251 = tpu.matmul %250, %90, %cst_90 {dimension_numbers = #tpu.dot_dimension_numbers<[1], [0], [0], [1], [0, 0, 1, 1], [], []>} : vector<8x32xbf16>, vector<32x96xbf16>, vector<8x96xf32> -> vector<8x96xf32>
    %252 = vector.extract_strided_slice %249 {offsets = [0, 0], sizes = [8, 32], strides = [1, 1]} : vector<8x96xf32> to vector<8x32xf32>
    %253 = vector.extract_strided_slice %251 {offsets = [0, 0], sizes = [8, 32], strides = [1, 1]} : vector<8x96xf32> to vector<8x32xf32>
    %254 = arith.addf %252, %253 : vector<8x32xf32>
    %255 = arith.negf %254 : vector<8x32xf32>
    %256 = math.exp %255 : vector<8x32xf32>
    %cst_91 = arith.constant 1.000000e+00 : f32
    %257 = vector.broadcast %cst_91 : f32 to vector<8x32xf32>
    %258 = arith.addf %257, %256 : vector<8x32xf32>
    %259 = arith.divf %257, %258 : vector<8x32xf32>
    %260 = vector.extract_strided_slice %249 {offsets = [0, 32], sizes = [8, 32], strides = [1, 1]} : vector<8x96xf32> to vector<8x32xf32>
    %261 = vector.extract_strided_slice %251 {offsets = [0, 32], sizes = [8, 32], strides = [1, 1]} : vector<8x96xf32> to vector<8x32xf32>
    %262 = arith.addf %260, %261 : vector<8x32xf32>
    %263 = arith.negf %262 : vector<8x32xf32>
    %264 = math.exp %263 : vector<8x32xf32>
    %cst_92 = arith.constant 1.000000e+00 : f32
    %265 = vector.broadcast %cst_92 : f32 to vector<8x32xf32>
    %266 = arith.addf %265, %264 : vector<8x32xf32>
    %267 = arith.divf %265, %266 : vector<8x32xf32>
    %268 = vector.extract_strided_slice %249 {offsets = [0, 64], sizes = [8, 32], strides = [1, 1]} : vector<8x96xf32> to vector<8x32xf32>
    %269 = vector.extract_strided_slice %251 {offsets = [0, 64], sizes = [8, 32], strides = [1, 1]} : vector<8x96xf32> to vector<8x32xf32>
    %270 = arith.addf %269, %88 : vector<8x32xf32>
    %271 = arith.mulf %259, %270 : vector<8x32xf32>
    %272 = arith.addf %268, %271 : vector<8x32xf32>
    %273 = math.tanh %272 : vector<8x32xf32>
    %cst_93 = arith.constant 1.000000e+00 : f32
    %274 = vector.broadcast %cst_93 : f32 to vector<8x32xf32>
    %275 = arith.subf %274, %267 : vector<8x32xf32>
    %276 = arith.mulf %275, %273 : vector<8x32xf32>
    %277 = arith.mulf %267, %216 : vector<8x32xf32>
    %278 = arith.addf %276, %277 : vector<8x32xf32>
    %279 = arith.addf %217, %248 : vector<8x32xf32>
    %280 = arith.addf %218, %278 : vector<8x32xf32>
    %c24_94 = arith.constant 24 : index
    %c0_95 = arith.constant 0 : index
    %281 = vector.load %arg22[%c24_94, %c0_95] : memref<32x96xf32, #tpu.memory_space<vmem>>, vector<8x96xf32>
    %282 = arith.truncf %248 : vector<8x32xf32> to vector<8x32xbf16>
    %cst_96 = arith.constant dense<0.000000e+00> : vector<8x96xf32>
    %283 = tpu.matmul %282, %89, %cst_96 {dimension_numbers = #tpu.dot_dimension_numbers<[1], [0], [0], [1], [0, 0, 1, 1], [], []>} : vector<8x32xbf16>, vector<32x96xbf16>, vector<8x96xf32> -> vector<8x96xf32>
    %284 = vector.extract_strided_slice %281 {offsets = [0, 0], sizes = [8, 32], strides = [1, 1]} : vector<8x96xf32> to vector<8x32xf32>
    %285 = vector.extract_strided_slice %283 {offsets = [0, 0], sizes = [8, 32], strides = [1, 1]} : vector<8x96xf32> to vector<8x32xf32>
    %286 = arith.addf %284, %285 : vector<8x32xf32>
    %287 = arith.negf %286 : vector<8x32xf32>
    %288 = math.exp %287 : vector<8x32xf32>
    %cst_97 = arith.constant 1.000000e+00 : f32
    %289 = vector.broadcast %cst_97 : f32 to vector<8x32xf32>
    %290 = arith.addf %289, %288 : vector<8x32xf32>
    %291 = arith.divf %289, %290 : vector<8x32xf32>
    %292 = vector.extract_strided_slice %281 {offsets = [0, 32], sizes = [8, 32], strides = [1, 1]} : vector<8x96xf32> to vector<8x32xf32>
    %293 = vector.extract_strided_slice %283 {offsets = [0, 32], sizes = [8, 32], strides = [1, 1]} : vector<8x96xf32> to vector<8x32xf32>
    %294 = arith.addf %292, %293 : vector<8x32xf32>
    %295 = arith.negf %294 : vector<8x32xf32>
    %296 = math.exp %295 : vector<8x32xf32>
    %cst_98 = arith.constant 1.000000e+00 : f32
    %297 = vector.broadcast %cst_98 : f32 to vector<8x32xf32>
    %298 = arith.addf %297, %296 : vector<8x32xf32>
    %299 = arith.divf %297, %298 : vector<8x32xf32>
    %300 = vector.extract_strided_slice %281 {offsets = [0, 64], sizes = [8, 32], strides = [1, 1]} : vector<8x96xf32> to vector<8x32xf32>
    %301 = vector.extract_strided_slice %283 {offsets = [0, 64], sizes = [8, 32], strides = [1, 1]} : vector<8x96xf32> to vector<8x32xf32>
    %302 = arith.addf %301, %84 : vector<8x32xf32>
    %303 = arith.mulf %291, %302 : vector<8x32xf32>
    %304 = arith.addf %300, %303 : vector<8x32xf32>
    %305 = math.tanh %304 : vector<8x32xf32>
    %cst_99 = arith.constant 1.000000e+00 : f32
    %306 = vector.broadcast %cst_99 : f32 to vector<8x32xf32>
    %307 = arith.subf %306, %299 : vector<8x32xf32>
    %308 = arith.mulf %307, %305 : vector<8x32xf32>
    %309 = arith.mulf %299, %248 : vector<8x32xf32>
    %310 = arith.addf %308, %309 : vector<8x32xf32>
    %c0_100 = arith.constant 0 : index
    %c0_101 = arith.constant 0 : index
    %311 = vector.load %arg23[%c0_100, %c0_101] : memref<32x96xf32, #tpu.memory_space<vmem>>, vector<8x96xf32>
    %312 = arith.truncf %278 : vector<8x32xf32> to vector<8x32xbf16>
    %cst_102 = arith.constant dense<0.000000e+00> : vector<8x96xf32>
    %313 = tpu.matmul %312, %90, %cst_102 {dimension_numbers = #tpu.dot_dimension_numbers<[1], [0], [0], [1], [0, 0, 1, 1], [], []>} : vector<8x32xbf16>, vector<32x96xbf16>, vector<8x96xf32> -> vector<8x96xf32>
    %314 = vector.extract_strided_slice %311 {offsets = [0, 0], sizes = [8, 32], strides = [1, 1]} : vector<8x96xf32> to vector<8x32xf32>
    %315 = vector.extract_strided_slice %313 {offsets = [0, 0], sizes = [8, 32], strides = [1, 1]} : vector<8x96xf32> to vector<8x32xf32>
    %316 = arith.addf %314, %315 : vector<8x32xf32>
    %317 = arith.negf %316 : vector<8x32xf32>
    %318 = math.exp %317 : vector<8x32xf32>
    %cst_103 = arith.constant 1.000000e+00 : f32
    %319 = vector.broadcast %cst_103 : f32 to vector<8x32xf32>
    %320 = arith.addf %319, %318 : vector<8x32xf32>
    %321 = arith.divf %319, %320 : vector<8x32xf32>
    %322 = vector.extract_strided_slice %311 {offsets = [0, 32], sizes = [8, 32], strides = [1, 1]} : vector<8x96xf32> to vector<8x32xf32>
    %323 = vector.extract_strided_slice %313 {offsets = [0, 32], sizes = [8, 32], strides = [1, 1]} : vector<8x96xf32> to vector<8x32xf32>
    %324 = arith.addf %322, %323 : vector<8x32xf32>
    %325 = arith.negf %324 : vector<8x32xf32>
    %326 = math.exp %325 : vector<8x32xf32>
    %cst_104 = arith.constant 1.000000e+00 : f32
    %327 = vector.broadcast %cst_104 : f32 to vector<8x32xf32>
    %328 = arith.addf %327, %326 : vector<8x32xf32>
    %329 = arith.divf %327, %328 : vector<8x32xf32>
    %330 = vector.extract_strided_slice %311 {offsets = [0, 64], sizes = [8, 32], strides = [1, 1]} : vector<8x96xf32> to vector<8x32xf32>
    %331 = vector.extract_strided_slice %313 {offsets = [0, 64], sizes = [8, 32], strides = [1, 1]} : vector<8x96xf32> to vector<8x32xf32>
    %332 = arith.addf %331, %88 : vector<8x32xf32>
    %333 = arith.mulf %321, %332 : vector<8x32xf32>
    %334 = arith.addf %330, %333 : vector<8x32xf32>
    %335 = math.tanh %334 : vector<8x32xf32>
    %cst_105 = arith.constant 1.000000e+00 : f32
    %336 = vector.broadcast %cst_105 : f32 to vector<8x32xf32>
    %337 = arith.subf %336, %329 : vector<8x32xf32>
    %338 = arith.mulf %337, %335 : vector<8x32xf32>
    %339 = arith.mulf %329, %278 : vector<8x32xf32>
    %340 = arith.addf %338, %339 : vector<8x32xf32>
    %341 = arith.addf %279, %310 : vector<8x32xf32>
    %342 = arith.addf %280, %340 : vector<8x32xf32>
    %cst_106 = arith.constant 2.500000e-01 : f32
    %343 = vector.broadcast %cst_106 : f32 to vector<8x32xf32>
    %344 = arith.mulf %341, %343 : vector<8x32xf32>
    %cst_107 = arith.constant 2.500000e-01 : f32
    %345 = vector.broadcast %cst_107 : f32 to vector<8x32xf32>
    %346 = arith.mulf %342, %345 : vector<8x32xf32>
    %347 = tpu.concatenate %344, %346 in 1 : vector<8x32xf32>, vector<8x32xf32> -> vector<8x64xf32>
    %348 = arith.truncf %347 : vector<8x64xf32> to vector<8x64xbf16>
    %c0_108 = arith.constant 0 : index
    %c0_109 = arith.constant 0 : index
    %349 = vector.load %arg19[%c0_108, %c0_109] : memref<64x32xbf16, #tpu.memory_space<vmem>>, vector<64x32xbf16>
    %cst_110 = arith.constant dense<0.000000e+00> : vector<8x32xf32>
    %350 = tpu.matmul %348, %349, %cst_110 {dimension_numbers = #tpu.dot_dimension_numbers<[1], [0], [0], [1], [0, 0, 1, 1], [], []>} : vector<8x64xbf16>, vector<64x32xbf16>, vector<8x32xf32> -> vector<8x32xf32>
    %c0_111 = arith.constant 0 : index
    %c0_112 = arith.constant 0 : index
    %351 = vector.load %arg20[%c0_111, %c0_112] : memref<1x32xf32, #tpu.memory_space<vmem>>, vector<1x32xf32>
    %352 = vector.broadcast %351 : vector<1x32xf32> to vector<8x32xf32>
    %353 = arith.addf %350, %352 : vector<8x32xf32>
    %354 = arith.mulf %66, %353 : vector<8x32xf32>
    %cst_113 = arith.constant dense<0.000000e+00> : vector<8xf32>
    %355 = vector.multi_reduction <add>, %354, %cst_113 [1] : vector<8x32xf32> to vector<8xf32>
    %356 = vector.shape_cast %355 : vector<8xf32> to vector<8x1xf32>
    %357 = tpu.iota {dimensions = array<i32: 0>} : vector<8x1xi32>
    %c6_i32 = arith.constant 6 : i32
    %358 = vector.broadcast %c6_i32 : i32 to vector<8x1xi32>
    %359 = arith.cmpi slt, %357, %358 : vector<8x1xi32>
    %cst_114 = arith.constant 1.000000e+00 : f32
    %cst_115 = arith.constant -1.000000e+00 : f32
    %360 = vector.broadcast %cst_114 : f32 to vector<8x1xf32>
    %361 = vector.broadcast %cst_115 : f32 to vector<8x1xf32>
    %362 = arith.select %359, %360, %361 : vector<8x1xi1>, vector<8x1xf32>
    %363 = arith.mulf %362, %356 : vector<8x1xf32>
    %cst_116 = arith.constant 0.000000e+00 : f32
    %364 = vector.broadcast %cst_116 : f32 to vector<8x1xf32>
    %365 = arith.minimumf %363, %364 : vector<8x1xf32>
    %366 = math.absf %363 : vector<8x1xf32>
    %cst_117 = arith.constant 0.000000e+00 : f32
    %367 = vector.broadcast %cst_117 : f32 to vector<8x1xf32>
    %368 = arith.subf %367, %366 : vector<8x1xf32>
    %369 = math.exp %368 : vector<8x1xf32>
    %cst_118 = arith.constant 1.000000e+00 : f32
    %370 = vector.broadcast %cst_118 : f32 to vector<8x1xf32>
    %371 = arith.addf %370, %369 : vector<8x1xf32>
    %372 = math.log %371 : vector<8x1xf32>
    %373 = arith.subf %365, %372 : vector<8x1xf32>
    %c6_i32_119 = arith.constant 6 : i32
    %374 = vector.broadcast %c6_i32_119 : i32 to vector<8x1xi32>
    %375 = arith.cmpi slt, %357, %374 : vector<8x1xi32>
    %cst_120 = arith.constant 0.000000e+00 : f32
    %376 = vector.broadcast %cst_120 : f32 to vector<8x1xf32>
    %377 = arith.select %375, %373, %376 : vector<8x1xi1>, vector<8x1xf32>
    %378 = vector.shape_cast %377 : vector<8x1xf32> to vector<1x8x1xf32>
    %cst_121 = arith.constant dense<0.000000e+00> : vector<1xf32>
    %379 = vector.multi_reduction <add>, %378, %cst_121 [1, 2] : vector<1x8x1xf32> to vector<1xf32>
    %380 = vector.shape_cast %379 : vector<1xf32> to vector<1x1x1xf32>
    %381 = vector.extract %380[0, 0, 0] : f32 from vector<1x1x1xf32>
    %382 = vector.broadcast %381 : f32 to vector<1x1xf32>
    %c6_i32_122 = arith.constant 6 : i32
    %383 = vector.broadcast %c6_i32_122 : i32 to vector<8x1xi32>
    %384 = arith.cmpi sge, %357, %383 : vector<8x1xi32>
    %c8_i32 = arith.constant 8 : i32
    %385 = vector.broadcast %c8_i32 : i32 to vector<8x1xi32>
    %386 = arith.cmpi slt, %357, %385 : vector<8x1xi32>
    %387 = arith.andi %384, %386 : vector<8x1xi1>
    %cst_123 = arith.constant 0.000000e+00 : f32
    %388 = vector.broadcast %cst_123 : f32 to vector<8x1xf32>
    %389 = arith.select %387, %373, %388 : vector<8x1xi1>, vector<8x1xf32>
    %390 = vector.shape_cast %389 : vector<8x1xf32> to vector<1x8x1xf32>
    %cst_124 = arith.constant dense<0.000000e+00> : vector<1xf32>
    %391 = vector.multi_reduction <add>, %390, %cst_124 [1, 2] : vector<1x8x1xf32> to vector<1xf32>
    %392 = vector.shape_cast %391 : vector<1xf32> to vector<1x1x1xf32>
    %393 = vector.extract %392[0, 0, 0] : f32 from vector<1x1x1xf32>
    %394 = vector.broadcast %393 : f32 to vector<1x1xf32>
    %395 = tpu.concatenate %382, %394 in 1 : vector<1x1xf32>, vector<1x1xf32> -> vector<1x2xf32>
    %c0_125 = arith.constant 0 : index
    %c0_126 = arith.constant 0 : index
    %396 = vector.load %arg21[%c0_125, %c0_126] : memref<1x2xf32, #tpu.memory_space<vmem>>, vector<1x2xf32>
    tpu.vector_store %arg21[%c0_125, %c0_126], %395 {strides = array<i32>} : memref<1x2xf32, #tpu.memory_space<vmem>>, vector<1x2xf32>,
    return
  }
}

</mosaic_0001>

<llo_original>
// kernel: _forward_core.4
$region0: #{_forward_core.4}
  #allocation0 [shape = 'u32[]', space=smem, size = 0x4, offset = 0x4, fixed_abs, tag = 'smem constant byte address 0x4 - core index']
  #allocation1 [shape = 'u32[72,128]{1,0:T(1,128)}', space=vmem, size = 0x9000, scoped, tag = 'internal scratch']
  #allocation2 [shape = 'f32[1,1]{1,0:T(1,128)S(1)}', space=vmem, size = 0x200, scoped, tag = 'scoped memory for _forward_core.4']
  %s0 = inlined_call_operand.vmem [shape: f32[8,32], index: 0, kind: input, shape index: {}]
  %s1 = inlined_call_operand.vmem [shape: f32[16,32], index: 1, kind: input, shape index: {}]
  %s2 = inlined_call_operand.vmem [shape: f32[8,32], index: 2, kind: input, shape index: {}]
  %s3 = inlined_call_operand.vmem [shape: bf16[128,64], index: 3, kind: input, shape index: {}]
  %s4 = inlined_call_operand.vmem [shape: f32[1,64], index: 4, kind: input, shape index: {}]
  %s5 = inlined_call_operand.vmem [shape: f32[1,64], index: 5, kind: input, shape index: {}]
  %s6 = inlined_call_operand.vmem [shape: f32[1,64], index: 6, kind: input, shape index: {}]
  %s7 = inlined_call_operand.vmem [shape: bf16[64,32], index: 7, kind: input, shape index: {}]
  %s8 = inlined_call_operand.vmem [shape: f32[1,32], index: 8, kind: input, shape index: {}]
  %s9 = inlined_call_operand.vmem [shape: f32[1,32], index: 9, kind: input, shape index: {}]
  %s10 = inlined_call_operand.vmem [shape: f32[1,32], index: 10, kind: input, shape index: {}]
  %s11 = inlined_call_operand.vmem [shape: bf16[32,32], index: 11, kind: input, shape index: {}]
  %s12 = inlined_call_operand.vmem [shape: f32[1,32], index: 12, kind: input, shape index: {}]
  %s13 = inlined_call_operand.vmem [shape: bf16[32,1], index: 13, kind: input, shape index: {}]
  %s14 = inlined_call_operand.<no memory space> [shape: f32[1,1], index: 14, kind: input, shape index: {}]
  %s15 = inlined_call_operand.vmem [shape: f32[16,1], index: 15, kind: output, shape index: {0}]
  %s16 = inlined_call_operand.vmem [shape: f32[1,2], index: 16, kind: output, shape index: {1}]
  %17 = xla_tuple %s15, %s16
  %s18 = sld [smem:[#allocation0]]
  $region78: #{_forward_core.4} parent=0
    _
  %s20 = ssub.s32 1, %s18
  %s21 = scalar_select 0, %s20, %s18
  %v22 = vstv %s14
  %23 = vst [vmem:[#allocation2] sm:$0x1] %v22
  // Predicated region
  $region2: #{_forward_core.4} parent=0 // pred_check
    _
  $region3: #{_forward_core.4} parent=0 // pred_check_branch
    %25 = sbr.rel (0) target = $region5
  $region4: #{_forward_core.4} parent=0 // pred_region
    _
  $region5: #{_forward_core.4} parent=0 // pred_fallthru
    _
  // Predicated region
  $region6: #{_forward_core.4} parent=0 // pred_check
    _
  $region7: #{_forward_core.4} parent=0 // pred_check_branch
    %27 = sbr.rel (0) target = $region9
  $region8: #{_forward_core.4} parent=0 // pred_region
    _
  $region9: #{_forward_core.4} parent=0 // pred_fallthru
    _
  // Predicated region
  $region10: #{_forward_core.4} parent=0 // pred_check
    _
  $region11: #{_forward_core.4} parent=0 // pred_check_branch
    %29 = sbr.rel (0) target = $region13
  $region12: #{_forward_core.4} parent=0 // pred_region
    _
  $region13: #{_forward_core.4} parent=0 // pred_fallthru
    _
  // Predicated region
  $region14: #{_forward_core.4} parent=0 // pred_check
    _
  $region15: #{_forward_core.4} parent=0 // pred_check_branch
    %31 = sbr.rel (0) target = $region17
  $region16: #{_forward_core.4} parent=0 // pred_region
    _
  $region17: #{_forward_core.4} parent=0 // pred_fallthru
    _
  // Predicated region
  $region18: #{_forward_core.4} parent=0 // pred_check
    _
  $region19: #{_forward_core.4} parent=0 // pred_check_branch
    %33 = sbr.rel (0) target = $region21
  $region20: #{_forward_core.4} parent=0 // pred_region
    _
  $region21: #{_forward_core.4} parent=0 // pred_fallthru
    _
  // Predicated region
  $region22: #{_forward_core.4} parent=0 // pred_check
    _
  $region23: #{_forward_core.4} parent=0 // pred_check_branch
    %35 = sbr.rel (0) target = $region25
  $region24: #{_forward_core.4} parent=0 // pred_region
    _
  $region25: #{_forward_core.4} parent=0 // pred_fallthru
    _
  // Predicated region
  $region26: #{_forward_core.4} parent=0 // pred_check
    _
  $region27: #{_forward_core.4} parent=0 // pred_check_branch
    %37 = sbr.rel (0) target = $region29
  $region28: #{_forward_core.4} parent=0 // pred_region
    _
  $region29: #{_forward_core.4} parent=0 // pred_fallthru
    _
  // Predicated region
  $region30: #{_forward_core.4} parent=0 // pred_check
    _
  $region31: #{_forward_core.4} parent=0 // pred_check_branch
    %39 = sbr.rel (0) target = $region33
  $region32: #{_forward_core.4} parent=0 // pred_region
    _
  $region33: #{_forward_core.4} parent=0 // pred_fallthru
    _
  // Predicated region
  $region34: #{_forward_core.4} parent=0 // pred_check
    _
  $region35: #{_forward_core.4} parent=0 // pred_check_branch
    %41 = sbr.rel (0) target = $region37
  $region36: #{_forward_core.4} parent=0 // pred_region
    _
  $region37: #{_forward_core.4} parent=0 // pred_fallthru
    _
  // Predicated region
  $region38: #{_forward_core.4} parent=0 // pred_check
    _
  $region39: #{_forward_core.4} parent=0 // pred_check_branch
    %43 = sbr.rel (0) target = $region41
  $region40: #{_forward_core.4} parent=0 // pred_region
    _
  $region41: #{_forward_core.4} parent=0 // pred_fallthru
    _
  // Predicated region
  $region42: #{_forward_core.4} parent=0 // pred_check
    _
  $region43: #{_forward_core.4} parent=0 // pred_check_branch
    %45 = sbr.rel (0) target = $region45
  $region44: #{_forward_core.4} parent=0 // pred_region
    _
  $region45: #{_forward_core.4} parent=0 // pred_fallthru
    _
  // Predicated region
  $region46: #{_forward_core.4} parent=0 // pred_check
    _
  $region47: #{_forward_core.4} parent=0 // pred_check_branch
    %47 = sbr.rel (0) target = $region49
  $region48: #{_forward_core.4} parent=0 // pred_region
    _
  $region49: #{_forward_core.4} parent=0 // pred_fallthru
    _
  // Predicated region
  $region50: #{_forward_core.4} parent=0 // pred_check
    _
  $region51: #{_forward_core.4} parent=0 // pred_check_branch
    %49 = sbr.rel (0) target = $region53
  $region52: #{_forward_core.4} parent=0 // pred_region
    _
  $region53: #{_forward_core.4} parent=0 // pred_fallthru
    _
  // Predicated region
  $region54: #{_forward_core.4} parent=0 // pred_check
    _
  $region55: #{_forward_core.4} parent=0 // pred_check_branch
    %51 = sbr.rel (0) target = $region57
  $region56: #{_forward_core.4} parent=0 // pred_region
    _
  $region57: #{_forward_core.4} parent=0 // pred_fallthru
    _
  // Predicated region
  $region58: #{_forward_core.4} parent=0 // pred_check
    _
  $region59: #{_forward_core.4} parent=0 // pred_check_branch
    %53 = sbr.rel (0) target = $region61
  $region60: #{_forward_core.4} parent=0 // pred_region
    _
  $region61: #{_forward_core.4} parent=0 // pred_fallthru
    _
  %v55 = vld [vmem:[%s1] sm:$0xff]
  %v56 = vld [vmem:[%s1 + $0x8] sm:$0xff]
  %v57 = vld [vmem:[%s0] sm:$0xff]
  %v58 = vsub.f32 %v57, %v55
  %v59 = vsub.f32 %v57, %v56
  %v60 = vmul.f32 %v58, %v58
  %v61 = vmul.f32 %v59, %v59
  %vm62 = vcmask 261120
  %v63 = vsel %vm62, %v60, 0.0
  %64 = vadd.xlane.f32.xlu0 %v63
  %v65 = vpop.xlane.xlu0 %64
  %v66 = vsel %vm62, %v61, 0.0
  %67 = vadd.xlane.f32.xlu0 %v66
  %v68 = vpop.xlane.xlu0 %67
  %vm69 = vcmask 7168
  %70 = vst.msk [vmem:[%s15] sm:$0xff] %vm69, %v65
  %71 = vst.msk [vmem:[%s15 + $0x8] sm:$0xff] %vm69, %v68
  %v72 = vld [vmem:[%s2] sm:$0xff]
  %v73 = vld [vmem:[%s3] sm:$0xf]
  %v74 = vld [vmem:[%s3 + $0x4] sm:$0xf]
  %v75 = vld [vmem:[%s3 + $0x8] sm:$0xf]
  %v76 = vld [vmem:[%s3 + $0xc] sm:$0xf]
  %v77 = vld [vmem:[%s3 + $0x10] sm:$0xf]
  %v78 = vld [vmem:[%s3 + $0x14] sm:$0xf]
  %v79 = vld [vmem:[%s3 + $0x18] sm:$0xf]
  %v80 = vld [vmem:[%s3 + $0x1c] sm:$0xf]
  %v81 = vld [vmem:[%s3 + $0x20] sm:$0xf]
  %v82 = vld [vmem:[%s3 + $0x24] sm:$0xf]
  %v83 = vld [vmem:[%s3 + $0x28] sm:$0xf]
  %v84 = vld [vmem:[%s3 + $0x2c] sm:$0xf]
  %v85 = vld [vmem:[%s3 + $0x30] sm:$0xf]
  %v86 = vld [vmem:[%s3 + $0x34] sm:$0xf]
  %v87 = vld [vmem:[%s3 + $0x38] sm:$0xf]
  %v88 = vld [vmem:[%s3 + $0x3c] sm:$0xf]
  %v89 = vld [vmem:[%s4] sm:$0x1]
  %v90 = vld [vmem:[%s5] sm:$0x1]
  %v91 = vld [vmem:[%s6] sm:$0x1]
  %v92 = vld [vmem:[%s7] sm:$0xf]
  %v93 = vld [vmem:[%s7 + $0x4] sm:$0xf]
  %v94 = vld [vmem:[%s7 + $0x8] sm:$0xf]
  %v95 = vld [vmem:[%s7 + $0xc] sm:$0xf]
  %v96 = vld [vmem:[%s7 + $0x10] sm:$0xf]
  %v97 = vld [vmem:[%s7 + $0x14] sm:$0xf]
  %v98 = vld [vmem:[%s7 + $0x18] sm:$0xf]
  %v99 = vld [vmem:[%s7 + $0x1c] sm:$0xf]
  %v100 = vld [vmem:[%s8] sm:$0x1]
  %v101 = vld [vmem:[%s9] sm:$0x1]
  %v102 = vld [vmem:[%s10] sm:$0x1]
  %v103 = vmul.f32 %v55, %v72
  %v104 = vmul.f32 %v56, %v72
  %v105 = vsub.f32 %v55, %v72
  %v106 = vsub.f32 %v56, %v72
  %108 = vrot.lane.b32.xlu0 %v72, 32
  %v109 = vpop.permute.xlu0 %108
  %113 = vrot.lane.b32.xlu0 %v103, 64
  %v114 = vpop.permute.xlu0 %113
  %115 = vrot.lane.b32.xlu0 %v104, 64
  %v116 = vpop.permute.xlu0 %115
  %121 = vrot.lane.b32.xlu0 %v105, 96
  %v122 = vpop.permute.xlu0 %121
  %123 = vrot.lane.b32.xlu0 %v106, 96
  %v124 = vpop.permute.xlu0 %123
  %v127 = vsel %vm62, %v55, %v109
  %v128 = vsel %vm62, %v56, %v109
  %vm129 = vcmask 523264
  %v130 = vsel %vm129, %v127, %v114
  %v131 = vsel %vm129, %v128, %v116
  %vm132 = vcmask 785408
  %v133 = vsel %vm132, %v130, %v122
  %v134 = vsel %vm132, %v131, %v124
  %v135 = vpack.c.bf16 %v134, %v133
  %v137 = vperm.slane %v89, 0
  %v155 = vunpack.c.l.b16 %v73
  %v156 = vunpack.c.l.b16 %v74
  %v157 = vunpack.c.l.b16 %v75
  %v158 = vunpack.c.l.b16 %v76
  %v159 = vunpack.c.l.b16 %v77
  %v160 = vunpack.c.l.b16 %v78
  %v161 = vunpack.c.l.b16 %v79
  %v162 = vunpack.c.l.b16 %v80
  %v163 = vunpack.c.l.b16 %v81
  %v164 = vunpack.c.l.b16 %v82
  %v165 = vunpack.c.l.b16 %v83
  %v166 = vunpack.c.l.b16 %v84
  %v167 = vunpack.c.l.b16 %v85
  %v168 = vunpack.c.l.b16 %v86
  %v169 = vunpack.c.l.b16 %v87
  %v170 = vunpack.c.l.b16 %v88
  %v171 = vpack.c.b16 %v156, %v155
  %v172 = vpack.c.b16 %v158, %v157
  %v173 = vpack.c.b16 %v160, %v159
  %v174 = vpack.c.b16 %v162, %v161
  %v175 = vpack.c.b16 %v164, %v163
  %v176 = vpack.c.b16 %v166, %v165
  %v177 = vpack.c.b16 %v168, %v167
  %v178 = vpack.c.b16 %v170, %v169
  %187 = vmatpush.bf16.msra.mxu0 %v178
  %188 = vmatpush.bf16.msra.mxu0 %v177
  %189 = vmatpush.bf16.msra.mxu0 %v176
  %190 = vmatpush.bf16.msra.mxu0 %v175
  %191 = vmatpush.bf16.msra.mxu0 %v174
  %192 = vmatpush.bf16.msra.mxu0 %v173
  %193 = vmatpush.bf16.msra.mxu0 %v172
  %194 = vmatpush.bf16.msra.mxu0 %v171
  %195 = vmatmul.bf16.gmra.mxu0 %v135
  %v196 = vpop.f32.mrf.mxu0
  %v197 = vadd.f32 %v137, %v196
  %v198 = vpop.f32.mrf.mxu0
  %v199 = vadd.f32 %v137, %v198
  %200 = vdwg.mxu0
  %v201 = vsel %vm129, %v197, 0.0
  %202 = vadd.xlane.f32.xlu0 %v201
  %v203 = vpop.xlane.xlu0 %202
  %v204 = vsel %vm129, %v199, 0.0
  %205 = vadd.xlane.f32.xlu0 %v204
  %v206 = vpop.xlane.xlu0 %205
  %v207 = vrcp.pop 64.0
  %v208 = vmul.f32 64.0, %v207
  %v209 = vsub.f32 1.0, %v208
  %v210 = vmul.f32 %v207, %v209
  %v211 = vadd.f32 %v207, %v210
  %vm212 = vweird.f32 %v207
  %v213 = vsel %vm212, %v207, %v211
  %v214 = vmul.f32 %v203, %v213
  %v215 = vmul.f32 %v206, %v213
  %v216 = vsub.f32 %v197, %v214
  %v217 = vsub.f32 %v199, %v215
  %v218 = vmul.f32 %v216, %v216
  %v219 = vmul.f32 %v217, %v217
  %v220 = vsel %vm129, %v218, 0.0
  %221 = vadd.xlane.f32.xlu0 %v220
  %v222 = vpop.xlane.xlu0 %221
  %v223 = vsel %vm129, %v219, 0.0
  %224 = vadd.xlane.f32.xlu0 %v223
  %v225 = vpop.xlane.xlu0 %224
  %v226 = vmul.f32 %v222, %v213
  %v227 = vmul.f32 %v225, %v213
  %v228 = vadd.f32 %v226, 1e-05
  %v229 = vadd.f32 %v227, 1e-05
  %v230 = vrsqrt.pop %v228
  %v231 = vmul.f32 %v230, %v228
  %v232 = vmul.f32 %v231, %v230
  %v233 = vmul.f32 0.5, %v232
  %v234 = vsub.f32 1.5, %v233
  %v235 = vmul.f32 %v230, %v234
  %vm236 = vweird.f32 %v228
  %vm237 = vweird.f32 %v230
  %vm238 = vmor %vm236, %vm237
  %v239 = vsel %vm238, %v230, %v235
  %v240 = vrsqrt.pop %v229
  %v241 = vmul.f32 %v240, %v229
  %v242 = vmul.f32 %v241, %v240
  %v243 = vmul.f32 0.5, %v242
  %v244 = vsub.f32 1.5, %v243
  %v245 = vmul.f32 %v240, %v244
  %vm246 = vweird.f32 %v229
  %vm247 = vweird.f32 %v240
  %vm248 = vmor %vm246, %vm247
  %v249 = vsel %vm248, %v240, %v245
  %v250 = vmul.f32 %v216, %v239
  %v251 = vmul.f32 %v217, %v249
  %v253 = vperm.slane %v90, 0
  %v255 = vmul.f32 %v250, %v253
  %v256 = vmul.f32 %v251, %v253
  %v258 = vperm.slane %v91, 0
  %v260 = vadd.f32 %v255, %v258
  %v261 = vadd.f32 %v256, %v258
  %v262 = vmax.f32 %v260, 0.0
  %v263 = vmax.f32 %v261, 0.0
  %v264 = vpack.c.bf16 %v263, %v262
  %v266 = vperm.slane %v100, 0
  %v276 = vunpack.c.l.b16 %v92
  %v277 = vunpack.c.l.b16 %v93
  %v278 = vunpack.c.l.b16 %v94
  %v279 = vunpack.c.l.b16 %v95
  %v280 = vunpack.c.l.b16 %v96
  %v281 = vunpack.c.l.b16 %v97
  %v282 = vunpack.c.l.b16 %v98
  %v283 = vunpack.c.l.b16 %v99
  %v284 = vpack.c.b16 %v277, %v276
  %v285 = vpack.c.b16 %v279, %v278
  %v286 = vpack.c.b16 %v281, %v280
  %v287 = vpack.c.b16 %v283, %v282
  %v293 = vsel %vm129, %v264, 0
  %295 = vmatpush.bf16.msra.mxu0 0
  %296 = vmatpush.bf16.msra.mxu0 0
  %297 = vmatpush.bf16.msra.mxu0 0
  %298 = vmatpush.bf16.msra.mxu0 0
  %299 = vmatpush.bf16.msra.mxu0 %v287
  %300 = vmatpush.bf16.msra.mxu0 %v286
  %301 = vmatpush.bf16.msra.mxu0 %v285
  %302 = vmatpush.bf16.msra.mxu0 %v284
  %303 = vmatmul.bf16.gmra.mxu0 %v293
  %v304 = vpop.f32.mrf.mxu0
  %v305 = vadd.f32 %v266, %v304
  %v306 = vpop.f32.mrf.mxu0
  %v307 = vadd.f32 %v266, %v306
  %308 = vdwg.mxu0
  %v309 = vsel %vm62, %v305, 0.0
  %310 = vadd.xlane.f32.xlu0 %v309
  %v311 = vpop.xlane.xlu0 %310
  %v312 = vsel %vm62, %v307, 0.0
  %313 = vadd.xlane.f32.xlu0 %v312
  %v314 = vpop.xlane.xlu0 %313
  %v315 = vrcp.pop 32.0
  %v316 = vmul.f32 32.0, %v315
  %v317 = vsub.f32 1.0, %v316
  %v318 = vmul.f32 %v315, %v317
  %v319 = vadd.f32 %v315, %v318
  %vm320 = vweird.f32 %v315
  %v321 = vsel %vm320, %v315, %v319
  %v322 = vmul.f32 %v311, %v321
  %v323 = vmul.f32 %v314, %v321
  %v324 = vsub.f32 %v305, %v322
  %v325 = vsub.f32 %v307, %v323
  %v326 = vmul.f32 %v324, %v324
  %v327 = vmul.f32 %v325, %v325
  %v328 = vsel %vm62, %v326, 0.0
  %329 = vadd.xlane.f32.xlu0 %v328
  %v330 = vpop.xlane.xlu0 %329
  %v331 = vsel %vm62, %v327, 0.0
  %332 = vadd.xlane.f32.xlu0 %v331
  %v333 = vpop.xlane.xlu0 %332
  %v334 = vmul.f32 %v330, %v321
  %v335 = vmul.f32 %v333, %v321
  %v336 = vadd.f32 %v334, 1e-05
  %v337 = vadd.f32 %v335, 1e-05
  %v338 = vrsqrt.pop %v336
  %v339 = vmul.f32 %v338, %v336
  %v340 = vmul.f32 %v339, %v338
  %v341 = vmul.f32 0.5, %v340
  %v342 = vsub.f32 1.5, %v341
  %v343 = vmul.f32 %v338, %v342
  %vm344 = vweird.f32 %v336
  %vm345 = vweird.f32 %v338
  %vm346 = vmor %vm344, %vm345
  %v347 = vsel %vm346, %v338, %v343
  %v348 = vrsqrt.pop %v337
  %v349 = vmul.f32 %v348, %v337
  %v350 = vmul.f32 %v349, %v348
  %v351 = vmul.f32 0.5, %v350
  %v352 = vsub.f32 1.5, %v351
  %v353 = vmul.f32 %v348, %v352
  %vm354 = vweird.f32 %v337
  %vm355 = vweird.f32 %v348
  %vm356 = vmor %vm354, %vm355
  %v357 = vsel %vm356, %v348, %v353
  %v358 = vmul.f32 %v324, %v347
  %v359 = vmul.f32 %v325, %v357
  %v361 = vperm.slane %v101, 0
  %v363 = vmul.f32 %v358, %v361
  %v364 = vmul.f32 %v359, %v361
  %v366 = vperm.slane %v102, 0
  %v368 = vadd.f32 %v363, %v366
  %v369 = vadd.f32 %v364, %v366
  %v370 = vpack.c.bf16 %v369, %v368
  %v371 = vld [vmem:[%s11] sm:$0xf]
  %v372 = vld [vmem:[%s11 + $0x4] sm:$0xf]
  %v373 = vld [vmem:[%s11 + $0x8] sm:$0xf]
  %v374 = vld [vmem:[%s11 + $0xc] sm:$0xf]
  %v375 = vld [vmem:[%s12] sm:$0x1]
  %v377 = vperm.slane %v375, 0
  %v383 = vunpack.c.l.b16 %v371
  %v384 = vunpack.c.l.b16 %v372
  %v385 = vunpack.c.l.b16 %v373
  %v386 = vunpack.c.l.b16 %v374
  %v387 = vpack.c.b16 %v384, %v383
  %v388 = vpack.c.b16 %v386, %v385
  %v392 = vsel %vm62, %v370, 0
  %394 = vmatpush.bf16.msra.mxu0 0
  %395 = vmatpush.bf16.msra.mxu0 0
  %396 = vmatpush.bf16.msra.mxu0 0
  %397 = vmatpush.bf16.msra.mxu0 0
  %398 = vmatpush.bf16.msra.mxu0 0
  %399 = vmatpush.bf16.msra.mxu0 0
  %400 = vmatpush.bf16.msra.mxu0 %v388
  %401 = vmatpush.bf16.msra.mxu0 %v387
  %402 = vmatmul.bf16.gmra.mxu0 %v392
  %v403 = vpop.f32.mrf.mxu0
  %v404 = vadd.f32 %v377, %v403
  %v405 = vpop.f32.mrf.mxu0
  %v406 = vadd.f32 %v377, %v405
  %407 = vdwg.mxu0
  %v408 = vmax.f32 %v404, 0.0
  %v409 = vmax.f32 %v406, 0.0
  %v410 = vpack.c.bf16 %v409, %v408
  %v411 = vld [vmem:[%s13] sm:$0xf]
  %v412 = vld [vmem:[%s13 + $0x4] sm:$0xf]
  %v413 = vld [vmem:[%s13 + $0x8] sm:$0xf]
  %v414 = vld [vmem:[%s13 + $0xc] sm:$0xf]
  %v415 = vld [vmem:[#allocation2] sm:$0x1]
  %v417 = vperm.slane %v415, 0
  %v423 = vunpack.c.l.b16 %v411
  %v424 = vunpack.c.l.b16 %v412
  %v425 = vunpack.c.l.b16 %v413
  %v426 = vunpack.c.l.b16 %v414
  %v427 = vpack.c.b16 %v424, %v423
  %v428 = vpack.c.b16 %v426, %v425
  %v432 = vsel %vm62, %v410, 0
  %434 = vmatpush.bf16.msra.mxu0 0
  %435 = vmatpush.bf16.msra.mxu0 0
  %436 = vmatpush.bf16.msra.mxu0 0
  %437 = vmatpush.bf16.msra.mxu0 0
  %438 = vmatpush.bf16.msra.mxu0 0
  %439 = vmatpush.bf16.msra.mxu0 0
  %440 = vmatpush.bf16.msra.mxu0 %v428
  %441 = vmatpush.bf16.msra.mxu0 %v427
  %442 = vmatmul.bf16.gmra.mxu0 %v432
  %v443 = vpop.f32.mrf.mxu0
  %v444 = vadd.f32 %v417, %v443
  %v445 = vpop.f32.mrf.mxu0
  %v446 = vadd.f32 %v417, %v445
  %447 = vdwg.mxu0
  %v448 = vlaneseq
  %v449 = vshrl.u32 %v448, 7
  %v450 = vadd.s32 %v449, 8
  %vm451 = vcmp.lt.s32.totalorder %v449, 8
  %vm452 = vcmp.lt.s32.totalorder %v450, 8
  %v453 = vsel %vm451, 1.0, -1.0
  %v454 = vsel %vm452, 1.0, -1.0
  %v455 = vmul.f32 %v453, %v444
  %v456 = vmul.f32 %v454, %v446
  %v457 = vmin.f32 %v455, 0.0
  %v458 = vmin.f32 %v456, 0.0
  %v459 = vand.u32 2147483647, %v455
  %v460 = vand.u32 2147483647, %v456
  %v461 = vsub.f32 0.0, %v459
  %v462 = vsub.f32 0.0, %v460
  %v463 = vmul.f32 %v461, 1.442695
  %v464 = vpow.pop %v463
  %v465 = vmul.f32 %v462, 1.442695
  %v466 = vpow.pop %v465
  %v467 = vadd.f32 %v464, 1.0
  %v468 = vadd.f32 %v466, 1.0
  %v469 = vlog2.pop %v467
  %v470 = vmul.f32 %v469, 0.6931472
  %v471 = vlog2.pop %v468
  %v472 = vmul.f32 %v471, 0.6931472
  %v473 = vsub.f32 %v457, %v470
  %v474 = vsub.f32 %v458, %v472
  %v475 = vsel %vm451, %v473, 0.0
  %v476 = vsel %vm452, %v474, 0.0
  %v477 = vsel %vm69, %v475, 0.0
  %v478 = vsel %vm69, %v476, 0.0
  %v479 = vadd.f32 %v477, %v478
  %480 = vadd.xlane.f32.xlu0 %v479
  %v481 = vpop.xlane.xlu0 %480
  %v482 = vrot.slane %v481, 4
  %v483 = vadd.f32 %v481, %v482
  %v484 = vrot.slane %v483, 2
  %v485 = vadd.f32 %v483, %v484
  %v486 = vrot.slane %v485, 1
  %v487 = vadd.f32 %v485, %v486
  %s488 = vtos %v487
  %v489 = vstv %s488
  %vm490 = vcmp.ge.s32.totalorder %v449, 8
  %vm491 = vcmp.ge.s32.totalorder %v450, 8
  %v492 = vsel %vm490, %v473, 0.0
  %v493 = vsel %vm491, %v474, 0.0
  %v494 = vsel %vm69, %v492, 0.0
  %v495 = vsel %vm69, %v493, 0.0
  %v496 = vadd.f32 %v494, %v495
  %497 = vadd.xlane.f32.xlu0 %v496
  %v498 = vpop.xlane.xlu0 %497
  %v499 = vrot.slane %v498, 4
  %v500 = vadd.f32 %v498, %v499
  %v501 = vrot.slane %v500, 2
  %v502 = vadd.f32 %v500, %v501
  %v503 = vrot.slane %v502, 1
  %v504 = vadd.f32 %v502, %v503
  %s505 = vtos %v504
  %v506 = vstv %s505
  %v507 = vsel %vm69, %v489, %v506
  %vm508 = vcmask 8192
  %509 = vst.msk [vmem:[%s16] sm:$0x1] %vm508, %v507
  // Predicated region
  $region62: #{_forward_core.4} parent=0 // pred_check
    _
  $region63: #{_forward_core.4} parent=0 // pred_check_branch
    %511 = sbr.rel (0) target = $region65
  $region64: #{_forward_core.4} parent=0 // pred_region
    _
  $region65: #{_forward_core.4} parent=0 // pred_fallthru
    _
  // Predicated region
  $region66: #{_forward_core.4} parent=0 // pred_check
    _
  $region67: #{_forward_core.4} parent=0 // pred_check_branch
    %513 = sbr.rel (0) target = $region69
  $region68: #{_forward_core.4} parent=0 // pred_region
    _
  $region69: #{_forward_core.4} parent=0 // pred_fallthru
    _
  // Predicated region
  $region70: #{_forward_core.4} parent=0 // pred_check
    _
  $region71: #{_forward_core.4} parent=0 // pred_check_branch
    %515 = sbr.rel (0) target = $region73
  $region72: #{_forward_core.4} parent=0 // pred_region
    _
  $region73: #{_forward_core.4} parent=0 // pred_fallthru
    _
  // Predicated region
  $region74: #{_forward_core.4} parent=0 // pred_check
    _
  $region75: #{_forward_core.4} parent=0 // pred_check_branch
    %517 = sbr.rel (0) target = $region77
  $region76: #{_forward_core.4} parent=0 // pred_region
    _
  $region77: #{_forward_core.4} parent=0 // pred_fallthru
    _

// kernel: _forward_core.3
$region0: #{_forward_core.3}
  #allocation0 [shape = 'u32[]', space=smem, size = 0x4, offset = 0x4, fixed_abs, tag = 'smem constant byte address 0x4 - core index']
  #allocation1 [shape = 'u32[72,128]{1,0:T(1,128)}', space=vmem, size = 0x9000, scoped, tag = 'internal scratch']
  #allocation2 [shape = 'f32[192,96]{1,0:T(8,128)}', space=vmem, size = 0x18000, scoped, tag = 'scratch operand']
  %s0 = inlined_call_operand.vmem [shape: s32[384,1], index: 0, kind: input, shape index: {}]
  %s1 = inlined_call_operand.vmem [shape: f32[48,1], index: 1, kind: input, shape index: {}]
  %s2 = inlined_call_operand.vmem [shape: f32[52,16], index: 2, kind: input, shape index: {}]
  %s3 = inlined_call_operand.vmem [shape: bf16[16,96], index: 3, kind: input, shape index: {}]
  %s4 = inlined_call_operand.vmem [shape: bf16[32,96], index: 4, kind: input, shape index: {}]
  %s5 = inlined_call_operand.vmem [shape: f32[1,96], index: 5, kind: input, shape index: {}]
  %s6 = inlined_call_operand.vmem [shape: f32[1,32], index: 6, kind: input, shape index: {}]
  %s7 = inlined_call_operand.vmem [shape: f32[48,32], index: 7, kind: output, shape index: {}]
  %s8 = sld [smem:[#allocation0]]
  $region61: #{_forward_core.3} parent=0
    _
  %s10 = ssub.s32 1, %s8
  %s11 = scalar_select 0, %s10, %s8
  loop: start=0, step=1, limit=4
  $region2: #{_forward_core.3} parent=0 // loop_pre_header
    _
  $region3: #{_forward_core.3} parent=0 // loop_header
    %s13 = sphi 0, %s17
    %p14 = scmp.ge.s32.totalorder %s13, 4
    %s23 = sphi 0, %s25
    %s26 = sphi 0, %s23
    %s27 = sphi 0, %s26
    %s43 = sphi 0, %s27
    %s49 = sphi 0, %s51
    %s52 = sphi 0, %s49
    %s53 = sphi 0, %s52
    %s69 = sphi 0, %s53
    %s73 = sphi 0, %s73
    %s75 = sphi 0, %s73
    %s76 = sphi 0, %s75
    %s90 = sphi 0, %s76
    %s94 = sphi 0, %s94
    %s96 = sphi 0, %s94
    %s97 = sphi 0, %s96
    %s111 = sphi 0, %s97
    %s115 = sphi 0, %s115
    %s117 = sphi 0, %s115
    %s118 = sphi 0, %s117
    %s132 = sphi 0, %s118
    %s136 = sphi 0, %s136
    %s138 = sphi 0, %s136
    %s139 = sphi 0, %s138
    %s153 = sphi 0, %s139
    %s157 = sphi 0, %s157
    %s159 = sphi 0, %s157
    %s160 = sphi 0, %s159
    %s174 = sphi 0, %s160
    %s180 = sphi 0, %s182
    %s183 = sphi 0, %s180
    %s184 = sphi 0, %s183
    %s200 = sphi 0, %s184
  $region4: #{_forward_core.3} parent=0 // loop_header_branch
    %16 = sbr.rel (%p14) target = $region8
  $region5: #{_forward_core.3} parent=0 // loop_body
    %s18 = ssub.s32 %s13, 1
    %s19 = ssub.s32 %s13, 2
    %s20 = sadd.s32 %s13, 1
    %s21 = ssub.s32 %s13, %s20
    %p22 = scmp.eq.s32.totalorder %s21, 0
    %s24 = sadd.s32 %s23, 1
    %s25 = scalar_select %p22, %s23, %s24
    %p28 = pneg %p22
    %p29 = scmp.eq.s32.totalorder %s13, 1
    %p30 = por %p28, %p29
    %p31 = scmp.ne.s32.totalorder %s23, %s26
    %p32 = scmp.eq.s32.totalorder %s13, 0
    %p33 = por %p31, %p32
    %p34 = scmp.ne.s32.totalorder %s23, %s26
    %p35 = scmp.eq.s32.totalorder %s18, 1
    %p36 = por %p34, %p35
    %p37 = scmp.ne.s32.totalorder %s26, %s27
    %p38 = scmp.eq.s32.totalorder %s18, 0
    %p39 = por %p37, %p38
    %p40 = scmp.ne.s32.totalorder %s26, %s27
    %p41 = scmp.eq.s32.totalorder %s19, 1
    %p42 = por %p40, %p41
    %p44 = scmp.ne.s32.totalorder %s27, %s43
    %p45 = scmp.eq.s32.totalorder %s19, 0
    %p46 = por %p44, %p45
    %s47 = ssub.s32 %s13, %s20
    %p48 = scmp.eq.s32.totalorder %s47, 0
    %s50 = sadd.s32 %s49, 1
    %s51 = scalar_select %p48, %s49, %s50
    %p54 = pneg %p48
    %p55 = scmp.eq.s32.totalorder %s13, 1
    %p56 = por %p54, %p55
    %p57 = scmp.ne.s32.totalorder %s49, %s52
    %p58 = scmp.eq.s32.totalorder %s13, 0
    %p59 = por %p57, %p58
    %p60 = scmp.ne.s32.totalorder %s49, %s52
    %p61 = scmp.eq.s32.totalorder %s18, 1
    %p62 = por %p60, %p61
    %p63 = scmp.ne.s32.totalorder %s52, %s53
    %p64 = scmp.eq.s32.totalorder %s18, 0
    %p65 = por %p63, %p64
    %p66 = scmp.ne.s32.totalorder %s52, %s53
    %p67 = scmp.eq.s32.totalorder %s19, 1
    %p68 = por %p66, %p67
    %p70 = scmp.ne.s32.totalorder %s53, %s69
    %p71 = scmp.eq.s32.totalorder %s19, 0
    %p72 = por %p70, %p71
    %s74 = sadd.s32 %s73, 1
    %p77 = scmp.eq.s32.totalorder %s13, 1
    %p78 = scmp.ne.s32.totalorder %s73, %s75
    %p79 = scmp.eq.s32.totalorder %s13, 0
    %p80 = por %p78, %p79
    %p81 = scmp.ne.s32.totalorder %s73, %s75
    %p82 = scmp.eq.s32.totalorder %s18, 1
    %p83 = por %p81, %p82
    %p84 = scmp.ne.s32.totalorder %s75, %s76
    %p85 = scmp.eq.s32.totalorder %s18, 0
    %p86 = por %p84, %p85
    %p87 = scmp.ne.s32.totalorder %s75, %s76
    %p88 = scmp.eq.s32.totalorder %s19, 1
    %p89 = por %p87, %p88
    %p91 = scmp.ne.s32.totalorder %s76, %s90
    %p92 = scmp.eq.s32.totalorder %s19, 0
    %p93 = por %p91, %p92
    %s95 = sadd.s32 %s94, 1
    %p98 = scmp.eq.s32.totalorder %s13, 1
    %p99 = scmp.ne.s32.totalorder %s94, %s96
    %p100 = scmp.eq.s32.totalorder %s13, 0
    %p101 = por %p99, %p100
    %p102 = scmp.ne.s32.totalorder %s94, %s96
    %p103 = scmp.eq.s32.totalorder %s18, 1
    %p104 = por %p102, %p103
    %p105 = scmp.ne.s32.totalorder %s96, %s97
    %p106 = scmp.eq.s32.totalorder %s18, 0
    %p107 = por %p105, %p106
    %p108 = scmp.ne.s32.totalorder %s96, %s97
    %p109 = scmp.eq.s32.totalorder %s19, 1
    %p110 = por %p108, %p109
    %p112 = scmp.ne.s32.totalorder %s97, %s111
    %p113 = scmp.eq.s32.totalorder %s19, 0
    %p114 = por %p112, %p113
    %s116 = sadd.s32 %s115, 1
    %p119 = scmp.eq.s32.totalorder %s13, 1
    %p120 = scmp.ne.s32.totalorder %s115, %s117
    %p121 = scmp.eq.s32.totalorder %s13, 0
    %p122 = por %p120, %p121
    %p123 = scmp.ne.s32.totalorder %s115, %s117
    %p124 = scmp.eq.s32.totalorder %s18, 1
    %p125 = por %p123, %p124
    %p126 = scmp.ne.s32.totalorder %s117, %s118
    %p127 = scmp.eq.s32.totalorder %s18, 0
    %p128 = por %p126, %p127
    %p129 = scmp.ne.s32.totalorder %s117, %s118
    %p130 = scmp.eq.s32.totalorder %s19, 1
    %p131 = por %p129, %p130
    %p133 = scmp.ne.s32.totalorder %s118, %s132
    %p134 = scmp.eq.s32.totalorder %s19, 0
    %p135 = por %p133, %p134
    %s137 = sadd.s32 %s136, 1
    %p140 = scmp.eq.s32.totalorder %s13, 1
    %p141 = scmp.ne.s32.totalorder %s136, %s138
    %p142 = scmp.eq.s32.totalorder %s13, 0
    %p143 = por %p141, %p142
    %p144 = scmp.ne.s32.totalorder %s136, %s138
    %p145 = scmp.eq.s32.totalorder %s18, 1
    %p146 = por %p144, %p145
    %p147 = scmp.ne.s32.totalorder %s138, %s139
    %p148 = scmp.eq.s32.totalorder %s18, 0
    %p149 = por %p147, %p148
    %p150 = scmp.ne.s32.totalorder %s138, %s139
    %p151 = scmp.eq.s32.totalorder %s19, 1
    %p152 = por %p150, %p151
    %p154 = scmp.ne.s32.totalorder %s139, %s153
    %p155 = scmp.eq.s32.totalorder %s19, 0
    %p156 = por %p154, %p155
    %s158 = sadd.s32 %s157, 1
    %p161 = scmp.eq.s32.totalorder %s13, 1
    %p162 = scmp.ne.s32.totalorder %s157, %s159
    %p163 = scmp.eq.s32.totalorder %s13, 0
    %p164 = por %p162, %p163
    %p165 = scmp.ne.s32.totalorder %s157, %s159
    %p166 = scmp.eq.s32.totalorder %s18, 1
    %p167 = por %p165, %p166
    %p168 = scmp.ne.s32.totalorder %s159, %s160
    %p169 = scmp.eq.s32.totalorder %s18, 0
    %p170 = por %p168, %p169
    %p171 = scmp.ne.s32.totalorder %s159, %s160
    %p172 = scmp.eq.s32.totalorder %s19, 1
    %p173 = por %p171, %p172
    %p175 = scmp.ne.s32.totalorder %s160, %s174
    %p176 = scmp.eq.s32.totalorder %s19, 0
    %p177 = por %p175, %p176
    %s178 = ssub.s32 %s13, %s20
    %p179 = scmp.eq.s32.totalorder %s178, 0
    %s181 = sadd.s32 %s180, 1
    %s182 = scalar_select %p179, %s180, %s181
    %p185 = pneg %p179
    %p186 = scmp.eq.s32.totalorder %s13, 1
    %p187 = por %p185, %p186
    %p188 = scmp.ne.s32.totalorder %s180, %s183
    %p189 = scmp.eq.s32.totalorder %s13, 0
    %p190 = por %p188, %p189
    %p191 = scmp.ne.s32.totalorder %s180, %s183
    %p192 = scmp.eq.s32.totalorder %s18, 1
    %p193 = por %p191, %p192
    %p194 = scmp.ne.s32.totalorder %s183, %s184
    %p195 = scmp.eq.s32.totalorder %s18, 0
    %p196 = por %p194, %p195
    %p197 = scmp.ne.s32.totalorder %s183, %s184
    %p198 = scmp.eq.s32.totalorder %s19, 1
    %p199 = por %p197, %p198
    %p201 = scmp.ne.s32.totalorder %s184, %s200
    %p202 = scmp.eq.s32.totalorder %s19, 0
    %p203 = por %p201, %p202
    %p204 = scmp.le.s32.totalorder 1, %s13
    %p205 = scmp.lt.s32.totalorder %s13, 3
    %p206 = pnand %p204, %p205
    %p207 = pneg %p206
    // Predicated region
    $region9: #{_forward_core.3} parent=5 // pred_check
      _
    $region10: #{_forward_core.3} parent=5 // pred_check_branch
      %209 = sbr.rel (%p206) target = $region12
    $region11: #{_forward_core.3} parent=5 // pred_region
      %s210 = ssub.s32 %s13, 1
      // Predicated region
      $region13: #{_forward_core.3} parent=11 // pred_check
        %p211 = pneg %p86
      $region14: #{_forward_core.3} parent=11 // pred_check_branch
        %213 = sbr.rel (%p211) target = $region16
      $region15: #{_forward_core.3} parent=11 // pred_region
        _
      $region16: #{_forward_core.3} parent=11 // pred_fallthru
        _
      // Predicated region
      $region17: #{_forward_core.3} parent=11 // pred_check
        %p214 = pneg %p107
      $region18: #{_forward_core.3} parent=11 // pred_check_branch
        %216 = sbr.rel (%p214) target = $region20
      $region19: #{_forward_core.3} parent=11 // pred_region
        _
      $region20: #{_forward_core.3} parent=11 // pred_fallthru
        _
      // Predicated region
      $region21: #{_forward_core.3} parent=11 // pred_check
        %p217 = pneg %p128
      $region22: #{_forward_core.3} parent=11 // pred_check_branch
        %219 = sbr.rel (%p217) target = $region24
      $region23: #{_forward_core.3} parent=11 // pred_region
        _
      $region24: #{_forward_core.3} parent=11 // pred_fallthru
        _
      // Predicated region
      $region25: #{_forward_core.3} parent=11 // pred_check
        %p220 = pneg %p149
      $region26: #{_forward_core.3} parent=11 // pred_check_branch
        %222 = sbr.rel (%p220) target = $region28
      $region27: #{_forward_core.3} parent=11 // pred_region
        _
      $region28: #{_forward_core.3} parent=11 // pred_fallthru
        _
      // Predicated region
      $region29: #{_forward_core.3} parent=11 // pred_check
        %p223 = pneg %p170
      $region30: #{_forward_core.3} parent=11 // pred_check_branch
        %225 = sbr.rel (%p223) target = $region32
      $region31: #{_forward_core.3} parent=11 // pred_region
        _
      $region32: #{_forward_core.3} parent=11 // pred_fallthru
        _
    $region12: #{_forward_core.3} parent=5 // pred_fallthru
      _
    %p226 = scmp.lt.s32.totalorder %s13, 2
    // Predicated region
    $region33: #{_forward_core.3} parent=5 // pred_check
      %p227 = pneg %p226
    $region34: #{_forward_core.3} parent=5 // pred_check_branch
      %229 = sbr.rel (%p227) target = $region36
    $region35: #{_forward_core.3} parent=5 // pred_region
      // Predicated region
      $region37: #{_forward_core.3} parent=35 // pred_check
        %p230 = pneg %p33
      $region38: #{_forward_core.3} parent=35 // pred_check_branch
        %232 = sbr.rel (%p230) target = $region40
      $region39: #{_forward_core.3} parent=35 // pred_region
        %s233 = smul.u32 24, %s13
        %p234 = scmp.lt.s32.totalorder %s233, 47
        %s235 = scalar_select %p234, %s233, 47
        %s236 = smul.addr %s235, 8
        %s237 = scalar_lea.vmem %s0, %s236
        %s238 = smul.u32 24, %s13
      $region40: #{_forward_core.3} parent=35 // pred_fallthru
        _
      // Predicated region
      $region41: #{_forward_core.3} parent=35 // pred_check
        %p239 = pneg %p59
      $region42: #{_forward_core.3} parent=35 // pred_check_branch
        %241 = sbr.rel (%p239) target = $region44
      $region43: #{_forward_core.3} parent=35 // pred_region
        %s242 = smul.u32 3, %s13
        %p243 = scmp.lt.s32.totalorder %s242, 5
        %s244 = scalar_select %p243, %s242, 5
        %s245 = smul.addr %s244, 8
        %s246 = scalar_lea.vmem %s1, %s245
        %s247 = smul.u32 3, %s13
      $region44: #{_forward_core.3} parent=35 // pred_fallthru
        _
    $region36: #{_forward_core.3} parent=5 // pred_fallthru
      _
    %p248 = scmp.le.s32.totalorder 1, %s13
    %p249 = scmp.lt.s32.totalorder %s13, 3
    %p250 = pnand %p248, %p249
    %p251 = pneg %p250
    // Predicated region
    $region45: #{_forward_core.3} parent=5 // pred_check
      _
    $region46: #{_forward_core.3} parent=5 // pred_check_branch
      %253 = sbr.rel (%p250) target = $region48
    $region47: #{_forward_core.3} parent=5 // pred_region
      %s254 = ssub.s32 %s13, 1
      %s255 = smul.u32 24, %s18
      %p256 = scmp.lt.s32.totalorder %s255, 47
      %s257 = scalar_select %p256, %s255, 47
      %s258 = smul.addr %s257, 8
      %s259 = scalar_lea.vmem %s0, %s258
      %p260 = pneg %p39
      %p261 = pneg %p36
      %s262 = smul.u32 3, %s18
      %p263 = scmp.lt.s32.totalorder %s262, 5
      %s264 = scalar_select %p263, %s262, 5
      %s265 = smul.addr %s264, 8
      %s266 = scalar_lea.vmem %s1, %s265
      %p267 = pneg %p65
      %p268 = pneg %p62
      %p269 = pneg %p86
      %p270 = pneg %p83
      %p271 = pneg %p107
      %p272 = pneg %p104
      %p273 = pneg %p128
      %p274 = pneg %p125
      %p275 = pneg %p149
      %p276 = pneg %p146
      %p277 = pneg %p170
      %p278 = pneg %p167
      %p279 = pneg %p196
      %p280 = pneg %p193
      %s281 = smul.u32 3, %s18
      %p282 = scmp.lt.s32.totalorder %s281, 5
      %s283 = scalar_select %p282, %s281, 5
      %s284 = smul.addr %s283, 8
      %s285 = scalar_lea.vmem %s7, %s284
      %s286 = smul.u32 24, %s18
      %p287 = scmp.lt.s32.totalorder %s286, 47
      %s288 = scalar_select %p287, %s286, 47
      %s289 = smul.addr %s288, 8
      %s290 = scalar_lea.vmem %s0, %s289
      %s291 = smul.u32 24, %s18
      %s292 = smul.u32 3, %s18
      %p293 = scmp.lt.s32.totalorder %s292, 5
      %s294 = scalar_select %p293, %s292, 5
      %s295 = smul.addr %s294, 8
      %s296 = scalar_lea.vmem %s1, %s295
      %s297 = smul.u32 3, %s18
      %s298 = smul.u32 3, %s18
      %p299 = scmp.lt.s32.totalorder %s298, 5
      %s300 = scalar_select %p299, %s298, 5
      %s301 = smul.addr %s300, 8
      %s302 = scalar_lea.vmem %s7, %s301
      %s303 = smul.u32 3, %s18
      %v305 = vld [vmem:[%s290] sm:$0xff]
      %v306 = vld [vmem:[%s290 + $0x8] sm:$0xff]
      %v307 = vld [vmem:[%s290 + $0x10] sm:$0xff]
      %v308 = vld [vmem:[%s290 + $0x18] sm:$0xff]
      %v309 = vld [vmem:[%s290 + $0x20] sm:$0xff]
      %v310 = vld [vmem:[%s290 + $0x28] sm:$0xff]
      %v311 = vld [vmem:[%s290 + $0x30] sm:$0xff]
      %v312 = vld [vmem:[%s290 + $0x38] sm:$0xff]
      %v313 = vld [vmem:[%s290 + $0x40] sm:$0xff]
      %v314 = vld [vmem:[%s290 + $0x48] sm:$0xff]
      %v315 = vld [vmem:[%s290 + $0x50] sm:$0xff]
      %v316 = vld [vmem:[%s290 + $0x58] sm:$0xff]
      %v317 = vld [vmem:[%s290 + $0x60] sm:$0xff]
      %v318 = vld [vmem:[%s290 + $0x68] sm:$0xff]
      %v319 = vld [vmem:[%s290 + $0x70] sm:$0xff]
      %v320 = vld [vmem:[%s290 + $0x78] sm:$0xff]
      %v321 = vld [vmem:[%s290 + $0x80] sm:$0xff]
      %v322 = vld [vmem:[%s290 + $0x88] sm:$0xff]
      %v323 = vld [vmem:[%s290 + $0x90] sm:$0xff]
      %v324 = vld [vmem:[%s290 + $0x98] sm:$0xff]
      %v325 = vld [vmem:[%s290 + $0xa0] sm:$0xff]
      %v326 = vld [vmem:[%s290 + $0xa8] sm:$0xff]
      %v327 = vld [vmem:[%s290 + $0xb0] sm:$0xff]
      %v328 = vld [vmem:[%s290 + $0xb8] sm:$0xff]
      %v329 = vlaneseq
      %v330 = vand.u32 %v329, 127
      %331 = vset.pattern.permute.xlu0 0
      %332 = vperm.xlu0 %331, %v305
      %v333 = vpop.permute.xlu0 %332
      %334 = vset.pattern.permute.xlu0 0
      %335 = vperm.xlu0 %334, %v306
      %v336 = vpop.permute.xlu0 %335
      %337 = vset.pattern.permute.xlu0 0
      %338 = vperm.xlu0 %337, %v307
      %v339 = vpop.permute.xlu0 %338
      %340 = vset.pattern.permute.xlu0 0
      %341 = vperm.xlu0 %340, %v308
      %v342 = vpop.permute.xlu0 %341
      %343 = vset.pattern.permute.xlu0 0
      %344 = vperm.xlu0 %343, %v309
      %v345 = vpop.permute.xlu0 %344
      %346 = vset.pattern.permute.xlu0 0
      %347 = vperm.xlu0 %346, %v310
      %v348 = vpop.permute.xlu0 %347
      %349 = vset.pattern.permute.xlu0 0
      %350 = vperm.xlu0 %349, %v311
      %v351 = vpop.permute.xlu0 %350
      %352 = vset.pattern.permute.xlu0 0
      %353 = vperm.xlu0 %352, %v312
      %v354 = vpop.permute.xlu0 %353
      %355 = vset.pattern.permute.xlu0 0
      %356 = vperm.xlu0 %355, %v313
      %v357 = vpop.permute.xlu0 %356
      %358 = vset.pattern.permute.xlu0 0
      %359 = vperm.xlu0 %358, %v314
      %v360 = vpop.permute.xlu0 %359
      %361 = vset.pattern.permute.xlu0 0
      %362 = vperm.xlu0 %361, %v315
      %v363 = vpop.permute.xlu0 %362
      %364 = vset.pattern.permute.xlu0 0
      %365 = vperm.xlu0 %364, %v316
      %v366 = vpop.permute.xlu0 %365
      %367 = vset.pattern.permute.xlu0 0
      %368 = vperm.xlu0 %367, %v317
      %v369 = vpop.permute.xlu0 %368
      %370 = vset.pattern.permute.xlu0 0
      %371 = vperm.xlu0 %370, %v318
      %v372 = vpop.permute.xlu0 %371
      %373 = vset.pattern.permute.xlu0 0
      %374 = vperm.xlu0 %373, %v319
      %v375 = vpop.permute.xlu0 %374
      %376 = vset.pattern.permute.xlu0 0
      %377 = vperm.xlu0 %376, %v320
      %v378 = vpop.permute.xlu0 %377
      %379 = vset.pattern.permute.xlu0 0
      %380 = vperm.xlu0 %379, %v321
      %v381 = vpop.permute.xlu0 %380
      %382 = vset.pattern.permute.xlu0 0
      %383 = vperm.xlu0 %382, %v322
      %v384 = vpop.permute.xlu0 %383
      %385 = vset.pattern.permute.xlu0 0
      %386 = vperm.xlu0 %385, %v323
      %v387 = vpop.permute.xlu0 %386
      %388 = vset.pattern.permute.xlu0 0
      %389 = vperm.xlu0 %388, %v324
      %v390 = vpop.permute.xlu0 %389
      %391 = vset.pattern.permute.xlu0 0
      %392 = vperm.xlu0 %391, %v325
      %v393 = vpop.permute.xlu0 %392
      %394 = vset.pattern.permute.xlu0 0
      %395 = vperm.xlu0 %394, %v326
      %v396 = vpop.permute.xlu0 %395
      %397 = vset.pattern.permute.xlu0 0
      %398 = vperm.xlu0 %397, %v327
      %v399 = vpop.permute.xlu0 %398
      %400 = vset.pattern.permute.xlu0 0
      %401 = vperm.xlu0 %400, %v328
      %v402 = vpop.permute.xlu0 %401
      %vm403 = vcmp.eq.s32.totalorder %v333, %v330
      %vm404 = vcmp.eq.s32.totalorder %v336, %v330
      %vm405 = vcmp.eq.s32.totalorder %v339, %v330
      %vm406 = vcmp.eq.s32.totalorder %v342, %v330
      %vm407 = vcmp.eq.s32.totalorder %v345, %v330
      %vm408 = vcmp.eq.s32.totalorder %v348, %v330
      %vm409 = vcmp.eq.s32.totalorder %v351, %v330
      %vm410 = vcmp.eq.s32.totalorder %v354, %v330
      %vm411 = vcmp.eq.s32.totalorder %v357, %v330
      %vm412 = vcmp.eq.s32.totalorder %v360, %v330
      %vm413 = vcmp.eq.s32.totalorder %v363, %v330
      %vm414 = vcmp.eq.s32.totalorder %v366, %v330
      %vm415 = vcmp.eq.s32.totalorder %v369, %v330
      %vm416 = vcmp.eq.s32.totalorder %v372, %v330
      %vm417 = vcmp.eq.s32.totalorder %v375, %v330
      %vm418 = vcmp.eq.s32.totalorder %v378, %v330
      %vm419 = vcmp.eq.s32.totalorder %v381, %v330
      %vm420 = vcmp.eq.s32.totalorder %v384, %v330
      %vm421 = vcmp.eq.s32.totalorder %v387, %v330
      %vm422 = vcmp.eq.s32.totalorder %v390, %v330
      %vm423 = vcmp.eq.s32.totalorder %v393, %v330
      %vm424 = vcmp.eq.s32.totalorder %v396, %v330
      %vm425 = vcmp.eq.s32.totalorder %v399, %v330
      %vm426 = vcmp.eq.s32.totalorder %v402, %v330
      %v427 = vsel %vm403, 1, 0
      %v428 = vsel %vm404, 1, 0
      %v429 = vsel %vm405, 1, 0
      %v430 = vsel %vm406, 1, 0
      %v431 = vsel %vm407, 1, 0
      %v432 = vsel %vm408, 1, 0
      %v433 = vsel %vm409, 1, 0
      %v434 = vsel %vm410, 1, 0
      %v435 = vsel %vm411, 1, 0
      %v436 = vsel %vm412, 1, 0
      %v437 = vsel %vm413, 1, 0
      %v438 = vsel %vm414, 1, 0
      %v439 = vsel %vm415, 1, 0
      %v440 = vsel %vm416, 1, 0
      %v441 = vsel %vm417, 1, 0
      %v442 = vsel %vm418, 1, 0
      %v443 = vsel %vm419, 1, 0
      %v444 = vsel %vm420, 1, 0
      %v445 = vsel %vm421, 1, 0
      %v446 = vsel %vm422, 1, 0
      %v447 = vsel %vm423, 1, 0
      %v448 = vsel %vm424, 1, 0
      %v449 = vsel %vm425, 1, 0
      %v450 = vsel %vm426, 1, 0
      %v451 = vcvt.s32.f32 %v427
      %v452 = vcvt.s32.f32 %v428
      %v453 = vcvt.s32.f32 %v429
      %v454 = vcvt.s32.f32 %v430
      %v455 = vcvt.s32.f32 %v431
      %v456 = vcvt.s32.f32 %v432
      %v457 = vcvt.s32.f32 %v433
      %v458 = vcvt.s32.f32 %v434
      %v459 = vcvt.s32.f32 %v435
      %v460 = vcvt.s32.f32 %v436
      %v461 = vcvt.s32.f32 %v437
      %v462 = vcvt.s32.f32 %v438
      %v463 = vcvt.s32.f32 %v439
      %v464 = vcvt.s32.f32 %v440
      %v465 = vcvt.s32.f32 %v441
      %v466 = vcvt.s32.f32 %v442
      %v467 = vcvt.s32.f32 %v443
      %v468 = vcvt.s32.f32 %v444
      %v469 = vcvt.s32.f32 %v445
      %v470 = vcvt.s32.f32 %v446
      %v471 = vcvt.s32.f32 %v447
      %v472 = vcvt.s32.f32 %v448
      %v473 = vcvt.s32.f32 %v449
      %v474 = vcvt.s32.f32 %v450
      %v475 = vld [vmem:[%s2] sm:$0xff]
      %v476 = vld [vmem:[%s2 + $0x8] sm:$0xff]
      %v477 = vld [vmem:[%s2 + $0x10] sm:$0xff]
      %v478 = vld [vmem:[%s2 + $0x18] sm:$0xff]
      %v479 = vld [vmem:[%s2 + $0x20] sm:$0xff]
      %v480 = vld [vmem:[%s2 + $0x28] sm:$0xff]
      %v481 = vld [vmem:[%s2 + $0x30] sm:$0xf]
      %vm482 = vcmask 424960
      %v484 = vsel %vm482, %v451, 0
      %v487 = vsel %vm482, %v452, 0
      %v490 = vsel %vm482, %v453, 0
      %v493 = vsel %vm482, %v454, 0
      %v496 = vsel %vm482, %v455, 0
      %v499 = vsel %vm482, %v456, 0
      %v502 = vsel %vm482, %v457, 0
      %v505 = vsel %vm482, %v458, 0
      %v508 = vsel %vm482, %v459, 0
      %v511 = vsel %vm482, %v460, 0
      %v514 = vsel %vm482, %v461, 0
      %v517 = vsel %vm482, %v462, 0
      %v520 = vsel %vm482, %v463, 0
      %v523 = vsel %vm482, %v464, 0
      %v526 = vsel %vm482, %v465, 0
      %v529 = vsel %vm482, %v466, 0
      %v532 = vsel %vm482, %v467, 0
      %v535 = vsel %vm482, %v468, 0
      %v538 = vsel %vm482, %v469, 0
      %v541 = vsel %vm482, %v470, 0
      %v544 = vsel %vm482, %v471, 0
      %v547 = vsel %vm482, %v472, 0
      %v550 = vsel %vm482, %v473, 0
      %v553 = vsel %vm482, %v474, 0
      %vm555 = vcmask 1043456
      %v557 = vsel %vm555, %v481, 0
      %559 = vmatpush.msra.mxu0 0.0
      %560 = vmatpush.msra.mxu0 0.0
      %561 = vmatpush.msra.mxu0 0.0
      %562 = vmatpush.msra.mxu0 0.0
      %563 = vmatpush.msra.mxu0 0.0
      %564 = vmatpush.msra.mxu0 0.0
      %565 = vmatpush.msra.mxu0 0.0
      %566 = vmatpush.msra.mxu0 0.0
      %567 = vmatpush.msra.mxu0 0.0
      %568 = vmatpush.msra.mxu0 %v557
      %569 = vmatpush.msra.mxu0 %v480
      %570 = vmatpush.msra.mxu0 %v479
      %571 = vmatpush.msra.mxu0 %v478
      %572 = vmatpush.msra.mxu0 %v477
      %573 = vmatpush.msra.mxu0 %v476
      %574 = vmatpush.msra.mxu0 %v475
      %575 = vmatmul.f32.gmra.mxu0 %v484
      %v576 = vpop.f32.mrf.mxu0
      %v577 = vadd.f32 0.0, %v576
      %578 = vmatmul.f32.gmra.mxu0 %v487
      %v579 = vpop.f32.mrf.mxu0
      %v580 = vadd.f32 0.0, %v579
      %581 = vmatmul.f32.gmra.mxu0 %v490
      %v582 = vpop.f32.mrf.mxu0
      %v583 = vadd.f32 0.0, %v582
      %584 = vmatmul.f32.gmra.mxu0 %v493
      %v585 = vpop.f32.mrf.mxu0
      %v586 = vadd.f32 0.0, %v585
      %587 = vmatmul.f32.gmra.mxu0 %v496
      %v588 = vpop.f32.mrf.mxu0
      %v589 = vadd.f32 0.0, %v588
      %590 = vmatmul.f32.gmra.mxu0 %v499
      %v591 = vpop.f32.mrf.mxu0
      %v592 = vadd.f32 0.0, %v591
      %593 = vmatmul.f32.gmra.mxu0 %v502
      %v594 = vpop.f32.mrf.mxu0
      %v595 = vadd.f32 0.0, %v594
      %596 = vmatmul.f32.gmra.mxu0 %v505
      %v597 = vpop.f32.mrf.mxu0
      %v598 = vadd.f32 0.0, %v597
      %599 = vmatmul.f32.gmra.mxu0 %v508
      %v600 = vpop.f32.mrf.mxu0
      %v601 = vadd.f32 0.0, %v600
      %602 = vmatmul.f32.gmra.mxu0 %v511
      %v603 = vpop.f32.mrf.mxu0
      %v604 = vadd.f32 0.0, %v603
      %605 = vmatmul.f32.gmra.mxu0 %v514
      %v606 = vpop.f32.mrf.mxu0
      %v607 = vadd.f32 0.0, %v606
      %608 = vmatmul.f32.gmra.mxu0 %v517
      %v609 = vpop.f32.mrf.mxu0
      %v610 = vadd.f32 0.0, %v609
      %611 = vmatmul.f32.gmra.mxu0 %v520
      %v612 = vpop.f32.mrf.mxu0
      %v613 = vadd.f32 0.0, %v612
      %614 = vmatmul.f32.gmra.mxu0 %v523
      %v615 = vpop.f32.mrf.mxu0
      %v616 = vadd.f32 0.0, %v615
      %617 = vmatmul.f32.gmra.mxu0 %v526
      %v618 = vpop.f32.mrf.mxu0
      %v619 = vadd.f32 0.0, %v618
      %620 = vmatmul.f32.gmra.mxu0 %v529
      %v621 = vpop.f32.mrf.mxu0
      %v622 = vadd.f32 0.0, %v621
      %623 = vmatmul.f32.gmra.mxu0 %v532
      %v624 = vpop.f32.mrf.mxu0
      %v625 = vadd.f32 0.0, %v624
      %626 = vmatmul.f32.gmra.mxu0 %v535
      %v627 = vpop.f32.mrf.mxu0
      %v628 = vadd.f32 0.0, %v627
      %629 = vmatmul.f32.gmra.mxu0 %v538
      %v630 = vpop.f32.mrf.mxu0
      %v631 = vadd.f32 0.0, %v630
      %632 = vmatmul.f32.gmra.mxu0 %v541
      %v633 = vpop.f32.mrf.mxu0
      %v634 = vadd.f32 0.0, %v633
      %635 = vmatmul.f32.gmra.mxu0 %v544
      %v636 = vpop.f32.mrf.mxu0
      %v637 = vadd.f32 0.0, %v636
      %638 = vmatmul.f32.gmra.mxu0 %v547
      %v639 = vpop.f32.mrf.mxu0
      %v640 = vadd.f32 0.0, %v639
      %641 = vmatmul.f32.gmra.mxu0 %v550
      %v642 = vpop.f32.mrf.mxu0
      %v643 = vadd.f32 0.0, %v642
      %644 = vmatmul.f32.gmra.mxu0 %v553
      %v645 = vpop.f32.mrf.mxu0
      %v646 = vadd.f32 0.0, %v645
      %647 = vdwg.mxu0
      %v648 = vpack.c.bf16 %v580, %v577
      %v649 = vpack.c.bf16 %v586, %v583
      %v650 = vpack.c.bf16 %v592, %v589
      %v651 = vpack.c.bf16 %v598, %v595
      %v652 = vpack.c.bf16 %v604, %v601
      %v653 = vpack.c.bf16 %v610, %v607
      %v654 = vpack.c.bf16 %v616, %v613
      %v655 = vpack.c.bf16 %v622, %v619
      %v656 = vpack.c.bf16 %v628, %v625
      %v657 = vpack.c.bf16 %v634, %v631
      %v658 = vpack.c.bf16 %v640, %v637
      %v659 = vpack.c.bf16 %v646, %v643
      %v660 = vld [vmem:[%s3] sm:$0xf]
      %v661 = vld [vmem:[%s3 + $0x4] sm:$0xf]
      %v662 = vld [vmem:[%s5] sm:$0x1]
      %v664 = vperm.slane %v662, 0
      %v668 = vunpack.c.l.b16 %v660
      %v669 = vunpack.c.l.b16 %v661
      %v670 = vpack.c.b16 %v669, %v668
      %vm672 = vcmask 130048
      %v674 = vsel %vm672, %v648, 0
      %v677 = vsel %vm672, %v649, 0
      %v680 = vsel %vm672, %v650, 0
      %v683 = vsel %vm672, %v651, 0
      %v686 = vsel %vm672, %v652, 0
      %v689 = vsel %vm672, %v653, 0
      %v692 = vsel %vm672, %v654, 0
      %v695 = vsel %vm672, %v655, 0
      %v698 = vsel %vm672, %v656, 0
      %v701 = vsel %vm672, %v657, 0
      %v704 = vsel %vm672, %v658, 0
      %v707 = vsel %vm672, %v659, 0
      %709 = vmatpush.bf16.msra.mxu0 0
      %710 = vmatpush.bf16.msra.mxu0 0
      %711 = vmatpush.bf16.msra.mxu0 0
      %712 = vmatpush.bf16.msra.mxu0 0
      %713 = vmatpush.bf16.msra.mxu0 0
      %714 = vmatpush.bf16.msra.mxu0 0
      %715 = vmatpush.bf16.msra.mxu0 0
      %716 = vmatpush.bf16.msra.mxu0 %v670
      %717 = vmatmul.bf16.gmra.mxu0 %v674
      %v718 = vpop.f32.mrf.mxu0
      %v719 = vadd.f32 %v664, %v718
      %v720 = vpop.f32.mrf.mxu0
      %v721 = vadd.f32 %v664, %v720
      %722 = vmatmul.bf16.gmra.mxu0 %v677
      %v723 = vpop.f32.mrf.mxu0
      %v724 = vadd.f32 %v664, %v723
      %v725 = vpop.f32.mrf.mxu0
      %v726 = vadd.f32 %v664, %v725
      %727 = vmatmul.bf16.gmra.mxu0 %v680
      %v728 = vpop.f32.mrf.mxu0
      %v729 = vadd.f32 %v664, %v728
      %v730 = vpop.f32.mrf.mxu0
      %v731 = vadd.f32 %v664, %v730
      %732 = vmatmul.bf16.gmra.mxu0 %v683
      %v733 = vpop.f32.mrf.mxu0
      %v734 = vadd.f32 %v664, %v733
      %v735 = vpop.f32.mrf.mxu0
      %v736 = vadd.f32 %v664, %v735
      %737 = vmatmul.bf16.gmra.mxu0 %v686
      %v738 = vpop.f32.mrf.mxu0
      %v739 = vadd.f32 %v664, %v738
      %v740 = vpop.f32.mrf.mxu0
      %v741 = vadd.f32 %v664, %v740
      %742 = vmatmul.bf16.gmra.mxu0 %v689
      %v743 = vpop.f32.mrf.mxu0
      %v744 = vadd.f32 %v664, %v743
      %v745 = vpop.f32.mrf.mxu0
      %v746 = vadd.f32 %v664, %v745
      %747 = vmatmul.bf16.gmra.mxu0 %v692
      %v748 = vpop.f32.mrf.mxu0
      %v749 = vadd.f32 %v664, %v748
      %v750 = vpop.f32.mrf.mxu0
      %v751 = vadd.f32 %v664, %v750
      %752 = vmatmul.bf16.gmra.mxu0 %v695
      %v753 = vpop.f32.mrf.mxu0
      %v754 = vadd.f32 %v664, %v753
      %v755 = vpop.f32.mrf.mxu0
      %v756 = vadd.f32 %v664, %v755
      %757 = vmatmul.bf16.gmra.mxu0 %v698
      %v758 = vpop.f32.mrf.mxu0
      %v759 = vadd.f32 %v664, %v758
      %v760 = vpop.f32.mrf.mxu0
      %v761 = vadd.f32 %v664, %v760
      %762 = vmatmul.bf16.gmra.mxu0 %v701
      %v763 = vpop.f32.mrf.mxu0
      %v764 = vadd.f32 %v664, %v763
      %v765 = vpop.f32.mrf.mxu0
      %v766 = vadd.f32 %v664, %v765
      %767 = vmatmul.bf16.gmra.mxu0 %v704
      %v768 = vpop.f32.mrf.mxu0
      %v769 = vadd.f32 %v664, %v768
      %v770 = vpop.f32.mrf.mxu0
      %v771 = vadd.f32 %v664, %v770
      %772 = vmatmul.bf16.gmra.mxu0 %v707
      %v773 = vpop.f32.mrf.mxu0
      %v774 = vadd.f32 %v664, %v773
      %v775 = vpop.f32.mrf.mxu0
      %v776 = vadd.f32 %v664, %v775
      %777 = vdwg.mxu0
      %vm778 = vcmask 785408
      %779 = vst.msk [vmem:[#allocation2] sm:$0xff] %vm778, %v719
      %780 = vst.msk [vmem:[#allocation2 + $0x8] sm:$0xff] %vm778, %v721
      %781 = vst.msk [vmem:[#allocation2 + $0x10] sm:$0xff] %vm778, %v724
      %782 = vst.msk [vmem:[#allocation2 + $0x18] sm:$0xff] %vm778, %v726
      %783 = vst.msk [vmem:[#allocation2 + $0x20] sm:$0xff] %vm778, %v729
      %784 = vst.msk [vmem:[#allocation2 + $0x28] sm:$0xff] %vm778, %v731
      %785 = vst.msk [vmem:[#allocation2 + $0x30] sm:$0xff] %vm778, %v734
      %786 = vst.msk [vmem:[#allocation2 + $0x38] sm:$0xff] %vm778, %v736
      %787 = vst.msk [vmem:[#allocation2 + $0x40] sm:$0xff] %vm778, %v739
      %788 = vst.msk [vmem:[#allocation2 + $0x48] sm:$0xff] %vm778, %v741
      %789 = vst.msk [vmem:[#allocation2 + $0x50] sm:$0xff] %vm778, %v744
      %790 = vst.msk [vmem:[#allocation2 + $0x58] sm:$0xff] %vm778, %v746
      %791 = vst.msk [vmem:[#allocation2 + $0x60] sm:$0xff] %vm778, %v749
      %792 = vst.msk [vmem:[#allocation2 + $0x68] sm:$0xff] %vm778, %v751
      %793 = vst.msk [vmem:[#allocation2 + $0x70] sm:$0xff] %vm778, %v754
      %794 = vst.msk [vmem:[#allocation2 + $0x78] sm:$0xff] %vm778, %v756
      %795 = vst.msk [vmem:[#allocation2 + $0x80] sm:$0xff] %vm778, %v759
      %796 = vst.msk [vmem:[#allocation2 + $0x88] sm:$0xff] %vm778, %v761
      %797 = vst.msk [vmem:[#allocation2 + $0x90] sm:$0xff] %vm778, %v764
      %798 = vst.msk [vmem:[#allocation2 + $0x98] sm:$0xff] %vm778, %v766
      %799 = vst.msk [vmem:[#allocation2 + $0xa0] sm:$0xff] %vm778, %v769
      %800 = vst.msk [vmem:[#allocation2 + $0xa8] sm:$0xff] %vm778, %v771
      %801 = vst.msk [vmem:[#allocation2 + $0xb0] sm:$0xff] %vm778, %v774
      %802 = vst.msk [vmem:[#allocation2 + $0xb8] sm:$0xff] %vm778, %v776
      %v803 = vld [vmem:[%s296] sm:$0xff]
      %v804 = vld [vmem:[%s296 + $0x8] sm:$0xff]
      %v805 = vld [vmem:[%s296 + $0x10] sm:$0xff]
      %v806 = vld [vmem:[%s6] sm:$0x1]
      %v808 = vperm.slane %v806, 0
      %v810 = vadd.f32 %v808, 0.0
      %v811 = vld [vmem:[%s4] sm:$0xf]
      %v812 = vld [vmem:[%s4 + $0x4] sm:$0xf]
      %v813 = vld [vmem:[%s4 + $0x8] sm:$0xf]
      %v814 = vld [vmem:[%s4 + $0xc] sm:$0xf]
      %v815 = vld [vmem:[#allocation2] sm:$0xff]
      %v816 = vld [vmem:[#allocation2 + $0x8] sm:$0xff]
      %v817 = vld [vmem:[#allocation2 + $0x10] sm:$0xff]
      %v822 = vunpack.c.l.b16 %v811
      %v823 = vunpack.c.l.b16 %v812
      %v824 = vunpack.c.l.b16 %v813
      %v825 = vunpack.c.l.b16 %v814
      %v826 = vpack.c.b16 %v823, %v822
      %v827 = vpack.c.b16 %v825, %v824
      %vm830 = vcmask 261120
      %v832 = vsel %vm830, 0, 0
      %834 = vmatpush.bf16.msra.mxu0 0
      %835 = vmatpush.bf16.msra.mxu0 0
      %836 = vmatpush.bf16.msra.mxu0 0
      %837 = vmatpush.bf16.msra.mxu0 0
      %838 = vmatpush.bf16.msra.mxu0 0
      %839 = vmatpush.bf16.msra.mxu0 0
      %840 = vmatpush.bf16.msra.mxu0 %v827
      %841 = vmatpush.bf16.msra.mxu0 %v826
      %842 = vmatmul.bf16.gmra.mxu0 %v832
      %v843 = vpop.f32.mrf.mxu0
      %v844 = vadd.f32 0.0, %v843
      %v845 = vpop.f32.mrf.mxu0
      %v846 = vadd.f32 0.0, %v845
      %847 = vmatmul.bf16.gmra.mxu0 %v832
      %v848 = vpop.f32.mrf.mxu0
      %v849 = vadd.f32 0.0, %v848
      %v850 = vpop.f32.mrf.mxu0
      %851 = vdwg.mxu0
      %v852 = vadd.f32 %v815, %v844
      %v853 = vadd.f32 %v816, %v846
      %v854 = vadd.f32 %v817, %v849
      %v855 = vxor.u32 %v852, 2147483648
      %v856 = vxor.u32 %v853, 2147483648
      %v857 = vxor.u32 %v854, 2147483648
      %v858 = vmul.f32 %v855, 1.442695
      %v859 = vpow.pop %v858
      %v860 = vmul.f32 %v856, 1.442695
      %v861 = vpow.pop %v860
      %v862 = vmul.f32 %v857, 1.442695
      %v863 = vpow.pop %v862
      %v864 = vadd.f32 %v859, 1.0
      %v865 = vadd.f32 %v861, 1.0
      %v866 = vadd.f32 %v863, 1.0
      %v867 = vrcp.pop %v864
      %v868 = vmul.f32 %v864, %v867
      %v869 = vsub.f32 1.0, %v868
      %v870 = vmul.f32 %v867, %v869
      %v871 = vadd.f32 %v867, %v870
      %vm872 = vweird.f32 %v864
      %vm873 = vweird.f32 %v867
      %vm874 = vmor %vm872, %vm873
      %v875 = vsel %vm874, %v867, %v871
      %v876 = vand.u32 2147483647, %v864
      %vm877 = vcmp.eq.f32.partialorder %v876, 8.507059e+37
      %v878 = vand.u32 %v864, 2147483648
      %v879 = vor.u32 1.1754944e-38, %v878
      %v880 = vsel %vm877, %v879, %v875
      %v881 = vmul.f32 1.0, %v880
      %v882 = vrcp.pop %v865
      %v883 = vmul.f32 %v865, %v882
      %v884 = vsub.f32 1.0, %v883
      %v885 = vmul.f32 %v882, %v884
      %v886 = vadd.f32 %v882, %v885
      %vm887 = vweird.f32 %v865
      %vm888 = vweird.f32 %v882
      %vm889 = vmor %vm887, %vm888
      %v890 = vsel %vm889, %v882, %v886
      %v891 = vand.u32 2147483647, %v865
      %vm892 = vcmp.eq.f32.partialorder %v891, 8.507059e+37
      %v893 = vand.u32 %v865, 2147483648
      %v894 = vor.u32 1.1754944e-38, %v893
      %v895 = vsel %vm892, %v894, %v890
      %v896 = vmul.f32 1.0, %v895
      %v897 = vrcp.pop %v866
      %v898 = vmul.f32 %v866, %v897
      %v899 = vsub.f32 1.0, %v898
      %v900 = vmul.f32 %v897, %v899
      %v901 = vadd.f32 %v897, %v900
      %vm902 = vweird.f32 %v866
      %vm903 = vweird.f32 %v897
      %vm904 = vmor %vm902, %vm903
      %v905 = vsel %vm904, %v897, %v901
      %v906 = vand.u32 2147483647, %v866
      %vm907 = vcmp.eq.f32.partialorder %v906, 8.507059e+37
      %v908 = vand.u32 %v866, 2147483648
      %v909 = vor.u32 1.1754944e-38, %v908
      %v910 = vsel %vm907, %v909, %v905
      %v911 = vmul.f32 1.0, %v910
      %913 = vrot.lane.b32.xlu0 %v810, 64
      %v914 = vpop.permute.xlu0 %913
      %v916 = vadd.f32 %v844, %v914
      %v917 = vadd.f32 %v846, %v914
      %v918 = vadd.f32 %v849, %v914
      %922 = vrot.lane.b32.xlu0 %v916, 64
      %v923 = vpop.permute.xlu0 %922
      %924 = vrot.lane.b32.xlu0 %v917, 64
      %v925 = vpop.permute.xlu0 %924
      %926 = vrot.lane.b32.xlu0 %v918, 64
      %v927 = vpop.permute.xlu0 %926
      %v931 = vmul.f32 %v881, %v923
      %v932 = vmul.f32 %v896, %v925
      %v933 = vmul.f32 %v911, %v927
      %937 = vrot.lane.b32.xlu0 %v931, 64
      %v938 = vpop.permute.xlu0 %937
      %939 = vrot.lane.b32.xlu0 %v932, 64
      %v940 = vpop.permute.xlu0 %939
      %941 = vrot.lane.b32.xlu0 %v933, 64
      %v942 = vpop.permute.xlu0 %941
      %v946 = vadd.f32 %v815, %v938
      %v947 = vadd.f32 %v816, %v940
      %v948 = vadd.f32 %v817, %v942
      %v949 = vtanh.pop %v946
      %v950 = vtanh.pop %v947
      %v951 = vtanh.pop %v948
      %v952 = vsub.f32 1.0, %v881
      %v953 = vsub.f32 1.0, %v896
      %v954 = vsub.f32 1.0, %v911
      %958 = vrot.lane.b32.xlu0 %v949, 96
      %v959 = vpop.permute.xlu0 %958
      %960 = vrot.lane.b32.xlu0 %v950, 96
      %v961 = vpop.permute.xlu0 %960
      %962 = vrot.lane.b32.xlu0 %v951, 96
      %v963 = vpop.permute.xlu0 %962
      %v967 = vmul.f32 %v952, %v959
      %v968 = vmul.f32 %v953, %v961
      %v969 = vmul.f32 %v954, %v963
      %v970 = vmul.f32 %v881, 0.0
      %v971 = vmul.f32 %v896, 0.0
      %v972 = vmul.f32 %v911, 0.0
      %v973 = vadd.f32 %v967, %v970
      %v974 = vadd.f32 %v968, %v971
      %v975 = vadd.f32 %v969, %v972
      %vm976 = vcmp.gt.f32.partialorder %v803, 0.0
      %vm977 = vcmp.gt.f32.partialorder %v804, 0.0
      %vm978 = vcmp.gt.f32.partialorder %v805, 0.0
      %v979 = vsel %vm976, 1, 0
      %v980 = vsel %vm977, 1, 0
      %v981 = vsel %vm978, 1, 0
      %v982 = vcvt.s32.f32 %v979
      %v983 = vcvt.s32.f32 %v980
      %v984 = vcvt.s32.f32 %v981
      %986 = vset.pattern.permute.xlu0 0
      %987 = vperm.xlu0 %986, %v982
      %v988 = vpop.permute.xlu0 %987
      %991 = vset.pattern.permute.xlu0 0
      %992 = vperm.xlu0 %991, %v983
      %v993 = vpop.permute.xlu0 %992
      %996 = vset.pattern.permute.xlu0 0
      %997 = vperm.xlu0 %996, %v984
      %v998 = vpop.permute.xlu0 %997
      %v1000 = vmul.f32 %v988, %v973
      %v1001 = vmul.f32 %v993, %v974
      %v1002 = vmul.f32 %v998, %v975
      %v1003 = vadd.f32 %v1000, 0.0
      %v1004 = vadd.f32 %v1001, 0.0
      %v1005 = vadd.f32 %v1002, 0.0
      %v1006 = vld [vmem:[#allocation2 + $0x18] sm:$0xff]
      %v1007 = vld [vmem:[#allocation2 + $0x20] sm:$0xff]
      %v1008 = vld [vmem:[#allocation2 + $0x28] sm:$0xff]
      %v1009 = vpack.c.bf16 %v974, %v973
      %v1010 = vpack.c.bf16 %v975, %v975
      %1013 = vrot.lane.b32.xlu0 %v1009, 96
      %v1014 = vpop.permute.xlu0 %1013
      %1015 = vrot.lane.b32.xlu0 %v1010, 96
      %v1016 = vpop.permute.xlu0 %1015
      %v1018 = vsel %vm830, %v1014, 0
      %v1021 = vsel %vm830, %v1016, 0
      %1023 = vmatpush.bf16.msra.mxu0 0
      %1024 = vmatpush.bf16.msra.mxu0 0
      %1025 = vmatpush.bf16.msra.mxu0 0
      %1026 = vmatpush.bf16.msra.mxu0 0
      %1027 = vmatpush.bf16.msra.mxu0 0
      %1028 = vmatpush.bf16.msra.mxu0 0
      %1029 = vmatpush.bf16.msra.mxu0 %v827
      %1030 = vmatpush.bf16.msra.mxu0 %v826
      %1031 = vmatmul.bf16.gmra.mxu0 %v1018
      %v1032 = vpop.f32.mrf.mxu0
      %v1033 = vadd.f32 0.0, %v1032
      %v1034 = vpop.f32.mrf.mxu0
      %v1035 = vadd.f32 0.0, %v1034
      %1036 = vmatmul.bf16.gmra.mxu0 %v1021
      %v1037 = vpop.f32.mrf.mxu0
      %v1038 = vadd.f32 0.0, %v1037
      %v1039 = vpop.f32.mrf.mxu0
      %1040 = vdwg.mxu0
      %v1041 = vadd.f32 %v1006, %v1033
      %v1042 = vadd.f32 %v1007, %v1035
      %v1043 = vadd.f32 %v1008, %v1038
      %v1044 = vxor.u32 %v1041, 2147483648
      %v1045 = vxor.u32 %v1042, 2147483648
      %v1046 = vxor.u32 %v1043, 2147483648
      %v1047 = vmul.f32 %v1044, 1.442695
      %v1048 = vpow.pop %v1047
      %v1049 = vmul.f32 %v1045, 1.442695
      %v1050 = vpow.pop %v1049
      %v1051 = vmul.f32 %v1046, 1.442695
      %v1052 = vpow.pop %v1051
      %v1053 = vadd.f32 %v1048, 1.0
      %v1054 = vadd.f32 %v1050, 1.0
      %v1055 = vadd.f32 %v1052, 1.0
      %v1056 = vrcp.pop %v1053
      %v1057 = vmul.f32 %v1053, %v1056
      %v1058 = vsub.f32 1.0, %v1057
      %v1059 = vmul.f32 %v1056, %v1058
      %v1060 = vadd.f32 %v1056, %v1059
      %vm1061 = vweird.f32 %v1053
      %vm1062 = vweird.f32 %v1056
      %vm1063 = vmor %vm1061, %vm1062
      %v1064 = vsel %vm1063, %v1056, %v1060
      %v1065 = vand.u32 2147483647, %v1053
      %vm1066 = vcmp.eq.f32.partialorder %v1065, 8.507059e+37
      %v1067 = vand.u32 %v1053, 2147483648
      %v1068 = vor.u32 1.1754944e-38, %v1067
      %v1069 = vsel %vm1066, %v1068, %v1064
      %v1070 = vmul.f32 1.0, %v1069
      %v1071 = vrcp.pop %v1054
      %v1072 = vmul.f32 %v1054, %v1071
      %v1073 = vsub.f32 1.0, %v1072
      %v1074 = vmul.f32 %v1071, %v1073
      %v1075 = vadd.f32 %v1071, %v1074
      %vm1076 = vweird.f32 %v1054
      %vm1077 = vweird.f32 %v1071
      %vm1078 = vmor %vm1076, %vm1077
      %v1079 = vsel %vm1078, %v1071, %v1075
      %v1080 = vand.u32 2147483647, %v1054
      %vm1081 = vcmp.eq.f32.partialorder %v1080, 8.507059e+37
      %v1082 = vand.u32 %v1054, 2147483648
      %v1083 = vor.u32 1.1754944e-38, %v1082
      %v1084 = vsel %vm1081, %v1083, %v1079
      %v1085 = vmul.f32 1.0, %v1084
      %v1086 = vrcp.pop %v1055
      %v1087 = vmul.f32 %v1055, %v1086
      %v1088 = vsub.f32 1.0, %v1087
      %v1089 = vmul.f32 %v1086, %v1088
      %v1090 = vadd.f32 %v1086, %v1089
      %vm1091 = vweird.f32 %v1055
      %vm1092 = vweird.f32 %v1086
      %vm1093 = vmor %vm1091, %vm1092
      %v1094 = vsel %vm1093, %v1086, %v1090
      %v1095 = vand.u32 2147483647, %v1055
      %vm1096 = vcmp.eq.f32.partialorder %v1095, 8.507059e+37
      %v1097 = vand.u32 %v1055, 2147483648
      %v1098 = vor.u32 1.1754944e-38, %v1097
      %v1099 = vsel %vm1096, %v1098, %v1094
      %v1100 = vmul.f32 1.0, %v1099
      %v1101 = vadd.f32 %v1033, %v914
      %v1102 = vadd.f32 %v1035, %v914
      %v1103 = vadd.f32 %v1038, %v914
      %1107 = vrot.lane.b32.xlu0 %v1101, 64
      %v1108 = vpop.permute.xlu0 %1107
      %1109 = vrot.lane.b32.xlu0 %v1102, 64
      %v1110 = vpop.permute.xlu0 %1109
      %1111 = vrot.lane.b32.xlu0 %v1103, 64
      %v1112 = vpop.permute.xlu0 %1111
      %v1116 = vmul.f32 %v1070, %v1108
      %v1117 = vmul.f32 %v1085, %v1110
      %v1118 = vmul.f32 %v1100, %v1112
      %1122 = vrot.lane.b32.xlu0 %v1116, 64
      %v1123 = vpop.permute.xlu0 %1122
      %1124 = vrot.lane.b32.xlu0 %v1117, 64
      %v1125 = vpop.permute.xlu0 %1124
      %1126 = vrot.lane.b32.xlu0 %v1118, 64
      %v1127 = vpop.permute.xlu0 %1126
      %v1131 = vadd.f32 %v1006, %v1123
      %v1132 = vadd.f32 %v1007, %v1125
      %v1133 = vadd.f32 %v1008, %v1127
      %v1134 = vtanh.pop %v1131
      %v1135 = vtanh.pop %v1132
      %v1136 = vtanh.pop %v1133
      %v1137 = vsub.f32 1.0, %v1070
      %v1138 = vsub.f32 1.0, %v1085
      %v1139 = vsub.f32 1.0, %v1100
      %1143 = vrot.lane.b32.xlu0 %v1134, 96
      %v1144 = vpop.permute.xlu0 %1143
      %1145 = vrot.lane.b32.xlu0 %v1135, 96
      %v1146 = vpop.permute.xlu0 %1145
      %1147 = vrot.lane.b32.xlu0 %v1136, 96
      %v1148 = vpop.permute.xlu0 %1147
      %v1152 = vmul.f32 %v1137, %v1144
      %v1153 = vmul.f32 %v1138, %v1146
      %v1154 = vmul.f32 %v1139, %v1148
      %v1155 = vmul.f32 %v1070, %v973
      %v1156 = vmul.f32 %v1085, %v974
      %v1157 = vmul.f32 %v1100, %v975
      %v1158 = vadd.f32 %v1152, %v1155
      %v1159 = vadd.f32 %v1153, %v1156
      %v1160 = vadd.f32 %v1154, %v1157
      %vm1161 = vcmp.gt.f32.partialorder %v803, 1.0
      %vm1162 = vcmp.gt.f32.partialorder %v804, 1.0
      %vm1163 = vcmp.gt.f32.partialorder %v805, 1.0
      %v1164 = vsel %vm1161, 1, 0
      %v1165 = vsel %vm1162, 1, 0
      %v1166 = vsel %vm1163, 1, 0
      %v1167 = vcvt.s32.f32 %v1164
      %v1168 = vcvt.s32.f32 %v1165
      %v1169 = vcvt.s32.f32 %v1166
      %1171 = vset.pattern.permute.xlu0 0
      %1172 = vperm.xlu0 %1171, %v1167
      %v1173 = vpop.permute.xlu0 %1172
      %1176 = vset.pattern.permute.xlu0 0
      %1177 = vperm.xlu0 %1176, %v1168
      %v1178 = vpop.permute.xlu0 %1177
      %1181 = vset.pattern.permute.xlu0 0
      %1182 = vperm.xlu0 %1181, %v1169
      %v1183 = vpop.permute.xlu0 %1182
      %v1185 = vmul.f32 %v1173, %v1158
      %v1186 = vmul.f32 %v1178, %v1159
      %v1187 = vmul.f32 %v1183, %v1160
      %v1188 = vadd.f32 %v1003, %v1185
      %v1189 = vadd.f32 %v1004, %v1186
      %v1190 = vadd.f32 %v1005, %v1187
      %v1191 = vld [vmem:[#allocation2 + $0x30] sm:$0xff]
      %v1192 = vld [vmem:[#allocation2 + $0x38] sm:$0xff]
      %v1193 = vld [vmem:[#allocation2 + $0x40] sm:$0xff]
      %v1194 = vpack.c.bf16 %v1159, %v1158
      %v1195 = vpack.c.bf16 %v1160, %v1160
      %1198 = vrot.lane.b32.xlu0 %v1194, 96
      %v1199 = vpop.permute.xlu0 %1198
      %1200 = vrot.lane.b32.xlu0 %v1195, 96
      %v1201 = vpop.permute.xlu0 %1200
      %v1203 = vsel %vm830, %v1199, 0
      %v1206 = vsel %vm830, %v1201, 0
      %1208 = vmatpush.bf16.msra.mxu0 0
      %1209 = vmatpush.bf16.msra.mxu0 0
      %1210 = vmatpush.bf16.msra.mxu0 0
      %1211 = vmatpush.bf16.msra.mxu0 0
      %1212 = vmatpush.bf16.msra.mxu0 0
      %1213 = vmatpush.bf16.msra.mxu0 0
      %1214 = vmatpush.bf16.msra.mxu0 %v827
      %1215 = vmatpush.bf16.msra.mxu0 %v826
      %1216 = vmatmul.bf16.gmra.mxu0 %v1203
      %v1217 = vpop.f32.mrf.mxu0
      %v1218 = vadd.f32 0.0, %v1217
      %v1219 = vpop.f32.mrf.mxu0
      %v1220 = vadd.f32 0.0, %v1219
      %1221 = vmatmul.bf16.gmra.mxu0 %v1206
      %v1222 = vpop.f32.mrf.mxu0
      %v1223 = vadd.f32 0.0, %v1222
      %v1224 = vpop.f32.mrf.mxu0
      %1225 = vdwg.mxu0
      %v1226 = vadd.f32 %v1191, %v1218
      %v1227 = vadd.f32 %v1192, %v1220
      %v1228 = vadd.f32 %v1193, %v1223
      %v1229 = vxor.u32 %v1226, 2147483648
      %v1230 = vxor.u32 %v1227, 2147483648
      %v1231 = vxor.u32 %v1228, 2147483648
      %v1232 = vmul.f32 %v1229, 1.442695
      %v1233 = vpow.pop %v1232
      %v1234 = vmul.f32 %v1230, 1.442695
      %v1235 = vpow.pop %v1234
      %v1236 = vmul.f32 %v1231, 1.442695
      %v1237 = vpow.pop %v1236
      %v1238 = vadd.f32 %v1233, 1.0
      %v1239 = vadd.f32 %v1235, 1.0
      %v1240 = vadd.f32 %v1237, 1.0
      %v1241 = vrcp.pop %v1238
      %v1242 = vmul.f32 %v1238, %v1241
      %v1243 = vsub.f32 1.0, %v1242
      %v1244 = vmul.f32 %v1241, %v1243
      %v1245 = vadd.f32 %v1241, %v1244
      %vm1246 = vweird.f32 %v1238
      %vm1247 = vweird.f32 %v1241
      %vm1248 = vmor %vm1246, %vm1247
      %v1249 = vsel %vm1248, %v1241, %v1245
      %v1250 = vand.u32 2147483647, %v1238
      %vm1251 = vcmp.eq.f32.partialorder %v1250, 8.507059e+37
      %v1252 = vand.u32 %v1238, 2147483648
      %v1253 = vor.u32 1.1754944e-38, %v1252
      %v1254 = vsel %vm1251, %v1253, %v1249
      %v1255 = vmul.f32 1.0, %v1254
      %v1256 = vrcp.pop %v1239
      %v1257 = vmul.f32 %v1239, %v1256
      %v1258 = vsub.f32 1.0, %v1257
      %v1259 = vmul.f32 %v1256, %v1258
      %v1260 = vadd.f32 %v1256, %v1259
      %vm1261 = vweird.f32 %v1239
      %vm1262 = vweird.f32 %v1256
      %vm1263 = vmor %vm1261, %vm1262
      %v1264 = vsel %vm1263, %v1256, %v1260
      %v1265 = vand.u32 2147483647, %v1239
      %vm1266 = vcmp.eq.f32.partialorder %v1265, 8.507059e+37
      %v1267 = vand.u32 %v1239, 2147483648
      %v1268 = vor.u32 1.1754944e-38, %v1267
      %v1269 = vsel %vm1266, %v1268, %v1264
      %v1270 = vmul.f32 1.0, %v1269
      %v1271 = vrcp.pop %v1240
      %v1272 = vmul.f32 %v1240, %v1271
      %v1273 = vsub.f32 1.0, %v1272
      %v1274 = vmul.f32 %v1271, %v1273
      %v1275 = vadd.f32 %v1271, %v1274
      %vm1276 = vweird.f32 %v1240
      %vm1277 = vweird.f32 %v1271
      %vm1278 = vmor %vm1276, %vm1277
      %v1279 = vsel %vm1278, %v1271, %v1275
      %v1280 = vand.u32 2147483647, %v1240
      %vm1281 = vcmp.eq.f32.partialorder %v1280, 8.507059e+37
      %v1282 = vand.u32 %v1240, 2147483648
      %v1283 = vor.u32 1.1754944e-38, %v1282
      %v1284 = vsel %vm1281, %v1283, %v1279
      %v1285 = vmul.f32 1.0, %v1284
      %v1286 = vadd.f32 %v1218, %v914
      %v1287 = vadd.f32 %v1220, %v914
      %v1288 = vadd.f32 %v1223, %v914
      %1292 = vrot.lane.b32.xlu0 %v1286, 64
      %v1293 = vpop.permute.xlu0 %1292
      %1294 = vrot.lane.b32.xlu0 %v1287, 64
      %v1295 = vpop.permute.xlu0 %1294
      %1296 = vrot.lane.b32.xlu0 %v1288, 64
      %v1297 = vpop.permute.xlu0 %1296
      %v1301 = vmul.f32 %v1255, %v1293
      %v1302 = vmul.f32 %v1270, %v1295
      %v1303 = vmul.f32 %v1285, %v1297
      %1307 = vrot.lane.b32.xlu0 %v1301, 64
      %v1308 = vpop.permute.xlu0 %1307
      %1309 = vrot.lane.b32.xlu0 %v1302, 64
      %v1310 = vpop.permute.xlu0 %1309
      %1311 = vrot.lane.b32.xlu0 %v1303, 64
      %v1312 = vpop.permute.xlu0 %1311
      %v1316 = vadd.f32 %v1191, %v1308
      %v1317 = vadd.f32 %v1192, %v1310
      %v1318 = vadd.f32 %v1193, %v1312
      %v1319 = vtanh.pop %v1316
      %v1320 = vtanh.pop %v1317
      %v1321 = vtanh.pop %v1318
      %v1322 = vsub.f32 1.0, %v1255
      %v1323 = vsub.f32 1.0, %v1270
      %v1324 = vsub.f32 1.0, %v1285
      %1328 = vrot.lane.b32.xlu0 %v1319, 96
      %v1329 = vpop.permute.xlu0 %1328
      %1330 = vrot.lane.b32.xlu0 %v1320, 96
      %v1331 = vpop.permute.xlu0 %1330
      %1332 = vrot.lane.b32.xlu0 %v1321, 96
      %v1333 = vpop.permute.xlu0 %1332
      %v1337 = vmul.f32 %v1322, %v1329
      %v1338 = vmul.f32 %v1323, %v1331
      %v1339 = vmul.f32 %v1324, %v1333
      %v1340 = vmul.f32 %v1255, %v1158
      %v1341 = vmul.f32 %v1270, %v1159
      %v1342 = vmul.f32 %v1285, %v1160
      %v1343 = vadd.f32 %v1337, %v1340
      %v1344 = vadd.f32 %v1338, %v1341
      %v1345 = vadd.f32 %v1339, %v1342
      %vm1346 = vcmp.gt.f32.partialorder %v803, 2.0
      %vm1347 = vcmp.gt.f32.partialorder %v804, 2.0
      %vm1348 = vcmp.gt.f32.partialorder %v805, 2.0
      %v1349 = vsel %vm1346, 1, 0
      %v1350 = vsel %vm1347, 1, 0
      %v1351 = vsel %vm1348, 1, 0
      %v1352 = vcvt.s32.f32 %v1349
      %v1353 = vcvt.s32.f32 %v1350
      %v1354 = vcvt.s32.f32 %v1351
      %1356 = vset.pattern.permute.xlu0 0
      %1357 = vperm.xlu0 %1356, %v1352
      %v1358 = vpop.permute.xlu0 %1357
      %1361 = vset.pattern.permute.xlu0 0
      %1362 = vperm.xlu0 %1361, %v1353
      %v1363 = vpop.permute.xlu0 %1362
      %1366 = vset.pattern.permute.xlu0 0
      %1367 = vperm.xlu0 %1366, %v1354
      %v1368 = vpop.permute.xlu0 %1367
      %v1370 = vmul.f32 %v1358, %v1343
      %v1371 = vmul.f32 %v1363, %v1344
      %v1372 = vmul.f32 %v1368, %v1345
      %v1373 = vadd.f32 %v1188, %v1370
      %v1374 = vadd.f32 %v1189, %v1371
      %v1375 = vadd.f32 %v1190, %v1372
      %v1376 = vld [vmem:[#allocation2 + $0x48] sm:$0xff]
      %v1377 = vld [vmem:[#allocation2 + $0x50] sm:$0xff]
      %v1378 = vld [vmem:[#allocation2 + $0x58] sm:$0xff]
      %v1379 = vpack.c.bf16 %v1344, %v1343
      %v1380 = vpack.c.bf16 %v1345, %v1345
      %1383 = vrot.lane.b32.xlu0 %v1379, 96
      %v1384 = vpop.permute.xlu0 %1383
      %1385 = vrot.lane.b32.xlu0 %v1380, 96
      %v1386 = vpop.permute.xlu0 %1385
      %v1388 = vsel %vm830, %v1384, 0
      %v1391 = vsel %vm830, %v1386, 0
      %1393 = vmatpush.bf16.msra.mxu0 0
      %1394 = vmatpush.bf16.msra.mxu0 0
      %1395 = vmatpush.bf16.msra.mxu0 0
      %1396 = vmatpush.bf16.msra.mxu0 0
      %1397 = vmatpush.bf16.msra.mxu0 0
      %1398 = vmatpush.bf16.msra.mxu0 0
      %1399 = vmatpush.bf16.msra.mxu0 %v827
      %1400 = vmatpush.bf16.msra.mxu0 %v826
      %1401 = vmatmul.bf16.gmra.mxu0 %v1388
      %v1402 = vpop.f32.mrf.mxu0
      %v1403 = vadd.f32 0.0, %v1402
      %v1404 = vpop.f32.mrf.mxu0
      %v1405 = vadd.f32 0.0, %v1404
      %1406 = vmatmul.bf16.gmra.mxu0 %v1391
      %v1407 = vpop.f32.mrf.mxu0
      %v1408 = vadd.f32 0.0, %v1407
      %v1409 = vpop.f32.mrf.mxu0
      %1410 = vdwg.mxu0
      %v1411 = vadd.f32 %v1376, %v1403
      %v1412 = vadd.f32 %v1377, %v1405
      %v1413 = vadd.f32 %v1378, %v1408
      %v1414 = vxor.u32 %v1411, 2147483648
      %v1415 = vxor.u32 %v1412, 2147483648
      %v1416 = vxor.u32 %v1413, 2147483648
      %v1417 = vmul.f32 %v1414, 1.442695
      %v1418 = vpow.pop %v1417
      %v1419 = vmul.f32 %v1415, 1.442695
      %v1420 = vpow.pop %v1419
      %v1421 = vmul.f32 %v1416, 1.442695
      %v1422 = vpow.pop %v1421
      %v1423 = vadd.f32 %v1418, 1.0
      %v1424 = vadd.f32 %v1420, 1.0
      %v1425 = vadd.f32 %v1422, 1.0
      %v1426 = vrcp.pop %v1423
      %v1427 = vmul.f32 %v1423, %v1426
      %v1428 = vsub.f32 1.0, %v1427
      %v1429 = vmul.f32 %v1426, %v1428
      %v1430 = vadd.f32 %v1426, %v1429
      %vm1431 = vweird.f32 %v1423
      %vm1432 = vweird.f32 %v1426
      %vm1433 = vmor %vm1431, %vm1432
      %v1434 = vsel %vm1433, %v1426, %v1430
      %v1435 = vand.u32 2147483647, %v1423
      %vm1436 = vcmp.eq.f32.partialorder %v1435, 8.507059e+37
      %v1437 = vand.u32 %v1423, 2147483648
      %v1438 = vor.u32 1.1754944e-38, %v1437
      %v1439 = vsel %vm1436, %v1438, %v1434
      %v1440 = vmul.f32 1.0, %v1439
      %v1441 = vrcp.pop %v1424
      %v1442 = vmul.f32 %v1424, %v1441
      %v1443 = vsub.f32 1.0, %v1442
      %v1444 = vmul.f32 %v1441, %v1443
      %v1445 = vadd.f32 %v1441, %v1444
      %vm1446 = vweird.f32 %v1424
      %vm1447 = vweird.f32 %v1441
      %vm1448 = vmor %vm1446, %vm1447
      %v1449 = vsel %vm1448, %v1441, %v1445
      %v1450 = vand.u32 2147483647, %v1424
      %vm1451 = vcmp.eq.f32.partialorder %v1450, 8.507059e+37
      %v1452 = vand.u32 %v1424, 2147483648
      %v1453 = vor.u32 1.1754944e-38, %v1452
      %v1454 = vsel %vm1451, %v1453, %v1449
      %v1455 = vmul.f32 1.0, %v1454
      %v1456 = vrcp.pop %v1425
      %v1457 = vmul.f32 %v1425, %v1456
      %v1458 = vsub.f32 1.0, %v1457
      %v1459 = vmul.f32 %v1456, %v1458
      %v1460 = vadd.f32 %v1456, %v1459
      %vm1461 = vweird.f32 %v1425
      %vm1462 = vweird.f32 %v1456
      %vm1463 = vmor %vm1461, %vm1462
      %v1464 = vsel %vm1463, %v1456, %v1460
      %v1465 = vand.u32 2147483647, %v1425
      %vm1466 = vcmp.eq.f32.partialorder %v1465, 8.507059e+37
      %v1467 = vand.u32 %v1425, 2147483648
      %v1468 = vor.u32 1.1754944e-38, %v1467
      %v1469 = vsel %vm1466, %v1468, %v1464
      %v1470 = vmul.f32 1.0, %v1469
      %v1471 = vadd.f32 %v1403, %v914
      %v1472 = vadd.f32 %v1405, %v914
      %v1473 = vadd.f32 %v1408, %v914
      %1477 = vrot.lane.b32.xlu0 %v1471, 64
      %v1478 = vpop.permute.xlu0 %1477
      %1479 = vrot.lane.b32.xlu0 %v1472, 64
      %v1480 = vpop.permute.xlu0 %1479
      %1481 = vrot.lane.b32.xlu0 %v1473, 64
      %v1482 = vpop.permute.xlu0 %1481
      %v1486 = vmul.f32 %v1440, %v1478
      %v1487 = vmul.f32 %v1455, %v1480
      %v1488 = vmul.f32 %v1470, %v1482
      %1492 = vrot.lane.b32.xlu0 %v1486, 64
      %v1493 = vpop.permute.xlu0 %1492
      %1494 = vrot.lane.b32.xlu0 %v1487, 64
      %v1495 = vpop.permute.xlu0 %1494
      %1496 = vrot.lane.b32.xlu0 %v1488, 64
      %v1497 = vpop.permute.xlu0 %1496
      %v1501 = vadd.f32 %v1376, %v1493
      %v1502 = vadd.f32 %v1377, %v1495
      %v1503 = vadd.f32 %v1378, %v1497
      %v1504 = vtanh.pop %v1501
      %v1505 = vtanh.pop %v1502
      %v1506 = vtanh.pop %v1503
      %v1507 = vsub.f32 1.0, %v1440
      %v1508 = vsub.f32 1.0, %v1455
      %v1509 = vsub.f32 1.0, %v1470
      %1513 = vrot.lane.b32.xlu0 %v1504, 96
      %v1514 = vpop.permute.xlu0 %1513
      %1515 = vrot.lane.b32.xlu0 %v1505, 96
      %v1516 = vpop.permute.xlu0 %1515
      %1517 = vrot.lane.b32.xlu0 %v1506, 96
      %v1518 = vpop.permute.xlu0 %1517
      %v1522 = vmul.f32 %v1507, %v1514
      %v1523 = vmul.f32 %v1508, %v1516
      %v1524 = vmul.f32 %v1509, %v1518
      %v1525 = vmul.f32 %v1440, %v1343
      %v1526 = vmul.f32 %v1455, %v1344
      %v1527 = vmul.f32 %v1470, %v1345
      %v1528 = vadd.f32 %v1522, %v1525
      %v1529 = vadd.f32 %v1523, %v1526
      %v1530 = vadd.f32 %v1524, %v1527
      %vm1531 = vcmp.gt.f32.partialorder %v803, 3.0
      %vm1532 = vcmp.gt.f32.partialorder %v804, 3.0
      %vm1533 = vcmp.gt.f32.partialorder %v805, 3.0
      %v1534 = vsel %vm1531, 1, 0
      %v1535 = vsel %vm1532, 1, 0
      %v1536 = vsel %vm1533, 1, 0
      %v1537 = vcvt.s32.f32 %v1534
      %v1538 = vcvt.s32.f32 %v1535
      %v1539 = vcvt.s32.f32 %v1536
      %1541 = vset.pattern.permute.xlu0 0
      %1542 = vperm.xlu0 %1541, %v1537
      %v1543 = vpop.permute.xlu0 %1542
      %1546 = vset.pattern.permute.xlu0 0
      %1547 = vperm.xlu0 %1546, %v1538
      %v1548 = vpop.permute.xlu0 %1547
      %1551 = vset.pattern.permute.xlu0 0
      %1552 = vperm.xlu0 %1551, %v1539
      %v1553 = vpop.permute.xlu0 %1552
      %v1555 = vmul.f32 %v1543, %v1528
      %v1556 = vmul.f32 %v1548, %v1529
      %v1557 = vmul.f32 %v1553, %v1530
      %v1558 = vadd.f32 %v1373, %v1555
      %v1559 = vadd.f32 %v1374, %v1556
      %v1560 = vadd.f32 %v1375, %v1557
      %v1561 = vld [vmem:[#allocation2 + $0x60] sm:$0xff]
      %v1562 = vld [vmem:[#allocation2 + $0x68] sm:$0xff]
      %v1563 = vld [vmem:[#allocation2 + $0x70] sm:$0xff]
      %v1564 = vpack.c.bf16 %v1529, %v1528
      %v1565 = vpack.c.bf16 %v1530, %v1530
      %1568 = vrot.lane.b32.xlu0 %v1564, 96
      %v1569 = vpop.permute.xlu0 %1568
      %1570 = vrot.lane.b32.xlu0 %v1565, 96
      %v1571 = vpop.permute.xlu0 %1570
      %v1573 = vsel %vm830, %v1569, 0
      %v1576 = vsel %vm830, %v1571, 0
      %1578 = vmatpush.bf16.msra.mxu0 0
      %1579 = vmatpush.bf16.msra.mxu0 0
      %1580 = vmatpush.bf16.msra.mxu0 0
      %1581 = vmatpush.bf16.msra.mxu0 0
      %1582 = vmatpush.bf16.msra.mxu0 0
      %1583 = vmatpush.bf16.msra.mxu0 0
      %1584 = vmatpush.bf16.msra.mxu0 %v827
      %1585 = vmatpush.bf16.msra.mxu0 %v826
      %1586 = vmatmul.bf16.gmra.mxu0 %v1573
      %v1587 = vpop.f32.mrf.mxu0
      %v1588 = vadd.f32 0.0, %v1587
      %v1589 = vpop.f32.mrf.mxu0
      %v1590 = vadd.f32 0.0, %v1589
      %1591 = vmatmul.bf16.gmra.mxu0 %v1576
      %v1592 = vpop.f32.mrf.mxu0
      %v1593 = vadd.f32 0.0, %v1592
      %v1594 = vpop.f32.mrf.mxu0
      %1595 = vdwg.mxu0
      %v1596 = vadd.f32 %v1561, %v1588
      %v1597 = vadd.f32 %v1562, %v1590
      %v1598 = vadd.f32 %v1563, %v1593
      %v1599 = vxor.u32 %v1596, 2147483648
      %v1600 = vxor.u32 %v1597, 2147483648
      %v1601 = vxor.u32 %v1598, 2147483648
      %v1602 = vmul.f32 %v1599, 1.442695
      %v1603 = vpow.pop %v1602
      %v1604 = vmul.f32 %v1600, 1.442695
      %v1605 = vpow.pop %v1604
      %v1606 = vmul.f32 %v1601, 1.442695
      %v1607 = vpow.pop %v1606
      %v1608 = vadd.f32 %v1603, 1.0
      %v1609 = vadd.f32 %v1605, 1.0
      %v1610 = vadd.f32 %v1607, 1.0
      %v1611 = vrcp.pop %v1608
      %v1612 = vmul.f32 %v1608, %v1611
      %v1613 = vsub.f32 1.0, %v1612
      %v1614 = vmul.f32 %v1611, %v1613
      %v1615 = vadd.f32 %v1611, %v1614
      %vm1616 = vweird.f32 %v1608
      %vm1617 = vweird.f32 %v1611
      %vm1618 = vmor %vm1616, %vm1617
      %v1619 = vsel %vm1618, %v1611, %v1615
      %v1620 = vand.u32 2147483647, %v1608
      %vm1621 = vcmp.eq.f32.partialorder %v1620, 8.507059e+37
      %v1622 = vand.u32 %v1608, 2147483648
      %v1623 = vor.u32 1.1754944e-38, %v1622
      %v1624 = vsel %vm1621, %v1623, %v1619
      %v1625 = vmul.f32 1.0, %v1624
      %v1626 = vrcp.pop %v1609
      %v1627 = vmul.f32 %v1609, %v1626
      %v1628 = vsub.f32 1.0, %v1627
      %v1629 = vmul.f32 %v1626, %v1628
      %v1630 = vadd.f32 %v1626, %v1629
      %vm1631 = vweird.f32 %v1609
      %vm1632 = vweird.f32 %v1626
      %vm1633 = vmor %vm1631, %vm1632
      %v1634 = vsel %vm1633, %v1626, %v1630
      %v1635 = vand.u32 2147483647, %v1609
      %vm1636 = vcmp.eq.f32.partialorder %v1635, 8.507059e+37
      %v1637 = vand.u32 %v1609, 2147483648
      %v1638 = vor.u32 1.1754944e-38, %v1637
      %v1639 = vsel %vm1636, %v1638, %v1634
      %v1640 = vmul.f32 1.0, %v1639
      %v1641 = vrcp.pop %v1610
      %v1642 = vmul.f32 %v1610, %v1641
      %v1643 = vsub.f32 1.0, %v1642
      %v1644 = vmul.f32 %v1641, %v1643
      %v1645 = vadd.f32 %v1641, %v1644
      %vm1646 = vweird.f32 %v1610
      %vm1647 = vweird.f32 %v1641
      %vm1648 = vmor %vm1646, %vm1647
      %v1649 = vsel %vm1648, %v1641, %v1645
      %v1650 = vand.u32 2147483647, %v1610
      %vm1651 = vcmp.eq.f32.partialorder %v1650, 8.507059e+37
      %v1652 = vand.u32 %v1610, 2147483648
      %v1653 = vor.u32 1.1754944e-38, %v1652
      %v1654 = vsel %vm1651, %v1653, %v1649
      %v1655 = vmul.f32 1.0, %v1654
      %v1656 = vadd.f32 %v1588, %v914
      %v1657 = vadd.f32 %v1590, %v914
      %v1658 = vadd.f32 %v1593, %v914
      %1662 = vrot.lane.b32.xlu0 %v1656, 64
      %v1663 = vpop.permute.xlu0 %1662
      %1664 = vrot.lane.b32.xlu0 %v1657, 64
      %v1665 = vpop.permute.xlu0 %1664
      %1666 = vrot.lane.b32.xlu0 %v1658, 64
      %v1667 = vpop.permute.xlu0 %1666
      %v1671 = vmul.f32 %v1625, %v1663
      %v1672 = vmul.f32 %v1640, %v1665
      %v1673 = vmul.f32 %v1655, %v1667
      %1677 = vrot.lane.b32.xlu0 %v1671, 64
      %v1678 = vpop.permute.xlu0 %1677
      %1679 = vrot.lane.b32.xlu0 %v1672, 64
      %v1680 = vpop.permute.xlu0 %1679
      %1681 = vrot.lane.b32.xlu0 %v1673, 64
      %v1682 = vpop.permute.xlu0 %1681
      %v1686 = vadd.f32 %v1561, %v1678
      %v1687 = vadd.f32 %v1562, %v1680
      %v1688 = vadd.f32 %v1563, %v1682
      %v1689 = vtanh.pop %v1686
      %v1690 = vtanh.pop %v1687
      %v1691 = vtanh.pop %v1688
      %v1692 = vsub.f32 1.0, %v1625
      %v1693 = vsub.f32 1.0, %v1640
      %v1694 = vsub.f32 1.0, %v1655
      %1698 = vrot.lane.b32.xlu0 %v1689, 96
      %v1699 = vpop.permute.xlu0 %1698
      %1700 = vrot.lane.b32.xlu0 %v1690, 96
      %v1701 = vpop.permute.xlu0 %1700
      %1702 = vrot.lane.b32.xlu0 %v1691, 96
      %v1703 = vpop.permute.xlu0 %1702
      %v1707 = vmul.f32 %v1692, %v1699
      %v1708 = vmul.f32 %v1693, %v1701
      %v1709 = vmul.f32 %v1694, %v1703
      %v1710 = vmul.f32 %v1625, %v1528
      %v1711 = vmul.f32 %v1640, %v1529
      %v1712 = vmul.f32 %v1655, %v1530
      %v1713 = vadd.f32 %v1707, %v1710
      %v1714 = vadd.f32 %v1708, %v1711
      %v1715 = vadd.f32 %v1709, %v1712
      %vm1716 = vcmp.gt.f32.partialorder %v803, 4.0
      %vm1717 = vcmp.gt.f32.partialorder %v804, 4.0
      %vm1718 = vcmp.gt.f32.partialorder %v805, 4.0
      %v1719 = vsel %vm1716, 1, 0
      %v1720 = vsel %vm1717, 1, 0
      %v1721 = vsel %vm1718, 1, 0
      %v1722 = vcvt.s32.f32 %v1719
      %v1723 = vcvt.s32.f32 %v1720
      %v1724 = vcvt.s32.f32 %v1721
      %1726 = vset.pattern.permute.xlu0 0
      %1727 = vperm.xlu0 %1726, %v1722
      %v1728 = vpop.permute.xlu0 %1727
      %1731 = vset.pattern.permute.xlu0 0
      %1732 = vperm.xlu0 %1731, %v1723
      %v1733 = vpop.permute.xlu0 %1732
      %1736 = vset.pattern.permute.xlu0 0
      %1737 = vperm.xlu0 %1736, %v1724
      %v1738 = vpop.permute.xlu0 %1737
      %v1740 = vmul.f32 %v1728, %v1713
      %v1741 = vmul.f32 %v1733, %v1714
      %v1742 = vmul.f32 %v1738, %v1715
      %v1743 = vadd.f32 %v1558, %v1740
      %v1744 = vadd.f32 %v1559, %v1741
      %v1745 = vadd.f32 %v1560, %v1742
      %v1746 = vld [vmem:[#allocation2 + $0x78] sm:$0xff]
      %v1747 = vld [vmem:[#allocation2 + $0x80] sm:$0xff]
      %v1748 = vld [vmem:[#allocation2 + $0x88] sm:$0xff]
      %v1749 = vpack.c.bf16 %v1714, %v1713
      %v1750 = vpack.c.bf16 %v1715, %v1715
      %1753 = vrot.lane.b32.xlu0 %v1749, 96
      %v1754 = vpop.permute.xlu0 %1753
      %1755 = vrot.lane.b32.xlu0 %v1750, 96
      %v1756 = vpop.permute.xlu0 %1755
      %v1758 = vsel %vm830, %v1754, 0
      %v1761 = vsel %vm830, %v1756, 0
      %1763 = vmatpush.bf16.msra.mxu0 0
      %1764 = vmatpush.bf16.msra.mxu0 0
      %1765 = vmatpush.bf16.msra.mxu0 0
      %1766 = vmatpush.bf16.msra.mxu0 0
      %1767 = vmatpush.bf16.msra.mxu0 0
      %1768 = vmatpush.bf16.msra.mxu0 0
      %1769 = vmatpush.bf16.msra.mxu0 %v827
      %1770 = vmatpush.bf16.msra.mxu0 %v826
      %1771 = vmatmul.bf16.gmra.mxu0 %v1758
      %v1772 = vpop.f32.mrf.mxu0
      %v1773 = vadd.f32 0.0, %v1772
      %v1774 = vpop.f32.mrf.mxu0
      %v1775 = vadd.f32 0.0, %v1774
      %1776 = vmatmul.bf16.gmra.mxu0 %v1761
      %v1777 = vpop.f32.mrf.mxu0
      %v1778 = vadd.f32 0.0, %v1777
      %v1779 = vpop.f32.mrf.mxu0
      %1780 = vdwg.mxu0
      %v1781 = vadd.f32 %v1746, %v1773
      %v1782 = vadd.f32 %v1747, %v1775
      %v1783 = vadd.f32 %v1748, %v1778
      %v1784 = vxor.u32 %v1781, 2147483648
      %v1785 = vxor.u32 %v1782, 2147483648
      %v1786 = vxor.u32 %v1783, 2147483648
      %v1787 = vmul.f32 %v1784, 1.442695
      %v1788 = vpow.pop %v1787
      %v1789 = vmul.f32 %v1785, 1.442695
      %v1790 = vpow.pop %v1789
      %v1791 = vmul.f32 %v1786, 1.442695
      %v1792 = vpow.pop %v1791
      %v1793 = vadd.f32 %v1788, 1.0
      %v1794 = vadd.f32 %v1790, 1.0
      %v1795 = vadd.f32 %v1792, 1.0
      %v1796 = vrcp.pop %v1793
      %v1797 = vmul.f32 %v1793, %v1796
      %v1798 = vsub.f32 1.0, %v1797
      %v1799 = vmul.f32 %v1796, %v1798
      %v1800 = vadd.f32 %v1796, %v1799
      %vm1801 = vweird.f32 %v1793
      %vm1802 = vweird.f32 %v1796
      %vm1803 = vmor %vm1801, %vm1802
      %v1804 = vsel %vm1803, %v1796, %v1800
      %v1805 = vand.u32 2147483647, %v1793
      %vm1806 = vcmp.eq.f32.partialorder %v1805, 8.507059e+37
      %v1807 = vand.u32 %v1793, 2147483648
      %v1808 = vor.u32 1.1754944e-38, %v1807
      %v1809 = vsel %vm1806, %v1808, %v1804
      %v1810 = vmul.f32 1.0, %v1809
      %v1811 = vrcp.pop %v1794
      %v1812 = vmul.f32 %v1794, %v1811
      %v1813 = vsub.f32 1.0, %v1812
      %v1814 = vmul.f32 %v1811, %v1813
      %v1815 = vadd.f32 %v1811, %v1814
      %vm1816 = vweird.f32 %v1794
      %vm1817 = vweird.f32 %v1811
      %vm1818 = vmor %vm1816, %vm1817
      %v1819 = vsel %vm1818, %v1811, %v1815
      %v1820 = vand.u32 2147483647, %v1794
      %vm1821 = vcmp.eq.f32.partialorder %v1820, 8.507059e+37
      %v1822 = vand.u32 %v1794, 2147483648
      %v1823 = vor.u32 1.1754944e-38, %v1822
      %v1824 = vsel %vm1821, %v1823, %v1819
      %v1825 = vmul.f32 1.0, %v1824
      %v1826 = vrcp.pop %v1795
      %v1827 = vmul.f32 %v1795, %v1826
      %v1828 = vsub.f32 1.0, %v1827
      %v1829 = vmul.f32 %v1826, %v1828
      %v1830 = vadd.f32 %v1826, %v1829
      %vm1831 = vweird.f32 %v1795
      %vm1832 = vweird.f32 %v1826
      %vm1833 = vmor %vm1831, %vm1832
      %v1834 = vsel %vm1833, %v1826, %v1830
      %v1835 = vand.u32 2147483647, %v1795
      %vm1836 = vcmp.eq.f32.partialorder %v1835, 8.507059e+37
      %v1837 = vand.u32 %v1795, 2147483648
      %v1838 = vor.u32 1.1754944e-38, %v1837
      %v1839 = vsel %vm1836, %v1838, %v1834
      %v1840 = vmul.f32 1.0, %v1839
      %v1841 = vadd.f32 %v1773, %v914
      %v1842 = vadd.f32 %v1775, %v914
      %v1843 = vadd.f32 %v1778, %v914
      %1847 = vrot.lane.b32.xlu0 %v1841, 64
      %v1848 = vpop.permute.xlu0 %1847
      %1849 = vrot.lane.b32.xlu0 %v1842, 64
      %v1850 = vpop.permute.xlu0 %1849
      %1851 = vrot.lane.b32.xlu0 %v1843, 64
      %v1852 = vpop.permute.xlu0 %1851
      %v1856 = vmul.f32 %v1810, %v1848
      %v1857 = vmul.f32 %v1825, %v1850
      %v1858 = vmul.f32 %v1840, %v1852
      %1862 = vrot.lane.b32.xlu0 %v1856, 64
      %v1863 = vpop.permute.xlu0 %1862
      %1864 = vrot.lane.b32.xlu0 %v1857, 64
      %v1865 = vpop.permute.xlu0 %1864
      %1866 = vrot.lane.b32.xlu0 %v1858, 64
      %v1867 = vpop.permute.xlu0 %1866
      %v1871 = vadd.f32 %v1746, %v1863
      %v1872 = vadd.f32 %v1747, %v1865
      %v1873 = vadd.f32 %v1748, %v1867
      %v1874 = vtanh.pop %v1871
      %v1875 = vtanh.pop %v1872
      %v1876 = vtanh.pop %v1873
      %v1877 = vsub.f32 1.0, %v1810
      %v1878 = vsub.f32 1.0, %v1825
      %v1879 = vsub.f32 1.0, %v1840
      %1883 = vrot.lane.b32.xlu0 %v1874, 96
      %v1884 = vpop.permute.xlu0 %1883
      %1885 = vrot.lane.b32.xlu0 %v1875, 96
      %v1886 = vpop.permute.xlu0 %1885
      %1887 = vrot.lane.b32.xlu0 %v1876, 96
      %v1888 = vpop.permute.xlu0 %1887
      %v1892 = vmul.f32 %v1877, %v1884
      %v1893 = vmul.f32 %v1878, %v1886
      %v1894 = vmul.f32 %v1879, %v1888
      %v1895 = vmul.f32 %v1810, %v1713
      %v1896 = vmul.f32 %v1825, %v1714
      %v1897 = vmul.f32 %v1840, %v1715
      %v1898 = vadd.f32 %v1892, %v1895
      %v1899 = vadd.f32 %v1893, %v1896
      %v1900 = vadd.f32 %v1894, %v1897
      %vm1901 = vcmp.gt.f32.partialorder %v803, 5.0
      %vm1902 = vcmp.gt.f32.partialorder %v804, 5.0
      %vm1903 = vcmp.gt.f32.partialorder %v805, 5.0
      %v1904 = vsel %vm1901, 1, 0
      %v1905 = vsel %vm1902, 1, 0
      %v1906 = vsel %vm1903, 1, 0
      %v1907 = vcvt.s32.f32 %v1904
      %v1908 = vcvt.s32.f32 %v1905
      %v1909 = vcvt.s32.f32 %v1906
      %1911 = vset.pattern.permute.xlu0 0
      %1912 = vperm.xlu0 %1911, %v1907
      %v1913 = vpop.permute.xlu0 %1912
      %1916 = vset.pattern.permute.xlu0 0
      %1917 = vperm.xlu0 %1916, %v1908
      %v1918 = vpop.permute.xlu0 %1917
      %1921 = vset.pattern.permute.xlu0 0
      %1922 = vperm.xlu0 %1921, %v1909
      %v1923 = vpop.permute.xlu0 %1922
      %v1925 = vmul.f32 %v1913, %v1898
      %v1926 = vmul.f32 %v1918, %v1899
      %v1927 = vmul.f32 %v1923, %v1900
      %v1928 = vadd.f32 %v1743, %v1925
      %v1929 = vadd.f32 %v1744, %v1926
      %v1930 = vadd.f32 %v1745, %v1927
      %v1931 = vld [vmem:[#allocation2 + $0x90] sm:$0xff]
      %v1932 = vld [vmem:[#allocation2 + $0x98] sm:$0xff]
      %v1933 = vld [vmem:[#allocation2 + $0xa0] sm:$0xff]
      %v1934 = vpack.c.bf16 %v1899, %v1898
      %v1935 = vpack.c.bf16 %v1900, %v1900
      %1938 = vrot.lane.b32.xlu0 %v1934, 96
      %v1939 = vpop.permute.xlu0 %1938
      %1940 = vrot.lane.b32.xlu0 %v1935, 96
      %v1941 = vpop.permute.xlu0 %1940
      %v1943 = vsel %vm830, %v1939, 0
      %v1946 = vsel %vm830, %v1941, 0
      %1948 = vmatpush.bf16.msra.mxu0 0
      %1949 = vmatpush.bf16.msra.mxu0 0
      %1950 = vmatpush.bf16.msra.mxu0 0
      %1951 = vmatpush.bf16.msra.mxu0 0
      %1952 = vmatpush.bf16.msra.mxu0 0
      %1953 = vmatpush.bf16.msra.mxu0 0
      %1954 = vmatpush.bf16.msra.mxu0 %v827
      %1955 = vmatpush.bf16.msra.mxu0 %v826
      %1956 = vmatmul.bf16.gmra.mxu0 %v1943
      %v1957 = vpop.f32.mrf.mxu0
      %v1958 = vadd.f32 0.0, %v1957
      %v1959 = vpop.f32.mrf.mxu0
      %v1960 = vadd.f32 0.0, %v1959
      %1961 = vmatmul.bf16.gmra.mxu0 %v1946
      %v1962 = vpop.f32.mrf.mxu0
      %v1963 = vadd.f32 0.0, %v1962
      %v1964 = vpop.f32.mrf.mxu0
      %1965 = vdwg.mxu0
      %v1966 = vadd.f32 %v1931, %v1958
      %v1967 = vadd.f32 %v1932, %v1960
      %v1968 = vadd.f32 %v1933, %v1963
      %v1969 = vxor.u32 %v1966, 2147483648
      %v1970 = vxor.u32 %v1967, 2147483648
      %v1971 = vxor.u32 %v1968, 2147483648
      %v1972 = vmul.f32 %v1969, 1.442695
      %v1973 = vpow.pop %v1972
      %v1974 = vmul.f32 %v1970, 1.442695
      %v1975 = vpow.pop %v1974
      %v1976 = vmul.f32 %v1971, 1.442695
      %v1977 = vpow.pop %v1976
      %v1978 = vadd.f32 %v1973, 1.0
      %v1979 = vadd.f32 %v1975, 1.0
      %v1980 = vadd.f32 %v1977, 1.0
      %v1981 = vrcp.pop %v1978
      %v1982 = vmul.f32 %v1978, %v1981
      %v1983 = vsub.f32 1.0, %v1982
      %v1984 = vmul.f32 %v1981, %v1983
      %v1985 = vadd.f32 %v1981, %v1984
      %vm1986 = vweird.f32 %v1978
      %vm1987 = vweird.f32 %v1981
      %vm1988 = vmor %vm1986, %vm1987
      %v1989 = vsel %vm1988, %v1981, %v1985
      %v1990 = vand.u32 2147483647, %v1978
      %vm1991 = vcmp.eq.f32.partialorder %v1990, 8.507059e+37
      %v1992 = vand.u32 %v1978, 2147483648
      %v1993 = vor.u32 1.1754944e-38, %v1992
      %v1994 = vsel %vm1991, %v1993, %v1989
      %v1995 = vmul.f32 1.0, %v1994
      %v1996 = vrcp.pop %v1979
      %v1997 = vmul.f32 %v1979, %v1996
      %v1998 = vsub.f32 1.0, %v1997
      %v1999 = vmul.f32 %v1996, %v1998
      %v2000 = vadd.f32 %v1996, %v1999
      %vm2001 = vweird.f32 %v1979
      %vm2002 = vweird.f32 %v1996
      %vm2003 = vmor %vm2001, %vm2002
      %v2004 = vsel %vm2003, %v1996, %v2000
      %v2005 = vand.u32 2147483647, %v1979
      %vm2006 = vcmp.eq.f32.partialorder %v2005, 8.507059e+37
      %v2007 = vand.u32 %v1979, 2147483648
      %v2008 = vor.u32 1.1754944e-38, %v2007
      %v2009 = vsel %vm2006, %v2008, %v2004
      %v2010 = vmul.f32 1.0, %v2009
      %v2011 = vrcp.pop %v1980
      %v2012 = vmul.f32 %v1980, %v2011
      %v2013 = vsub.f32 1.0, %v2012
      %v2014 = vmul.f32 %v2011, %v2013
      %v2015 = vadd.f32 %v2011, %v2014
      %vm2016 = vweird.f32 %v1980
      %vm2017 = vweird.f32 %v2011
      %vm2018 = vmor %vm2016, %vm2017
      %v2019 = vsel %vm2018, %v2011, %v2015
      %v2020 = vand.u32 2147483647, %v1980
      %vm2021 = vcmp.eq.f32.partialorder %v2020, 8.507059e+37
      %v2022 = vand.u32 %v1980, 2147483648
      %v2023 = vor.u32 1.1754944e-38, %v2022
      %v2024 = vsel %vm2021, %v2023, %v2019
      %v2025 = vmul.f32 1.0, %v2024
      %v2026 = vadd.f32 %v1958, %v914
      %v2027 = vadd.f32 %v1960, %v914
      %v2028 = vadd.f32 %v1963, %v914
      %2032 = vrot.lane.b32.xlu0 %v2026, 64
      %v2033 = vpop.permute.xlu0 %2032
      %2034 = vrot.lane.b32.xlu0 %v2027, 64
      %v2035 = vpop.permute.xlu0 %2034
      %2036 = vrot.lane.b32.xlu0 %v2028, 64
      %v2037 = vpop.permute.xlu0 %2036
      %v2041 = vmul.f32 %v1995, %v2033
      %v2042 = vmul.f32 %v2010, %v2035
      %v2043 = vmul.f32 %v2025, %v2037
      %2047 = vrot.lane.b32.xlu0 %v2041, 64
      %v2048 = vpop.permute.xlu0 %2047
      %2049 = vrot.lane.b32.xlu0 %v2042, 64
      %v2050 = vpop.permute.xlu0 %2049
      %2051 = vrot.lane.b32.xlu0 %v2043, 64
      %v2052 = vpop.permute.xlu0 %2051
      %v2056 = vadd.f32 %v1931, %v2048
      %v2057 = vadd.f32 %v1932, %v2050
      %v2058 = vadd.f32 %v1933, %v2052
      %v2059 = vtanh.pop %v2056
      %v2060 = vtanh.pop %v2057
      %v2061 = vtanh.pop %v2058
      %v2062 = vsub.f32 1.0, %v1995
      %v2063 = vsub.f32 1.0, %v2010
      %v2064 = vsub.f32 1.0, %v2025
      %2068 = vrot.lane.b32.xlu0 %v2059, 96
      %v2069 = vpop.permute.xlu0 %2068
      %2070 = vrot.lane.b32.xlu0 %v2060, 96
      %v2071 = vpop.permute.xlu0 %2070
      %2072 = vrot.lane.b32.xlu0 %v2061, 96
      %v2073 = vpop.permute.xlu0 %2072
      %v2077 = vmul.f32 %v2062, %v2069
      %v2078 = vmul.f32 %v2063, %v2071
      %v2079 = vmul.f32 %v2064, %v2073
      %v2080 = vmul.f32 %v1995, %v1898
      %v2081 = vmul.f32 %v2010, %v1899
      %v2082 = vmul.f32 %v2025, %v1900
      %v2083 = vadd.f32 %v2077, %v2080
      %v2084 = vadd.f32 %v2078, %v2081
      %v2085 = vadd.f32 %v2079, %v2082
      %vm2086 = vcmp.gt.f32.partialorder %v803, 6.0
      %vm2087 = vcmp.gt.f32.partialorder %v804, 6.0
      %vm2088 = vcmp.gt.f32.partialorder %v805, 6.0
      %v2089 = vsel %vm2086, 1, 0
      %v2090 = vsel %vm2087, 1, 0
      %v2091 = vsel %vm2088, 1, 0
      %v2092 = vcvt.s32.f32 %v2089
      %v2093 = vcvt.s32.f32 %v2090
      %v2094 = vcvt.s32.f32 %v2091
      %2096 = vset.pattern.permute.xlu0 0
      %2097 = vperm.xlu0 %2096, %v2092
      %v2098 = vpop.permute.xlu0 %2097
      %2101 = vset.pattern.permute.xlu0 0
      %2102 = vperm.xlu0 %2101, %v2093
      %v2103 = vpop.permute.xlu0 %2102
      %2106 = vset.pattern.permute.xlu0 0
      %2107 = vperm.xlu0 %2106, %v2094
      %v2108 = vpop.permute.xlu0 %2107
      %v2110 = vmul.f32 %v2098, %v2083
      %v2111 = vmul.f32 %v2103, %v2084
      %v2112 = vmul.f32 %v2108, %v2085
      %v2113 = vadd.f32 %v1928, %v2110
      %v2114 = vadd.f32 %v1929, %v2111
      %v2115 = vadd.f32 %v1930, %v2112
      %v2116 = vld [vmem:[#allocation2 + $0xa8] sm:$0xff]
      %v2117 = vld [vmem:[#allocation2 + $0xb0] sm:$0xff]
      %v2118 = vld [vmem:[#allocation2 + $0xb8] sm:$0xff]
      %v2119 = vpack.c.bf16 %v2084, %v2083
      %v2120 = vpack.c.bf16 %v2085, %v2085
      %2123 = vrot.lane.b32.xlu0 %v2119, 96
      %v2124 = vpop.permute.xlu0 %2123
      %2125 = vrot.lane.b32.xlu0 %v2120, 96
      %v2126 = vpop.permute.xlu0 %2125
      %v2128 = vsel %vm830, %v2124, 0
      %v2131 = vsel %vm830, %v2126, 0
      %2133 = vmatpush.bf16.msra.mxu0 0
      %2134 = vmatpush.bf16.msra.mxu0 0
      %2135 = vmatpush.bf16.msra.mxu0 0
      %2136 = vmatpush.bf16.msra.mxu0 0
      %2137 = vmatpush.bf16.msra.mxu0 0
      %2138 = vmatpush.bf16.msra.mxu0 0
      %2139 = vmatpush.bf16.msra.mxu0 %v827
      %2140 = vmatpush.bf16.msra.mxu0 %v826
      %2141 = vmatmul.bf16.gmra.mxu0 %v2128
      %v2142 = vpop.f32.mrf.mxu0
      %v2143 = vadd.f32 0.0, %v2142
      %v2144 = vpop.f32.mrf.mxu0
      %v2145 = vadd.f32 0.0, %v2144
      %2146 = vmatmul.bf16.gmra.mxu0 %v2131
      %v2147 = vpop.f32.mrf.mxu0
      %v2148 = vadd.f32 0.0, %v2147
      %v2149 = vpop.f32.mrf.mxu0
      %2150 = vdwg.mxu0
      %v2151 = vadd.f32 %v2116, %v2143
      %v2152 = vadd.f32 %v2117, %v2145
      %v2153 = vadd.f32 %v2118, %v2148
      %v2154 = vxor.u32 %v2151, 2147483648
      %v2155 = vxor.u32 %v2152, 2147483648
      %v2156 = vxor.u32 %v2153, 2147483648
      %v2157 = vmul.f32 %v2154, 1.442695
      %v2158 = vpow.pop %v2157
      %v2159 = vmul.f32 %v2155, 1.442695
      %v2160 = vpow.pop %v2159
      %v2161 = vmul.f32 %v2156, 1.442695
      %v2162 = vpow.pop %v2161
      %v2163 = vadd.f32 %v2158, 1.0
      %v2164 = vadd.f32 %v2160, 1.0
      %v2165 = vadd.f32 %v2162, 1.0
      %v2166 = vrcp.pop %v2163
      %v2167 = vmul.f32 %v2163, %v2166
      %v2168 = vsub.f32 1.0, %v2167
      %v2169 = vmul.f32 %v2166, %v2168
      %v2170 = vadd.f32 %v2166, %v2169
      %vm2171 = vweird.f32 %v2163
      %vm2172 = vweird.f32 %v2166
      %vm2173 = vmor %vm2171, %vm2172
      %v2174 = vsel %vm2173, %v2166, %v2170
      %v2175 = vand.u32 2147483647, %v2163
      %vm2176 = vcmp.eq.f32.partialorder %v2175, 8.507059e+37
      %v2177 = vand.u32 %v2163, 2147483648
      %v2178 = vor.u32 1.1754944e-38, %v2177
      %v2179 = vsel %vm2176, %v2178, %v2174
      %v2180 = vmul.f32 1.0, %v2179
      %v2181 = vrcp.pop %v2164
      %v2182 = vmul.f32 %v2164, %v2181
      %v2183 = vsub.f32 1.0, %v2182
      %v2184 = vmul.f32 %v2181, %v2183
      %v2185 = vadd.f32 %v2181, %v2184
      %vm2186 = vweird.f32 %v2164
      %vm2187 = vweird.f32 %v2181
      %vm2188 = vmor %vm2186, %vm2187
      %v2189 = vsel %vm2188, %v2181, %v2185
      %v2190 = vand.u32 2147483647, %v2164
      %vm2191 = vcmp.eq.f32.partialorder %v2190, 8.507059e+37
      %v2192 = vand.u32 %v2164, 2147483648
      %v2193 = vor.u32 1.1754944e-38, %v2192
      %v2194 = vsel %vm2191, %v2193, %v2189
      %v2195 = vmul.f32 1.0, %v2194
      %v2196 = vrcp.pop %v2165
      %v2197 = vmul.f32 %v2165, %v2196
      %v2198 = vsub.f32 1.0, %v2197
      %v2199 = vmul.f32 %v2196, %v2198
      %v2200 = vadd.f32 %v2196, %v2199
      %vm2201 = vweird.f32 %v2165
      %vm2202 = vweird.f32 %v2196
      %vm2203 = vmor %vm2201, %vm2202
      %v2204 = vsel %vm2203, %v2196, %v2200
      %v2205 = vand.u32 2147483647, %v2165
      %vm2206 = vcmp.eq.f32.partialorder %v2205, 8.507059e+37
      %v2207 = vand.u32 %v2165, 2147483648
      %v2208 = vor.u32 1.1754944e-38, %v2207
      %v2209 = vsel %vm2206, %v2208, %v2204
      %v2210 = vmul.f32 1.0, %v2209
      %v2211 = vadd.f32 %v2143, %v914
      %v2212 = vadd.f32 %v2145, %v914
      %v2213 = vadd.f32 %v2148, %v914
      %2217 = vrot.lane.b32.xlu0 %v2211, 64
      %v2218 = vpop.permute.xlu0 %2217
      %2219 = vrot.lane.b32.xlu0 %v2212, 64
      %v2220 = vpop.permute.xlu0 %2219
      %2221 = vrot.lane.b32.xlu0 %v2213, 64
      %v2222 = vpop.permute.xlu0 %2221
      %v2226 = vmul.f32 %v2180, %v2218
      %v2227 = vmul.f32 %v2195, %v2220
      %v2228 = vmul.f32 %v2210, %v2222
      %2232 = vrot.lane.b32.xlu0 %v2226, 64
      %v2233 = vpop.permute.xlu0 %2232
      %2234 = vrot.lane.b32.xlu0 %v2227, 64
      %v2235 = vpop.permute.xlu0 %2234
      %2236 = vrot.lane.b32.xlu0 %v2228, 64
      %v2237 = vpop.permute.xlu0 %2236
      %v2241 = vadd.f32 %v2116, %v2233
      %v2242 = vadd.f32 %v2117, %v2235
      %v2243 = vadd.f32 %v2118, %v2237
      %v2244 = vtanh.pop %v2241
      %v2245 = vtanh.pop %v2242
      %v2246 = vtanh.pop %v2243
      %v2247 = vsub.f32 1.0, %v2180
      %v2248 = vsub.f32 1.0, %v2195
      %v2249 = vsub.f32 1.0, %v2210
      %2253 = vrot.lane.b32.xlu0 %v2244, 96
      %v2254 = vpop.permute.xlu0 %2253
      %2255 = vrot.lane.b32.xlu0 %v2245, 96
      %v2256 = vpop.permute.xlu0 %2255
      %2257 = vrot.lane.b32.xlu0 %v2246, 96
      %v2258 = vpop.permute.xlu0 %2257
      %v2262 = vmul.f32 %v2247, %v2254
      %v2263 = vmul.f32 %v2248, %v2256
      %v2264 = vmul.f32 %v2249, %v2258
      %v2265 = vmul.f32 %v2180, %v2083
      %v2266 = vmul.f32 %v2195, %v2084
      %v2267 = vmul.f32 %v2210, %v2085
      %v2268 = vadd.f32 %v2262, %v2265
      %v2269 = vadd.f32 %v2263, %v2266
      %v2270 = vadd.f32 %v2264, %v2267
      %vm2271 = vcmp.gt.f32.partialorder %v803, 7.0
      %vm2272 = vcmp.gt.f32.partialorder %v804, 7.0
      %vm2273 = vcmp.gt.f32.partialorder %v805, 7.0
      %v2274 = vsel %vm2271, 1, 0
      %v2275 = vsel %vm2272, 1, 0
      %v2276 = vsel %vm2273, 1, 0
      %v2277 = vcvt.s32.f32 %v2274
      %v2278 = vcvt.s32.f32 %v2275
      %v2279 = vcvt.s32.f32 %v2276
      %2281 = vset.pattern.permute.xlu0 0
      %2282 = vperm.xlu0 %2281, %v2277
      %v2283 = vpop.permute.xlu0 %2282
      %2286 = vset.pattern.permute.xlu0 0
      %2287 = vperm.xlu0 %2286, %v2278
      %v2288 = vpop.permute.xlu0 %2287
      %2291 = vset.pattern.permute.xlu0 0
      %2292 = vperm.xlu0 %2291, %v2279
      %v2293 = vpop.permute.xlu0 %2292
      %v2295 = vmul.f32 %v2283, %v2268
      %v2296 = vmul.f32 %v2288, %v2269
      %v2297 = vmul.f32 %v2293, %v2270
      %v2298 = vadd.f32 %v2113, %v2295
      %v2299 = vadd.f32 %v2114, %v2296
      %v2300 = vadd.f32 %v2115, %v2297
      %2302 = vset.pattern.permute.xlu0 0
      %2303 = vperm.xlu0 %2302, %v803
      %v2304 = vpop.permute.xlu0 %2303
      %2307 = vset.pattern.permute.xlu0 0
      %2308 = vperm.xlu0 %2307, %v804
      %v2309 = vpop.permute.xlu0 %2308
      %2312 = vset.pattern.permute.xlu0 0
      %2313 = vperm.xlu0 %2312, %v805
      %v2314 = vpop.permute.xlu0 %2313
      %v2316 = vrcp.pop %v2304
      %v2317 = vmul.f32 %v2304, %v2316
      %v2318 = vsub.f32 1.0, %v2317
      %v2319 = vmul.f32 %v2316, %v2318
      %v2320 = vadd.f32 %v2316, %v2319
      %vm2321 = vweird.f32 %v2304
      %vm2322 = vweird.f32 %v2316
      %vm2323 = vmor %vm2321, %vm2322
      %v2324 = vsel %vm2323, %v2316, %v2320
      %v2325 = vand.u32 2147483647, %v2304
      %vm2326 = vcmp.eq.f32.partialorder %v2325, 8.507059e+37
      %v2327 = vand.u32 %v2304, 2147483648
      %v2328 = vor.u32 1.1754944e-38, %v2327
      %v2329 = vsel %vm2326, %v2328, %v2324
      %v2330 = vmul.f32 %v2298, %v2329
      %v2331 = vrcp.pop %v2309
      %v2332 = vmul.f32 %v2309, %v2331
      %v2333 = vsub.f32 1.0, %v2332
      %v2334 = vmul.f32 %v2331, %v2333
      %v2335 = vadd.f32 %v2331, %v2334
      %vm2336 = vweird.f32 %v2309
      %vm2337 = vweird.f32 %v2331
      %vm2338 = vmor %vm2336, %vm2337
      %v2339 = vsel %vm2338, %v2331, %v2335
      %v2340 = vand.u32 2147483647, %v2309
      %vm2341 = vcmp.eq.f32.partialorder %v2340, 8.507059e+37
      %v2342 = vand.u32 %v2309, 2147483648
      %v2343 = vor.u32 1.1754944e-38, %v2342
      %v2344 = vsel %vm2341, %v2343, %v2339
      %v2345 = vmul.f32 %v2299, %v2344
      %v2346 = vrcp.pop %v2314
      %v2347 = vmul.f32 %v2314, %v2346
      %v2348 = vsub.f32 1.0, %v2347
      %v2349 = vmul.f32 %v2346, %v2348
      %v2350 = vadd.f32 %v2346, %v2349
      %vm2351 = vweird.f32 %v2314
      %vm2352 = vweird.f32 %v2346
      %vm2353 = vmor %vm2351, %vm2352
      %v2354 = vsel %vm2353, %v2346, %v2350
      %v2355 = vand.u32 2147483647, %v2314
      %vm2356 = vcmp.eq.f32.partialorder %v2355, 8.507059e+37
      %v2357 = vand.u32 %v2314, 2147483648
      %v2358 = vor.u32 1.1754944e-38, %v2357
      %v2359 = vsel %vm2356, %v2358, %v2354
      %v2360 = vmul.f32 %v2300, %v2359
      %2364 = vrot.lane.b32.xlu0 %v2330, 96
      %v2365 = vpop.permute.xlu0 %2364
      %2366 = vrot.lane.b32.xlu0 %v2345, 96
      %v2367 = vpop.permute.xlu0 %2366
      %2368 = vrot.lane.b32.xlu0 %v2360, 96
      %v2369 = vpop.permute.xlu0 %2368
      %2373 = vst.msk [vmem:[%s302] sm:$0xff] %vm830, %v2365
      %2374 = vst.msk [vmem:[%s302 + $0x8] sm:$0xff] %vm830, %v2367
      %2375 = vst.msk [vmem:[%s302 + $0x10] sm:$0xff] %vm830, %v2369
      %s2376 = smul.u32 3, %s18
      %p2377 = scmp.lt.s32.totalorder %s2376, 5
      %s2378 = scalar_select %p2377, %s2376, 5
      %s2379 = smul.addr %s2378, 8
      %s2380 = scalar_lea.vmem %s7, %s2379
      // Predicated region
      $region49: #{_forward_core.3} parent=47 // pred_check
        %p2381 = pneg %p193
      $region50: #{_forward_core.3} parent=47 // pred_check_branch
        %2383 = sbr.rel (%p2381) target = $region52
      $region51: #{_forward_core.3} parent=47 // pred_region
        %s2384 = smul.u32 3, %s18
      $region52: #{_forward_core.3} parent=47 // pred_fallthru
        _
    $region48: #{_forward_core.3} parent=5 // pred_fallthru
      _
    %p2385 = scmp.le.s32.totalorder 2, %s13
    // Predicated region
    $region53: #{_forward_core.3} parent=5 // pred_check
      %p2386 = pneg %p2385
    $region54: #{_forward_core.3} parent=5 // pred_check_branch
      %2388 = sbr.rel (%p2386) target = $region56
    $region55: #{_forward_core.3} parent=5 // pred_region
      %s2389 = ssub.s32 %s13, 2
      // Predicated region
      $region57: #{_forward_core.3} parent=55 // pred_check
        %p2390 = pneg %p199
      $region58: #{_forward_core.3} parent=55 // pred_check_branch
        %2392 = sbr.rel (%p2390) target = $region60
      $region59: #{_forward_core.3} parent=55 // pred_region
        %s2393 = smul.u32 3, %s19
        %p2394 = scmp.lt.s32.totalorder %s2393, 5
        %s2395 = scalar_select %p2394, %s2393, 5
        %s2396 = smul.addr %s2395, 8
        %s2397 = scalar_lea.vmem %s7, %s2396
      $region60: #{_forward_core.3} parent=55 // pred_fallthru
        _
    $region56: #{_forward_core.3} parent=5 // pred_fallthru
      _
  $region6: #{_forward_core.3} parent=0 // loop_footer
    %s17 = sadd.s32 1, %s13
  $region7: #{_forward_core.3} parent=0 // loop_footer_branch
    %12 = sbr.rel target = $region3
  $region8: #{_forward_core.3} parent=0 // loop_exit
    _

// kernel: _forward_core.5
$region0: #{_forward_core.5}
  #allocation0 [shape = 'u32[]', space=smem, size = 0x4, offset = 0x4, fixed_abs, tag = 'smem constant byte address 0x4 - core index']
  #allocation1 [shape = 'u32[72,128]{1,0:T(1,128)}', space=vmem, size = 0x9000, scoped, tag = 'internal scratch']
  #allocation2 [shape = 'f32[32,96]{1,0:T(8,128)}', space=vmem, size = 0x4000, scoped, tag = 'scratch operand']
  #allocation3 [shape = 'f32[32,96]{1,0:T(8,128)}', space=vmem, size = 0x4000, scoped, tag = 'scratch operand']
  %s0 = inlined_call_operand.vmem [shape: f32[32,32], index: 0, kind: input, shape index: {}]
  %s1 = inlined_call_operand.vmem [shape: f32[8,32], index: 1, kind: input, shape index: {}]
  %s2 = inlined_call_operand.vmem [shape: f32[8,32], index: 2, kind: input, shape index: {}]
  %s3 = inlined_call_operand.vmem [shape: bf16[32,96], index: 3, kind: input, shape index: {}]
  %s4 = inlined_call_operand.vmem [shape: bf16[32,96], index: 4, kind: input, shape index: {}]
  %s5 = inlined_call_operand.vmem [shape: f32[1,96], index: 5, kind: input, shape index: {}]
  %s6 = inlined_call_operand.vmem [shape: f32[1,32], index: 6, kind: input, shape index: {}]
  %s7 = inlined_call_operand.vmem [shape: bf16[32,96], index: 7, kind: input, shape index: {}]
  %s8 = inlined_call_operand.vmem [shape: bf16[32,96], index: 8, kind: input, shape index: {}]
  %s9 = inlined_call_operand.vmem [shape: f32[1,96], index: 9, kind: input, shape index: {}]
  %s10 = inlined_call_operand.vmem [shape: f32[1,32], index: 10, kind: input, shape index: {}]
  %s11 = inlined_call_operand.vmem [shape: bf16[128,64], index: 11, kind: input, shape index: {}]
  %s12 = inlined_call_operand.vmem [shape: f32[1,64], index: 12, kind: input, shape index: {}]
  %s13 = inlined_call_operand.vmem [shape: f32[1,64], index: 13, kind: input, shape index: {}]
  %s14 = inlined_call_operand.vmem [shape: f32[1,64], index: 14, kind: input, shape index: {}]
  %s15 = inlined_call_operand.vmem [shape: bf16[64,32], index: 15, kind: input, shape index: {}]
  %s16 = inlined_call_operand.vmem [shape: f32[1,32], index: 16, kind: input, shape index: {}]
  %s17 = inlined_call_operand.vmem [shape: f32[1,32], index: 17, kind: input, shape index: {}]
  %s18 = inlined_call_operand.vmem [shape: f32[1,32], index: 18, kind: input, shape index: {}]
  %s19 = inlined_call_operand.vmem [shape: bf16[64,32], index: 19, kind: input, shape index: {}]
  %s20 = inlined_call_operand.vmem [shape: f32[1,32], index: 20, kind: input, shape index: {}]
  %s21 = inlined_call_operand.vmem [shape: f32[1,2], index: 21, kind: output, shape index: {}]
  %s22 = sld [smem:[#allocation0]]
  $region94: #{_forward_core.5} parent=0
    _
  %s24 = ssub.s32 1, %s22
  %s25 = scalar_select 0, %s24, %s22
  // Predicated region
  $region2: #{_forward_core.5} parent=0 // pred_check
    _
  $region3: #{_forward_core.5} parent=0 // pred_check_branch
    %27 = sbr.rel (0) target = $region5
  $region4: #{_forward_core.5} parent=0 // pred_region
    _
  $region5: #{_forward_core.5} parent=0 // pred_fallthru
    _
  // Predicated region
  $region6: #{_forward_core.5} parent=0 // pred_check
    _
  $region7: #{_forward_core.5} parent=0 // pred_check_branch
    %29 = sbr.rel (0) target = $region9
  $region8: #{_forward_core.5} parent=0 // pred_region
    _
  $region9: #{_forward_core.5} parent=0 // pred_fallthru
    _
  // Predicated region
  $region10: #{_forward_core.5} parent=0 // pred_check
    _
  $region11: #{_forward_core.5} parent=0 // pred_check_branch
    %31 = sbr.rel (0) target = $region13
  $region12: #{_forward_core.5} parent=0 // pred_region
    _
  $region13: #{_forward_core.5} parent=0 // pred_fallthru
    _
  // Predicated region
  $region14: #{_forward_core.5} parent=0 // pred_check
    _
  $region15: #{_forward_core.5} parent=0 // pred_check_branch
    %33 = sbr.rel (0) target = $region17
  $region16: #{_forward_core.5} parent=0 // pred_region
    _
  $region17: #{_forward_core.5} parent=0 // pred_fallthru
    _
  // Predicated region
  $region18: #{_forward_core.5} parent=0 // pred_check
    _
  $region19: #{_forward_core.5} parent=0 // pred_check_branch
    %35 = sbr.rel (0) target = $region21
  $region20: #{_forward_core.5} parent=0 // pred_region
    _
  $region21: #{_forward_core.5} parent=0 // pred_fallthru
    _
  // Predicated region
  $region22: #{_forward_core.5} parent=0 // pred_check
    _
  $region23: #{_forward_core.5} parent=0 // pred_check_branch
    %37 = sbr.rel (0) target = $region25
  $region24: #{_forward_core.5} parent=0 // pred_region
    _
  $region25: #{_forward_core.5} parent=0 // pred_fallthru
    _
  // Predicated region
  $region26: #{_forward_core.5} parent=0 // pred_check
    _
  $region27: #{_forward_core.5} parent=0 // pred_check_branch
    %39 = sbr.rel (0) target = $region29
  $region28: #{_forward_core.5} parent=0 // pred_region
    _
  $region29: #{_forward_core.5} parent=0 // pred_fallthru
    _
  // Predicated region
  $region30: #{_forward_core.5} parent=0 // pred_check
    _
  $region31: #{_forward_core.5} parent=0 // pred_check_branch
    %41 = sbr.rel (0) target = $region33
  $region32: #{_forward_core.5} parent=0 // pred_region
    _
  $region33: #{_forward_core.5} parent=0 // pred_fallthru
    _
  // Predicated region
  $region34: #{_forward_core.5} parent=0 // pred_check
    _
  $region35: #{_forward_core.5} parent=0 // pred_check_branch
    %43 = sbr.rel (0) target = $region37
  $region36: #{_forward_core.5} parent=0 // pred_region
    _
  $region37: #{_forward_core.5} parent=0 // pred_fallthru
    _
  // Predicated region
  $region38: #{_forward_core.5} parent=0 // pred_check
    _
  $region39: #{_forward_core.5} parent=0 // pred_check_branch
    %45 = sbr.rel (0) target = $region41
  $region40: #{_forward_core.5} parent=0 // pred_region
    _
  $region41: #{_forward_core.5} parent=0 // pred_fallthru
    _
  // Predicated region
  $region42: #{_forward_core.5} parent=0 // pred_check
    _
  $region43: #{_forward_core.5} parent=0 // pred_check_branch
    %47 = sbr.rel (0) target = $region45
  $region44: #{_forward_core.5} parent=0 // pred_region
    _
  $region45: #{_forward_core.5} parent=0 // pred_fallthru
    _
  // Predicated region
  $region46: #{_forward_core.5} parent=0 // pred_check
    _
  $region47: #{_forward_core.5} parent=0 // pred_check_branch
    %49 = sbr.rel (0) target = $region49
  $region48: #{_forward_core.5} parent=0 // pred_region
    _
  $region49: #{_forward_core.5} parent=0 // pred_fallthru
    _
  // Predicated region
  $region50: #{_forward_core.5} parent=0 // pred_check
    _
  $region51: #{_forward_core.5} parent=0 // pred_check_branch
    %51 = sbr.rel (0) target = $region53
  $region52: #{_forward_core.5} parent=0 // pred_region
    _
  $region53: #{_forward_core.5} parent=0 // pred_fallthru
    _
  // Predicated region
  $region54: #{_forward_core.5} parent=0 // pred_check
    _
  $region55: #{_forward_core.5} parent=0 // pred_check_branch
    %53 = sbr.rel (0) target = $region57
  $region56: #{_forward_core.5} parent=0 // pred_region
    _
  $region57: #{_forward_core.5} parent=0 // pred_fallthru
    _
  // Predicated region
  $region58: #{_forward_core.5} parent=0 // pred_check
    _
  $region59: #{_forward_core.5} parent=0 // pred_check_branch
    %55 = sbr.rel (0) target = $region61
  $region60: #{_forward_core.5} parent=0 // pred_region
    _
  $region61: #{_forward_core.5} parent=0 // pred_fallthru
    _
  // Predicated region
  $region62: #{_forward_core.5} parent=0 // pred_check
    _
  $region63: #{_forward_core.5} parent=0 // pred_check_branch
    %57 = sbr.rel (0) target = $region65
  $region64: #{_forward_core.5} parent=0 // pred_region
    _
  $region65: #{_forward_core.5} parent=0 // pred_fallthru
    _
  // Predicated region
  $region66: #{_forward_core.5} parent=0 // pred_check
    _
  $region67: #{_forward_core.5} parent=0 // pred_check_branch
    %59 = sbr.rel (0) target = $region69
  $region68: #{_forward_core.5} parent=0 // pred_region
    _
  $region69: #{_forward_core.5} parent=0 // pred_fallthru
    _
  // Predicated region
  $region70: #{_forward_core.5} parent=0 // pred_check
    _
  $region71: #{_forward_core.5} parent=0 // pred_check_branch
    %61 = sbr.rel (0) target = $region73
  $region72: #{_forward_core.5} parent=0 // pred_region
    _
  $region73: #{_forward_core.5} parent=0 // pred_fallthru
    _
  // Predicated region
  $region74: #{_forward_core.5} parent=0 // pred_check
    _
  $region75: #{_forward_core.5} parent=0 // pred_check_branch
    %63 = sbr.rel (0) target = $region77
  $region76: #{_forward_core.5} parent=0 // pred_region
    _
  $region77: #{_forward_core.5} parent=0 // pred_fallthru
    _
  // Predicated region
  $region78: #{_forward_core.5} parent=0 // pred_check
    _
  $region79: #{_forward_core.5} parent=0 // pred_check_branch
    %65 = sbr.rel (0) target = $region81
  $region80: #{_forward_core.5} parent=0 // pred_region
    _
  $region81: #{_forward_core.5} parent=0 // pred_fallthru
    _
  // Predicated region
  $region82: #{_forward_core.5} parent=0 // pred_check
    _
  $region83: #{_forward_core.5} parent=0 // pred_check_branch
    %67 = sbr.rel (0) target = $region85
  $region84: #{_forward_core.5} parent=0 // pred_region
    _
  $region85: #{_forward_core.5} parent=0 // pred_fallthru
    _
  %v69 = vld [vmem:[%s1] sm:$0xff]
  %v70 = vld [vmem:[%s2] sm:$0xff]
  %v71 = vld [vmem:[%s11] sm:$0xf]
  %v72 = vld [vmem:[%s11 + $0x4] sm:$0xf]
  %v73 = vld [vmem:[%s11 + $0x8] sm:$0xf]
  %v74 = vld [vmem:[%s11 + $0xc] sm:$0xf]
  %v75 = vld [vmem:[%s11 + $0x10] sm:$0xf]
  %v76 = vld [vmem:[%s11 + $0x14] sm:$0xf]
  %v77 = vld [vmem:[%s11 + $0x18] sm:$0xf]
  %v78 = vld [vmem:[%s11 + $0x1c] sm:$0xf]
  %v79 = vld [vmem:[%s11 + $0x20] sm:$0xf]
  %v80 = vld [vmem:[%s11 + $0x24] sm:$0xf]
  %v81 = vld [vmem:[%s11 + $0x28] sm:$0xf]
  %v82 = vld [vmem:[%s11 + $0x2c] sm:$0xf]
  %v83 = vld [vmem:[%s11 + $0x30] sm:$0xf]
  %v84 = vld [vmem:[%s11 + $0x34] sm:$0xf]
  %v85 = vld [vmem:[%s11 + $0x38] sm:$0xf]
  %v86 = vld [vmem:[%s11 + $0x3c] sm:$0xf]
  %v87 = vld [vmem:[%s12] sm:$0x1]
  %v88 = vld [vmem:[%s13] sm:$0x1]
  %v89 = vld [vmem:[%s14] sm:$0x1]
  %v90 = vld [vmem:[%s15] sm:$0xf]
  %v91 = vld [vmem:[%s15 + $0x4] sm:$0xf]
  %v92 = vld [vmem:[%s15 + $0x8] sm:$0xf]
  %v93 = vld [vmem:[%s15 + $0xc] sm:$0xf]
  %v94 = vld [vmem:[%s15 + $0x10] sm:$0xf]
  %v95 = vld [vmem:[%s15 + $0x14] sm:$0xf]
  %v96 = vld [vmem:[%s15 + $0x18] sm:$0xf]
  %v97 = vld [vmem:[%s15 + $0x1c] sm:$0xf]
  %v98 = vld [vmem:[%s16] sm:$0x1]
  %v99 = vld [vmem:[%s17] sm:$0x1]
  %v100 = vld [vmem:[%s18] sm:$0x1]
  %v101 = vmul.f32 %v69, %v70
  %v102 = vsub.f32 %v69, %v70
  %104 = vrot.lane.b32.xlu0 %v70, 32
  %v105 = vpop.permute.xlu0 %104
  %108 = vrot.lane.b32.xlu0 %v101, 64
  %v109 = vpop.permute.xlu0 %108
  %112 = vrot.lane.b32.xlu0 %v102, 96
  %v113 = vpop.permute.xlu0 %112
  %vm115 = vcmask 261120
  %v116 = vsel %vm115, %v69, %v105
  %vm117 = vcmask 523264
  %v118 = vsel %vm117, %v116, %v109
  %vm119 = vcmask 785408
  %v120 = vsel %vm119, %v118, %v113
  %v121 = vpack.c.bf16 %v120, %v120
  %v123 = vperm.slane %v87, 0
  %v141 = vunpack.c.l.b16 %v71
  %v142 = vunpack.c.l.b16 %v72
  %v143 = vunpack.c.l.b16 %v73
  %v144 = vunpack.c.l.b16 %v74
  %v145 = vunpack.c.l.b16 %v75
  %v146 = vunpack.c.l.b16 %v76
  %v147 = vunpack.c.l.b16 %v77
  %v148 = vunpack.c.l.b16 %v78
  %v149 = vunpack.c.l.b16 %v79
  %v150 = vunpack.c.l.b16 %v80
  %v151 = vunpack.c.l.b16 %v81
  %v152 = vunpack.c.l.b16 %v82
  %v153 = vunpack.c.l.b16 %v83
  %v154 = vunpack.c.l.b16 %v84
  %v155 = vunpack.c.l.b16 %v85
  %v156 = vunpack.c.l.b16 %v86
  %v157 = vpack.c.b16 %v142, %v141
  %v158 = vpack.c.b16 %v144, %v143
  %v159 = vpack.c.b16 %v146, %v145
  %v160 = vpack.c.b16 %v148, %v147
  %v161 = vpack.c.b16 %v150, %v149
  %v162 = vpack.c.b16 %v152, %v151
  %v163 = vpack.c.b16 %v154, %v153
  %v164 = vpack.c.b16 %v156, %v155
  %173 = vmatpush.bf16.msra.mxu0 %v164
  %174 = vmatpush.bf16.msra.mxu0 %v163
  %175 = vmatpush.bf16.msra.mxu0 %v162
  %176 = vmatpush.bf16.msra.mxu0 %v161
  %177 = vmatpush.bf16.msra.mxu0 %v160
  %178 = vmatpush.bf16.msra.mxu0 %v159
  %179 = vmatpush.bf16.msra.mxu0 %v158
  %180 = vmatpush.bf16.msra.mxu0 %v157
  %181 = vmatmul.bf16.gmra.mxu0 %v121
  %v182 = vpop.f32.mrf.mxu0
  %v183 = vadd.f32 %v123, %v182
  %v184 = vpop.f32.mrf.mxu0
  %185 = vdwg.mxu0
  %v186 = vsel %vm117, %v183, 0.0
  %187 = vadd.xlane.f32.xlu0 %v186
  %v188 = vpop.xlane.xlu0 %187
  %v189 = vrcp.pop 64.0
  %v190 = vmul.f32 64.0, %v189
  %v191 = vsub.f32 1.0, %v190
  %v192 = vmul.f32 %v189, %v191
  %v193 = vadd.f32 %v189, %v192
  %vm194 = vweird.f32 %v189
  %v195 = vsel %vm194, %v189, %v193
  %v196 = vmul.f32 %v188, %v195
  %v197 = vsub.f32 %v183, %v196
  %v198 = vmul.f32 %v197, %v197
  %v199 = vsel %vm117, %v198, 0.0
  %200 = vadd.xlane.f32.xlu0 %v199
  %v201 = vpop.xlane.xlu0 %200
  %v202 = vmul.f32 %v201, %v195
  %v203 = vadd.f32 %v202, 1e-05
  %v204 = vrsqrt.pop %v203
  %v205 = vmul.f32 %v204, %v203
  %v206 = vmul.f32 %v205, %v204
  %v207 = vmul.f32 0.5, %v206
  %v208 = vsub.f32 1.5, %v207
  %v209 = vmul.f32 %v204, %v208
  %vm210 = vweird.f32 %v203
  %vm211 = vweird.f32 %v204
  %vm212 = vmor %vm210, %vm211
  %v213 = vsel %vm212, %v204, %v209
  %v214 = vmul.f32 %v197, %v213
  %v216 = vperm.slane %v88, 0
  %v218 = vmul.f32 %v214, %v216
  %v220 = vperm.slane %v89, 0
  %v222 = vadd.f32 %v218, %v220
  %v223 = vmax.f32 %v222, 0.0
  %v224 = vpack.c.bf16 %v223, %v223
  %v226 = vperm.slane %v98, 0
  %v236 = vunpack.c.l.b16 %v90
  %v237 = vunpack.c.l.b16 %v91
  %v238 = vunpack.c.l.b16 %v92
  %v239 = vunpack.c.l.b16 %v93
  %v240 = vunpack.c.l.b16 %v94
  %v241 = vunpack.c.l.b16 %v95
  %v242 = vunpack.c.l.b16 %v96
  %v243 = vunpack.c.l.b16 %v97
  %v244 = vpack.c.b16 %v237, %v236
  %v245 = vpack.c.b16 %v239, %v238
  %v246 = vpack.c.b16 %v241, %v240
  %v247 = vpack.c.b16 %v243, %v242
  %v253 = vsel %vm117, %v224, 0
  %255 = vmatpush.bf16.msra.mxu0 0
  %256 = vmatpush.bf16.msra.mxu0 0
  %257 = vmatpush.bf16.msra.mxu0 0
  %258 = vmatpush.bf16.msra.mxu0 0
  %259 = vmatpush.bf16.msra.mxu0 %v247
  %260 = vmatpush.bf16.msra.mxu0 %v246
  %261 = vmatpush.bf16.msra.mxu0 %v245
  %262 = vmatpush.bf16.msra.mxu0 %v244
  %263 = vmatmul.bf16.gmra.mxu0 %v253
  %v264 = vpop.f32.mrf.mxu0
  %v265 = vadd.f32 %v226, %v264
  %v266 = vpop.f32.mrf.mxu0
  %267 = vdwg.mxu0
  %v268 = vsel %vm115, %v265, 0.0
  %269 = vadd.xlane.f32.xlu0 %v268
  %v270 = vpop.xlane.xlu0 %269
  %v271 = vrcp.pop 32.0
  %v272 = vmul.f32 32.0, %v271
  %v273 = vsub.f32 1.0, %v272
  %v274 = vmul.f32 %v271, %v273
  %v275 = vadd.f32 %v271, %v274
  %vm276 = vweird.f32 %v271
  %v277 = vsel %vm276, %v271, %v275
  %v278 = vmul.f32 %v270, %v277
  %v279 = vsub.f32 %v265, %v278
  %v280 = vmul.f32 %v279, %v279
  %v281 = vsel %vm115, %v280, 0.0
  %282 = vadd.xlane.f32.xlu0 %v281
  %v283 = vpop.xlane.xlu0 %282
  %v284 = vmul.f32 %v283, %v277
  %v285 = vadd.f32 %v284, 1e-05
  %v286 = vrsqrt.pop %v285
  %v287 = vmul.f32 %v286, %v285
  %v288 = vmul.f32 %v287, %v286
  %v289 = vmul.f32 0.5, %v288
  %v290 = vsub.f32 1.5, %v289
  %v291 = vmul.f32 %v286, %v290
  %vm292 = vweird.f32 %v285
  %vm293 = vweird.f32 %v286
  %vm294 = vmor %vm292, %vm293
  %v295 = vsel %vm294, %v286, %v291
  %v296 = vmul.f32 %v279, %v295
  %v298 = vperm.slane %v99, 0
  %v300 = vmul.f32 %v296, %v298
  %v302 = vperm.slane %v100, 0
  %v304 = vadd.f32 %v300, %v302
  %v305 = vld [vmem:[%s0] sm:$0xff]
  %v306 = vld [vmem:[%s0 + $0x8] sm:$0xff]
  %v307 = vld [vmem:[%s0 + $0x10] sm:$0xff]
  %v308 = vld [vmem:[%s0 + $0x18] sm:$0xff]
  %v309 = vpack.c.bf16 %v306, %v305
  %v310 = vpack.c.bf16 %v308, %v307
  %v311 = vld [vmem:[%s3] sm:$0xf]
  %v312 = vld [vmem:[%s3 + $0x4] sm:$0xf]
  %v313 = vld [vmem:[%s3 + $0x8] sm:$0xf]
  %v314 = vld [vmem:[%s3 + $0xc] sm:$0xf]
  %v315 = vld [vmem:[%s5] sm:$0x1]
  %v317 = vperm.slane %v315, 0
  %v323 = vunpack.c.l.b16 %v311
  %v324 = vunpack.c.l.b16 %v312
  %v325 = vunpack.c.l.b16 %v313
  %v326 = vunpack.c.l.b16 %v314
  %v327 = vpack.c.b16 %v324, %v323
  %v328 = vpack.c.b16 %v326, %v325
  %v332 = vsel %vm115, %v309, 0
  %v335 = vsel %vm115, %v310, 0
  %337 = vmatpush.bf16.msra.mxu0 0
  %338 = vmatpush.bf16.msra.mxu0 0
  %339 = vmatpush.bf16.msra.mxu0 0
  %340 = vmatpush.bf16.msra.mxu0 0
  %341 = vmatpush.bf16.msra.mxu0 0
  %342 = vmatpush.bf16.msra.mxu0 0
  %343 = vmatpush.bf16.msra.mxu0 %v328
  %344 = vmatpush.bf16.msra.mxu0 %v327
  %345 = vmatmul.bf16.gmra.mxu0 %v332
  %v346 = vpop.f32.mrf.mxu0
  %v347 = vadd.f32 %v317, %v346
  %v348 = vpop.f32.mrf.mxu0
  %v349 = vadd.f32 %v317, %v348
  %350 = vmatmul.bf16.gmra.mxu0 %v335
  %v351 = vpop.f32.mrf.mxu0
  %v352 = vadd.f32 %v317, %v351
  %v353 = vpop.f32.mrf.mxu0
  %v354 = vadd.f32 %v317, %v353
  %355 = vdwg.mxu0
  %356 = vst.msk [vmem:[#allocation2] sm:$0xff] %vm119, %v347
  %357 = vst.msk [vmem:[#allocation2 + $0x8] sm:$0xff] %vm119, %v349
  %358 = vst.msk [vmem:[#allocation2 + $0x10] sm:$0xff] %vm119, %v352
  %359 = vst.msk [vmem:[#allocation2 + $0x18] sm:$0xff] %vm119, %v354
  %v360 = vld [vmem:[%s7] sm:$0xf]
  %v361 = vld [vmem:[%s7 + $0x4] sm:$0xf]
  %v362 = vld [vmem:[%s7 + $0x8] sm:$0xf]
  %v363 = vld [vmem:[%s7 + $0xc] sm:$0xf]
  %v364 = vld [vmem:[%s9] sm:$0x1]
  %v366 = vperm.slane %v364, 0
  %v372 = vunpack.c.l.b16 %v360
  %v373 = vunpack.c.l.b16 %v361
  %v374 = vunpack.c.l.b16 %v362
  %v375 = vunpack.c.l.b16 %v363
  %v376 = vpack.c.b16 %v373, %v372
  %v377 = vpack.c.b16 %v375, %v374
  %380 = vmatpush.bf16.msra.mxu0 0
  %381 = vmatpush.bf16.msra.mxu0 0
  %382 = vmatpush.bf16.msra.mxu0 0
  %383 = vmatpush.bf16.msra.mxu0 0
  %384 = vmatpush.bf16.msra.mxu0 0
  %385 = vmatpush.bf16.msra.mxu0 0
  %386 = vmatpush.bf16.msra.mxu0 %v377
  %387 = vmatpush.bf16.msra.mxu0 %v376
  %388 = vmatmul.bf16.gmra.mxu0 %v332
  %v389 = vpop.f32.mrf.mxu0
  %v390 = vadd.f32 %v366, %v389
  %v391 = vpop.f32.mrf.mxu0
  %v392 = vadd.f32 %v366, %v391
  %393 = vmatmul.bf16.gmra.mxu0 %v335
  %v394 = vpop.f32.mrf.mxu0
  %v395 = vadd.f32 %v366, %v394
  %v396 = vpop.f32.mrf.mxu0
  %v397 = vadd.f32 %v366, %v396
  %398 = vdwg.mxu0
  %399 = vst.msk [vmem:[#allocation3] sm:$0xff] %vm119, %v390
  %400 = vst.msk [vmem:[#allocation3 + $0x8] sm:$0xff] %vm119, %v392
  %401 = vst.msk [vmem:[#allocation3 + $0x10] sm:$0xff] %vm119, %v395
  %402 = vst.msk [vmem:[#allocation3 + $0x18] sm:$0xff] %vm119, %v397
  %v403 = vld [vmem:[%s6] sm:$0x1]
  %v405 = vperm.slane %v403, 0
  %v407 = vadd.f32 %v405, 0.0
  %v408 = vld [vmem:[%s10] sm:$0x1]
  %v410 = vperm.slane %v408, 0
  %v412 = vadd.f32 %v410, 0.0
  %v413 = vld [vmem:[%s4] sm:$0xf]
  %v414 = vld [vmem:[%s4 + $0x4] sm:$0xf]
  %v415 = vld [vmem:[%s4 + $0x8] sm:$0xf]
  %v416 = vld [vmem:[%s4 + $0xc] sm:$0xf]
  %v417 = vld [vmem:[%s8] sm:$0xf]
  %v418 = vld [vmem:[%s8 + $0x4] sm:$0xf]
  %v419 = vld [vmem:[%s8 + $0x8] sm:$0xf]
  %v420 = vld [vmem:[%s8 + $0xc] sm:$0xf]
  %v421 = vld [vmem:[#allocation2] sm:$0xff]
  %v426 = vunpack.c.l.b16 %v413
  %v427 = vunpack.c.l.b16 %v414
  %v428 = vunpack.c.l.b16 %v415
  %v429 = vunpack.c.l.b16 %v416
  %v430 = vpack.c.b16 %v427, %v426
  %v431 = vpack.c.b16 %v429, %v428
  %v435 = vsel %vm115, 0, 0
  %437 = vmatpush.bf16.msra.mxu0 0
  %438 = vmatpush.bf16.msra.mxu0 0
  %439 = vmatpush.bf16.msra.mxu0 0
  %440 = vmatpush.bf16.msra.mxu0 0
  %441 = vmatpush.bf16.msra.mxu0 0
  %442 = vmatpush.bf16.msra.mxu0 0
  %443 = vmatpush.bf16.msra.mxu0 %v431
  %444 = vmatpush.bf16.msra.mxu0 %v430
  %445 = vmatmul.bf16.gmra.mxu0 %v435
  %v446 = vpop.f32.mrf.mxu0
  %v447 = vadd.f32 0.0, %v446
  %v448 = vpop.f32.mrf.mxu0
  %449 = vdwg.mxu0
  %v450 = vadd.f32 %v421, %v447
  %v451 = vxor.u32 %v450, 2147483648
  %v452 = vmul.f32 %v451, 1.442695
  %v453 = vpow.pop %v452
  %v454 = vadd.f32 %v453, 1.0
  %v455 = vrcp.pop %v454
  %v456 = vmul.f32 %v454, %v455
  %v457 = vsub.f32 1.0, %v456
  %v458 = vmul.f32 %v455, %v457
  %v459 = vadd.f32 %v455, %v458
  %vm460 = vweird.f32 %v454
  %vm461 = vweird.f32 %v455
  %vm462 = vmor %vm460, %vm461
  %v463 = vsel %vm462, %v455, %v459
  %v464 = vand.u32 2147483647, %v454
  %vm465 = vcmp.eq.f32.partialorder %v464, 8.507059e+37
  %v466 = vand.u32 %v454, 2147483648
  %v467 = vor.u32 1.1754944e-38, %v466
  %v468 = vsel %vm465, %v467, %v463
  %v469 = vmul.f32 1.0, %v468
  %471 = vrot.lane.b32.xlu0 %v407, 64
  %v472 = vpop.permute.xlu0 %471
  %v474 = vadd.f32 %v447, %v472
  %476 = vrot.lane.b32.xlu0 %v474, 64
  %v477 = vpop.permute.xlu0 %476
  %v479 = vmul.f32 %v469, %v477
  %481 = vrot.lane.b32.xlu0 %v479, 64
  %v482 = vpop.permute.xlu0 %481
  %v484 = vadd.f32 %v421, %v482
  %v485 = vtanh.pop %v484
  %v486 = vsub.f32 1.0, %v469
  %488 = vrot.lane.b32.xlu0 %v485, 96
  %v489 = vpop.permute.xlu0 %488
  %v491 = vmul.f32 %v486, %v489
  %v492 = vmul.f32 %v469, 0.0
  %v493 = vadd.f32 %v491, %v492
  %v494 = vld [vmem:[#allocation3 + $0x18] sm:$0xff]
  %v499 = vunpack.c.l.b16 %v417
  %v500 = vunpack.c.l.b16 %v418
  %v501 = vunpack.c.l.b16 %v419
  %v502 = vunpack.c.l.b16 %v420
  %v503 = vpack.c.b16 %v500, %v499
  %v504 = vpack.c.b16 %v502, %v501
  %507 = vmatpush.bf16.msra.mxu0 0
  %508 = vmatpush.bf16.msra.mxu0 0
  %509 = vmatpush.bf16.msra.mxu0 0
  %510 = vmatpush.bf16.msra.mxu0 0
  %511 = vmatpush.bf16.msra.mxu0 0
  %512 = vmatpush.bf16.msra.mxu0 0
  %513 = vmatpush.bf16.msra.mxu0 %v504
  %514 = vmatpush.bf16.msra.mxu0 %v503
  %515 = vmatmul.bf16.gmra.mxu0 %v435
  %v516 = vpop.f32.mrf.mxu0
  %v517 = vadd.f32 0.0, %v516
  %v518 = vpop.f32.mrf.mxu0
  %519 = vdwg.mxu0
  %v520 = vadd.f32 %v494, %v517
  %v521 = vxor.u32 %v520, 2147483648
  %v522 = vmul.f32 %v521, 1.442695
  %v523 = vpow.pop %v522
  %v524 = vadd.f32 %v523, 1.0
  %v525 = vrcp.pop %v524
  %v526 = vmul.f32 %v524, %v525
  %v527 = vsub.f32 1.0, %v526
  %v528 = vmul.f32 %v525, %v527
  %v529 = vadd.f32 %v525, %v528
  %vm530 = vweird.f32 %v524
  %vm531 = vweird.f32 %v525
  %vm532 = vmor %vm530, %vm531
  %v533 = vsel %vm532, %v525, %v529
  %v534 = vand.u32 2147483647, %v524
  %vm535 = vcmp.eq.f32.partialorder %v534, 8.507059e+37
  %v536 = vand.u32 %v524, 2147483648
  %v537 = vor.u32 1.1754944e-38, %v536
  %v538 = vsel %vm535, %v537, %v533
  %v539 = vmul.f32 1.0, %v538
  %541 = vrot.lane.b32.xlu0 %v412, 64
  %v542 = vpop.permute.xlu0 %541
  %v544 = vadd.f32 %v517, %v542
  %546 = vrot.lane.b32.xlu0 %v544, 64
  %v547 = vpop.permute.xlu0 %546
  %v549 = vmul.f32 %v539, %v547
  %551 = vrot.lane.b32.xlu0 %v549, 64
  %v552 = vpop.permute.xlu0 %551
  %v554 = vadd.f32 %v494, %v552
  %v555 = vtanh.pop %v554
  %v556 = vsub.f32 1.0, %v539
  %558 = vrot.lane.b32.xlu0 %v555, 96
  %v559 = vpop.permute.xlu0 %558
  %v561 = vmul.f32 %v556, %v559
  %v562 = vmul.f32 %v539, 0.0
  %v563 = vadd.f32 %v561, %v562
  %v564 = vadd.f32 %v493, 0.0
  %v565 = vadd.f32 %v563, 0.0
  %v566 = vld [vmem:[#allocation2 + $0x8] sm:$0xff]
  %v567 = vpack.c.bf16 %v493, %v493
  %569 = vrot.lane.b32.xlu0 %v567, 96
  %v570 = vpop.permute.xlu0 %569
  %v572 = vsel %vm115, %v570, 0
  %574 = vmatpush.bf16.msra.mxu0 0
  %575 = vmatpush.bf16.msra.mxu0 0
  %576 = vmatpush.bf16.msra.mxu0 0
  %577 = vmatpush.bf16.msra.mxu0 0
  %578 = vmatpush.bf16.msra.mxu0 0
  %579 = vmatpush.bf16.msra.mxu0 0
  %580 = vmatpush.bf16.msra.mxu0 %v431
  %581 = vmatpush.bf16.msra.mxu0 %v430
  %582 = vmatmul.bf16.gmra.mxu0 %v572
  %v583 = vpop.f32.mrf.mxu0
  %v584 = vadd.f32 0.0, %v583
  %v585 = vpop.f32.mrf.mxu0
  %586 = vdwg.mxu0
  %v587 = vadd.f32 %v566, %v584
  %v588 = vxor.u32 %v587, 2147483648
  %v589 = vmul.f32 %v588, 1.442695
  %v590 = vpow.pop %v589
  %v591 = vadd.f32 %v590, 1.0
  %v592 = vrcp.pop %v591
  %v593 = vmul.f32 %v591, %v592
  %v594 = vsub.f32 1.0, %v593
  %v595 = vmul.f32 %v592, %v594
  %v596 = vadd.f32 %v592, %v595
  %vm597 = vweird.f32 %v591
  %vm598 = vweird.f32 %v592
  %vm599 = vmor %vm597, %vm598
  %v600 = vsel %vm599, %v592, %v596
  %v601 = vand.u32 2147483647, %v591
  %vm602 = vcmp.eq.f32.partialorder %v601, 8.507059e+37
  %v603 = vand.u32 %v591, 2147483648
  %v604 = vor.u32 1.1754944e-38, %v603
  %v605 = vsel %vm602, %v604, %v600
  %v606 = vmul.f32 1.0, %v605
  %v607 = vadd.f32 %v584, %v472
  %609 = vrot.lane.b32.xlu0 %v607, 64
  %v610 = vpop.permute.xlu0 %609
  %v612 = vmul.f32 %v606, %v610
  %614 = vrot.lane.b32.xlu0 %v612, 64
  %v615 = vpop.permute.xlu0 %614
  %v617 = vadd.f32 %v566, %v615
  %v618 = vtanh.pop %v617
  %v619 = vsub.f32 1.0, %v606
  %621 = vrot.lane.b32.xlu0 %v618, 96
  %v622 = vpop.permute.xlu0 %621
  %v624 = vmul.f32 %v619, %v622
  %v625 = vmul.f32 %v606, %v493
  %v626 = vadd.f32 %v624, %v625
  %v627 = vld [vmem:[#allocation3 + $0x10] sm:$0xff]
  %v628 = vpack.c.bf16 %v563, %v563
  %630 = vrot.lane.b32.xlu0 %v628, 96
  %v631 = vpop.permute.xlu0 %630
  %v633 = vsel %vm115, %v631, 0
  %635 = vmatpush.bf16.msra.mxu0 0
  %636 = vmatpush.bf16.msra.mxu0 0
  %637 = vmatpush.bf16.msra.mxu0 0
  %638 = vmatpush.bf16.msra.mxu0 0
  %639 = vmatpush.bf16.msra.mxu0 0
  %640 = vmatpush.bf16.msra.mxu0 0
  %641 = vmatpush.bf16.msra.mxu0 %v504
  %642 = vmatpush.bf16.msra.mxu0 %v503
  %643 = vmatmul.bf16.gmra.mxu0 %v633
  %v644 = vpop.f32.mrf.mxu0
  %v645 = vadd.f32 0.0, %v644
  %v646 = vpop.f32.mrf.mxu0
  %647 = vdwg.mxu0
  %v648 = vadd.f32 %v627, %v645
  %v649 = vxor.u32 %v648, 2147483648
  %v650 = vmul.f32 %v649, 1.442695
  %v651 = vpow.pop %v650
  %v652 = vadd.f32 %v651, 1.0
  %v653 = vrcp.pop %v652
  %v654 = vmul.f32 %v652, %v653
  %v655 = vsub.f32 1.0, %v654
  %v656 = vmul.f32 %v653, %v655
  %v657 = vadd.f32 %v653, %v656
  %vm658 = vweird.f32 %v652
  %vm659 = vweird.f32 %v653
  %vm660 = vmor %vm658, %vm659
  %v661 = vsel %vm660, %v653, %v657
  %v662 = vand.u32 2147483647, %v652
  %vm663 = vcmp.eq.f32.partialorder %v662, 8.507059e+37
  %v664 = vand.u32 %v652, 2147483648
  %v665 = vor.u32 1.1754944e-38, %v664
  %v666 = vsel %vm663, %v665, %v661
  %v667 = vmul.f32 1.0, %v666
  %v668 = vadd.f32 %v645, %v542
  %670 = vrot.lane.b32.xlu0 %v668, 64
  %v671 = vpop.permute.xlu0 %670
  %v673 = vmul.f32 %v667, %v671
  %675 = vrot.lane.b32.xlu0 %v673, 64
  %v676 = vpop.permute.xlu0 %675
  %v678 = vadd.f32 %v627, %v676
  %v679 = vtanh.pop %v678
  %v680 = vsub.f32 1.0, %v667
  %682 = vrot.lane.b32.xlu0 %v679, 96
  %v683 = vpop.permute.xlu0 %682
  %v685 = vmul.f32 %v680, %v683
  %v686 = vmul.f32 %v667, %v563
  %v687 = vadd.f32 %v685, %v686
  %v688 = vadd.f32 %v564, %v626
  %v689 = vadd.f32 %v565, %v687
  %v690 = vld [vmem:[#allocation2 + $0x10] sm:$0xff]
  %v691 = vpack.c.bf16 %v626, %v626
  %693 = vrot.lane.b32.xlu0 %v691, 96
  %v694 = vpop.permute.xlu0 %693
  %v696 = vsel %vm115, %v694, 0
  %698 = vmatpush.bf16.msra.mxu0 0
  %699 = vmatpush.bf16.msra.mxu0 0
  %700 = vmatpush.bf16.msra.mxu0 0
  %701 = vmatpush.bf16.msra.mxu0 0
  %702 = vmatpush.bf16.msra.mxu0 0
  %703 = vmatpush.bf16.msra.mxu0 0
  %704 = vmatpush.bf16.msra.mxu0 %v431
  %705 = vmatpush.bf16.msra.mxu0 %v430
  %706 = vmatmul.bf16.gmra.mxu0 %v696
  %v707 = vpop.f32.mrf.mxu0
  %v708 = vadd.f32 0.0, %v707
  %v709 = vpop.f32.mrf.mxu0
  %710 = vdwg.mxu0
  %v711 = vadd.f32 %v690, %v708
  %v712 = vxor.u32 %v711, 2147483648
  %v713 = vmul.f32 %v712, 1.442695
  %v714 = vpow.pop %v713
  %v715 = vadd.f32 %v714, 1.0
  %v716 = vrcp.pop %v715
  %v717 = vmul.f32 %v715, %v716
  %v718 = vsub.f32 1.0, %v717
  %v719 = vmul.f32 %v716, %v718
  %v720 = vadd.f32 %v716, %v719
  %vm721 = vweird.f32 %v715
  %vm722 = vweird.f32 %v716
  %vm723 = vmor %vm721, %vm722
  %v724 = vsel %vm723, %v716, %v720
  %v725 = vand.u32 2147483647, %v715
  %vm726 = vcmp.eq.f32.partialorder %v725, 8.507059e+37
  %v727 = vand.u32 %v715, 2147483648
  %v728 = vor.u32 1.1754944e-38, %v727
  %v729 = vsel %vm726, %v728, %v724
  %v730 = vmul.f32 1.0, %v729
  %v731 = vadd.f32 %v708, %v472
  %733 = vrot.lane.b32.xlu0 %v731, 64
  %v734 = vpop.permute.xlu0 %733
  %v736 = vmul.f32 %v730, %v734
  %738 = vrot.lane.b32.xlu0 %v736, 64
  %v739 = vpop.permute.xlu0 %738
  %v741 = vadd.f32 %v690, %v739
  %v742 = vtanh.pop %v741
  %v743 = vsub.f32 1.0, %v730
  %745 = vrot.lane.b32.xlu0 %v742, 96
  %v746 = vpop.permute.xlu0 %745
  %v748 = vmul.f32 %v743, %v746
  %v749 = vmul.f32 %v730, %v626
  %v750 = vadd.f32 %v748, %v749
  %v751 = vld [vmem:[#allocation3 + $0x8] sm:$0xff]
  %v752 = vpack.c.bf16 %v687, %v687
  %754 = vrot.lane.b32.xlu0 %v752, 96
  %v755 = vpop.permute.xlu0 %754
  %v757 = vsel %vm115, %v755, 0
  %759 = vmatpush.bf16.msra.mxu0 0
  %760 = vmatpush.bf16.msra.mxu0 0
  %761 = vmatpush.bf16.msra.mxu0 0
  %762 = vmatpush.bf16.msra.mxu0 0
  %763 = vmatpush.bf16.msra.mxu0 0
  %764 = vmatpush.bf16.msra.mxu0 0
  %765 = vmatpush.bf16.msra.mxu0 %v504
  %766 = vmatpush.bf16.msra.mxu0 %v503
  %767 = vmatmul.bf16.gmra.mxu0 %v757
  %v768 = vpop.f32.mrf.mxu0
  %v769 = vadd.f32 0.0, %v768
  %v770 = vpop.f32.mrf.mxu0
  %771 = vdwg.mxu0
  %v772 = vadd.f32 %v751, %v769
  %v773 = vxor.u32 %v772, 2147483648
  %v774 = vmul.f32 %v773, 1.442695
  %v775 = vpow.pop %v774
  %v776 = vadd.f32 %v775, 1.0
  %v777 = vrcp.pop %v776
  %v778 = vmul.f32 %v776, %v777
  %v779 = vsub.f32 1.0, %v778
  %v780 = vmul.f32 %v777, %v779
  %v781 = vadd.f32 %v777, %v780
  %vm782 = vweird.f32 %v776
  %vm783 = vweird.f32 %v777
  %vm784 = vmor %vm782, %vm783
  %v785 = vsel %vm784, %v777, %v781
  %v786 = vand.u32 2147483647, %v776
  %vm787 = vcmp.eq.f32.partialorder %v786, 8.507059e+37
  %v788 = vand.u32 %v776, 2147483648
  %v789 = vor.u32 1.1754944e-38, %v788
  %v790 = vsel %vm787, %v789, %v785
  %v791 = vmul.f32 1.0, %v790
  %v792 = vadd.f32 %v769, %v542
  %794 = vrot.lane.b32.xlu0 %v792, 64
  %v795 = vpop.permute.xlu0 %794
  %v797 = vmul.f32 %v791, %v795
  %799 = vrot.lane.b32.xlu0 %v797, 64
  %v800 = vpop.permute.xlu0 %799
  %v802 = vadd.f32 %v751, %v800
  %v803 = vtanh.pop %v802
  %v804 = vsub.f32 1.0, %v791
  %806 = vrot.lane.b32.xlu0 %v803, 96
  %v807 = vpop.permute.xlu0 %806
  %v809 = vmul.f32 %v804, %v807
  %v810 = vmul.f32 %v791, %v687
  %v811 = vadd.f32 %v809, %v810
  %v812 = vadd.f32 %v688, %v750
  %v813 = vadd.f32 %v689, %v811
  %v814 = vld [vmem:[#allocation2 + $0x18] sm:$0xff]
  %v815 = vpack.c.bf16 %v750, %v750
  %817 = vrot.lane.b32.xlu0 %v815, 96
  %v818 = vpop.permute.xlu0 %817
  %v820 = vsel %vm115, %v818, 0
  %822 = vmatpush.bf16.msra.mxu0 0
  %823 = vmatpush.bf16.msra.mxu0 0
  %824 = vmatpush.bf16.msra.mxu0 0
  %825 = vmatpush.bf16.msra.mxu0 0
  %826 = vmatpush.bf16.msra.mxu0 0
  %827 = vmatpush.bf16.msra.mxu0 0
  %828 = vmatpush.bf16.msra.mxu0 %v431
  %829 = vmatpush.bf16.msra.mxu0 %v430
  %830 = vmatmul.bf16.gmra.mxu0 %v820
  %v831 = vpop.f32.mrf.mxu0
  %v832 = vadd.f32 0.0, %v831
  %v833 = vpop.f32.mrf.mxu0
  %834 = vdwg.mxu0
  %v835 = vadd.f32 %v814, %v832
  %v836 = vxor.u32 %v835, 2147483648
  %v837 = vmul.f32 %v836, 1.442695
  %v838 = vpow.pop %v837
  %v839 = vadd.f32 %v838, 1.0
  %v840 = vrcp.pop %v839
  %v841 = vmul.f32 %v839, %v840
  %v842 = vsub.f32 1.0, %v841
  %v843 = vmul.f32 %v840, %v842
  %v844 = vadd.f32 %v840, %v843
  %vm845 = vweird.f32 %v839
  %vm846 = vweird.f32 %v840
  %vm847 = vmor %vm845, %vm846
  %v848 = vsel %vm847, %v840, %v844
  %v849 = vand.u32 2147483647, %v839
  %vm850 = vcmp.eq.f32.partialorder %v849, 8.507059e+37
  %v851 = vand.u32 %v839, 2147483648
  %v852 = vor.u32 1.1754944e-38, %v851
  %v853 = vsel %vm850, %v852, %v848
  %v854 = vmul.f32 1.0, %v853
  %v855 = vadd.f32 %v832, %v472
  %857 = vrot.lane.b32.xlu0 %v855, 64
  %v858 = vpop.permute.xlu0 %857
  %v860 = vmul.f32 %v854, %v858
  %862 = vrot.lane.b32.xlu0 %v860, 64
  %v863 = vpop.permute.xlu0 %862
  %v865 = vadd.f32 %v814, %v863
  %v866 = vtanh.pop %v865
  %v867 = vsub.f32 1.0, %v854
  %869 = vrot.lane.b32.xlu0 %v866, 96
  %v870 = vpop.permute.xlu0 %869
  %v872 = vmul.f32 %v867, %v870
  %v873 = vmul.f32 %v854, %v750
  %v874 = vadd.f32 %v872, %v873
  %v875 = vld [vmem:[#allocation3] sm:$0xff]
  %v876 = vpack.c.bf16 %v811, %v811
  %878 = vrot.lane.b32.xlu0 %v876, 96
  %v879 = vpop.permute.xlu0 %878
  %v881 = vsel %vm115, %v879, 0
  %883 = vmatpush.bf16.msra.mxu0 0
  %884 = vmatpush.bf16.msra.mxu0 0
  %885 = vmatpush.bf16.msra.mxu0 0
  %886 = vmatpush.bf16.msra.mxu0 0
  %887 = vmatpush.bf16.msra.mxu0 0
  %888 = vmatpush.bf16.msra.mxu0 0
  %889 = vmatpush.bf16.msra.mxu0 %v504
  %890 = vmatpush.bf16.msra.mxu0 %v503
  %891 = vmatmul.bf16.gmra.mxu0 %v881
  %v892 = vpop.f32.mrf.mxu0
  %v893 = vadd.f32 0.0, %v892
  %v894 = vpop.f32.mrf.mxu0
  %895 = vdwg.mxu0
  %v896 = vadd.f32 %v875, %v893
  %v897 = vxor.u32 %v896, 2147483648
  %v898 = vmul.f32 %v897, 1.442695
  %v899 = vpow.pop %v898
  %v900 = vadd.f32 %v899, 1.0
  %v901 = vrcp.pop %v900
  %v902 = vmul.f32 %v900, %v901
  %v903 = vsub.f32 1.0, %v902
  %v904 = vmul.f32 %v901, %v903
  %v905 = vadd.f32 %v901, %v904
  %vm906 = vweird.f32 %v900
  %vm907 = vweird.f32 %v901
  %vm908 = vmor %vm906, %vm907
  %v909 = vsel %vm908, %v901, %v905
  %v910 = vand.u32 2147483647, %v900
  %vm911 = vcmp.eq.f32.partialorder %v910, 8.507059e+37
  %v912 = vand.u32 %v900, 2147483648
  %v913 = vor.u32 1.1754944e-38, %v912
  %v914 = vsel %vm911, %v913, %v909
  %v915 = vmul.f32 1.0, %v914
  %v916 = vadd.f32 %v893, %v542
  %918 = vrot.lane.b32.xlu0 %v916, 64
  %v919 = vpop.permute.xlu0 %918
  %v921 = vmul.f32 %v915, %v919
  %923 = vrot.lane.b32.xlu0 %v921, 64
  %v924 = vpop.permute.xlu0 %923
  %v926 = vadd.f32 %v875, %v924
  %v927 = vtanh.pop %v926
  %v928 = vsub.f32 1.0, %v915
  %930 = vrot.lane.b32.xlu0 %v927, 96
  %v931 = vpop.permute.xlu0 %930
  %v933 = vmul.f32 %v928, %v931
  %v934 = vmul.f32 %v915, %v811
  %v935 = vadd.f32 %v933, %v934
  %v936 = vadd.f32 %v812, %v874
  %v937 = vadd.f32 %v813, %v935
  %v938 = vmul.f32 %v936, 0.25
  %v939 = vmul.f32 %v937, 0.25
  %941 = vrot.lane.b32.xlu0 %v938, 96
  %v942 = vpop.permute.xlu0 %941
  %v944 = vsel %vm115, %v942, %v939
  %v945 = vpack.c.bf16 %v944, %v944
  %v946 = vld [vmem:[%s19] sm:$0xf]
  %v947 = vld [vmem:[%s19 + $0x4] sm:$0xf]
  %v948 = vld [vmem:[%s19 + $0x8] sm:$0xf]
  %v949 = vld [vmem:[%s19 + $0xc] sm:$0xf]
  %v950 = vld [vmem:[%s19 + $0x10] sm:$0xf]
  %v951 = vld [vmem:[%s19 + $0x14] sm:$0xf]
  %v952 = vld [vmem:[%s19 + $0x18] sm:$0xf]
  %v953 = vld [vmem:[%s19 + $0x1c] sm:$0xf]
  %v954 = vld [vmem:[%s20] sm:$0x1]
  %v956 = vperm.slane %v954, 0
  %v966 = vunpack.c.l.b16 %v946
  %v967 = vunpack.c.l.b16 %v947
  %v968 = vunpack.c.l.b16 %v948
  %v969 = vunpack.c.l.b16 %v949
  %v970 = vunpack.c.l.b16 %v950
  %v971 = vunpack.c.l.b16 %v951
  %v972 = vunpack.c.l.b16 %v952
  %v973 = vunpack.c.l.b16 %v953
  %v974 = vpack.c.b16 %v967, %v966
  %v975 = vpack.c.b16 %v969, %v968
  %v976 = vpack.c.b16 %v971, %v970
  %v977 = vpack.c.b16 %v973, %v972
  %v983 = vsel %vm117, %v945, 0
  %985 = vmatpush.bf16.msra.mxu0 0
  %986 = vmatpush.bf16.msra.mxu0 0
  %987 = vmatpush.bf16.msra.mxu0 0
  %988 = vmatpush.bf16.msra.mxu0 0
  %989 = vmatpush.bf16.msra.mxu0 %v977
  %990 = vmatpush.bf16.msra.mxu0 %v976
  %991 = vmatpush.bf16.msra.mxu0 %v975
  %992 = vmatpush.bf16.msra.mxu0 %v974
  %993 = vmatmul.bf16.gmra.mxu0 %v983
  %v994 = vpop.f32.mrf.mxu0
  %v995 = vadd.f32 %v956, %v994
  %v996 = vpop.f32.mrf.mxu0
  %997 = vdwg.mxu0
  %v998 = vmul.f32 %v304, %v995
  %v999 = vsel %vm115, %v998, 0.0
  %1000 = vadd.xlane.f32.xlu0 %v999
  %v1001 = vpop.xlane.xlu0 %1000
  %v1002 = vlaneseq
  %v1003 = vshrl.u32 %v1002, 7
  %vm1004 = vcmp.lt.s32.totalorder %v1003, 6
  %v1005 = vsel %vm1004, 1.0, -1.0
  %v1006 = vmul.f32 %v1005, %v1001
  %v1007 = vmin.f32 %v1006, 0.0
  %v1008 = vand.u32 2147483647, %v1006
  %v1009 = vsub.f32 0.0, %v1008
  %v1010 = vmul.f32 %v1009, 1.442695
  %v1011 = vpow.pop %v1010
  %v1012 = vadd.f32 %v1011, 1.0
  %v1013 = vlog2.pop %v1012
  %v1014 = vmul.f32 %v1013, 0.6931472
  %v1015 = vsub.f32 %v1007, %v1014
  %v1016 = vsel %vm1004, %v1015, 0.0
  %vm1017 = vcmask 7168
  %v1018 = vsel %vm1017, %v1016, 0.0
  %1019 = vadd.xlane.f32.xlu0 %v1018
  %v1020 = vpop.xlane.xlu0 %1019
  %v1021 = vrot.slane %v1020, 4
  %v1022 = vadd.f32 %v1020, %v1021
  %v1023 = vrot.slane %v1022, 2
  %v1024 = vadd.f32 %v1022, %v1023
  %v1025 = vrot.slane %v1024, 1
  %v1026 = vadd.f32 %v1024, %v1025
  %s1027 = vtos %v1026
  %v1028 = vstv %s1027
  %vm1029 = vcmp.ge.s32.totalorder %v1003, 6
  %vm1030 = vcmp.lt.s32.totalorder %v1003, 8
  %vm1031 = vmand %vm1029, %vm1030
  %v1032 = vsel %vm1031, %v1015, 0.0
  %v1033 = vsel %vm1017, %v1032, 0.0
  %1034 = vadd.xlane.f32.xlu0 %v1033
  %v1035 = vpop.xlane.xlu0 %1034
  %v1036 = vrot.slane %v1035, 4
  %v1037 = vadd.f32 %v1035, %v1036
  %v1038 = vrot.slane %v1037, 2
  %v1039 = vadd.f32 %v1037, %v1038
  %v1040 = vrot.slane %v1039, 1
  %v1041 = vadd.f32 %v1039, %v1040
  %s1042 = vtos %v1041
  %v1043 = vstv %s1042
  %v1044 = vsel %vm1017, %v1028, %v1043
  %vm1045 = vcmask 8192
  %1046 = vst.msk [vmem:[%s21] sm:$0x1] %vm1045, %v1044
  // Predicated region
  $region86: #{_forward_core.5} parent=0 // pred_check
    _
  $region87: #{_forward_core.5} parent=0 // pred_check_branch
    %1048 = sbr.rel (0) target = $region89
  $region88: #{_forward_core.5} parent=0 // pred_region
    _
  $region89: #{_forward_core.5} parent=0 // pred_fallthru
    _
  // Predicated region
  $region90: #{_forward_core.5} parent=0 // pred_check
    _
  $region91: #{_forward_core.5} parent=0 // pred_check_branch
    %1050 = sbr.rel (0) target = $region93
  $region92: #{_forward_core.5} parent=0 // pred_region
    _
  $region93: #{_forward_core.5} parent=0 // pred_fallthru
    _

</llo_original>
